<compile_context>
chip_gen: v6e
topology: v6e:2x2x1
jax: 0.10.0
libtpu: 0.0.40
codegen_flags: <defaults>
</compile_context>

<pallas_src>
import numpy as np
import jax
import jax.numpy as jnp
from jax.experimental import pallas as pl
from jax.experimental.pallas import tpu as pltpu


def gaussian_kernel_3d(size, sigma):
    """NumPy replica of the PyTorch gaussian_kernel_3d, including its exact
    unsqueeze/repeat/permute index semantics (the window is constant along
    its middle axis, just like the original)."""
    coords = np.arange(size, dtype=np.float32) - size // 2
    t = np.tile(coords[None, None, :], (size, size, 1))          # t[i,j,k] = c[k]
    g = np.exp(-(t ** 2
                 + np.transpose(t, (1, 0, 2)) ** 2
                 + np.transpose(t, (2, 0, 1)) ** 2) / (2.0 * sigma ** 2))
    return (g / g.sum()).astype(np.float32)


def separable_factors(size, sigma):
    """1-D factors of the (separable) 3-D window: w[i,j,k] = fd[i] * fh[j] * fw[k]."""
    c = np.arange(size, dtype=np.float64) - size // 2
    fd = np.exp(-(c ** 2) / (2.0 * sigma ** 2))          # varies along kd (D axis)
    fh = np.ones(size, dtype=np.float64)                 # constant along kh (H axis)
    fw = np.exp(-(2.0 * c ** 2) / (2.0 * sigma ** 2))    # varies along kw (W axis)
    fd /= fd.sum()
    fh /= fh.sum()
    fw /= fw.sum()
    return fd, fh, fw


def _make_ssim_kernel(wd, K, D, H):
    """Per-batch-element Pallas kernel.  `wd` (the D-axis taps with the constant
    H factor folded in) is baked in as compile-time scalars; the W-axis banded
    matrix arrives as a small VMEM input so the W conv runs on the MXU."""
    C1 = 0.01 ** 2
    C2 = 0.03 ** 2
    wd = [float(x) for x in wd]

    def conv3(v, bw):
        # v: (Dp, Hp, Wp) zero-padded volume; bw: (Wp, W) banded Toeplitz matrix.
        # 1) D pass: 5 weighted shifted adds along the major axis (no relayout).
        acc = wd[0] * v[0:D]
        for kd in range(1, K):
            acc = acc + wd[kd] * v[kd:kd + D]                  # (D, Hp, Wp)
        # 2) H pass: window is constant along H -> plain 5-tap box sum on sublanes.
        hsum = acc[:, 0:H, :]
        for kh in range(1, K):
            hsum = hsum + acc[:, kh:kh + H, :]                 # (D, H, Wp)
        # 3) W pass on the MXU via the banded matrix.
        return jnp.dot(hsum.reshape(D * H, hsum.shape[-1]), bw,
                       preferred_element_type=jnp.float32)     # (D*H, W)

    def kernel(img1_ref, img2_ref, bw_ref, out_ref):
        a = img1_ref[0]                   # (Dp, Hp, Wp), zero padded in the wrapper
        b = img2_ref[0]
        bw = bw_ref[...]
        # Five volumes convolved with the same window, one at a time (no 5x stacked
        # padded copy).  Products of zero padding are zero, so pad-then-multiply is
        # identical to conv3d(x*y, window, padding=p).
        mu1 = conv3(a, bw)
        mu2 = conv3(b, bw)
        s11 = conv3(a * a, bw)
        s22 = conv3(b * b, bw)
        s12 = conv3(a * b, bw)

        mu1_sq = mu1 * mu1
        mu2_sq = mu2 * mu2
        mu1_mu2 = mu1 * mu2
        sigma1_sq = s11 - mu1_sq
        sigma2_sq = s22 - mu2_sq
        sigma12 = s12 - mu1_mu2

        num = (2.0 * mu1_mu2 + C1) * (2.0 * sigma12 + C2)
        den = (mu1_sq + mu2_sq + C1) * (sigma1_sq + sigma2_sq + C2)
        # EUP approximate reciprocal + one Newton refinement: keeps the divide off
        # the VALU while retaining ~f32 accuracy.
        r = pl.reciprocal(den, approx=True)
        r = r * (2.0 - den * r)
        ssim_map = num * r                                    # (D*H, W)

        # Per-program partial sums (reduced over the sublane axis only); the scalar
        # reduction happens once in the wrapper, keeping the grid fully parallel.
        out_ref[0] = jnp.sum(ssim_map, axis=0, keepdims=True)  # (1, W)

    return kernel


def ssim_pallas(img1, img2, window_size=5, sigma=1.5):
    """Equivalent of SSIM(window_size=5, size_average=True).forward(img1, img2).

    img1: (N, C, D, H, W) with C >= 2 (channel 1 is selected, as in the module)
    img2: (N, 1, D, H, W)  (groups=channel=1 conv3d requires a single channel)
    returns: scalar, 1 - mean(ssim_map)
    """
    # TODO(synk): size_average=False branch (mean over dims 1..3 only) is not
    # implemented; the module default size_average=True is reproduced.
    K = window_size
    pad = K // 2

    fd, fh, fw = separable_factors(K, sigma)
    # Sanity: the separable factors must reproduce the module's 3-D window exactly.
    assert np.allclose(np.einsum('i,j,k->ijk', fd, fh, fw),
                       gaussian_kernel_3d(K, sigma), atol=1e-6)

    x1 = img1[:, 1, :, :, :].astype(jnp.float32)   # img1[:, 1].unsqueeze(1) -> 1 channel
    x2 = img2[:, 0, :, :, :].astype(jnp.float32)
    N, D, H, W = x1.shape
    pw = ((0, 0), (pad, pad), (pad, pad), (pad, pad))
    x1p = jnp.pad(x1, pw)                          # zero padding == conv3d padding
    x2p = jnp.pad(x2, pw)
    Dp, Hp, Wp = D + 2 * pad, H + 2 * pad, W + 2 * pad

    # D-axis taps with the (constant) H-axis normalization folded in.
    wd = (fd * fh[0]).astype(np.float32)
    # Banded (Toeplitz) matrix realizing the 1-D W conv as an MXU matmul:
    # out[., w] = sum_k fw[k] * x[., w + k]  ==  x_padded @ bw.
    bw_np = np.zeros((Wp, W), np.float32)
    for w in range(W):
        bw_np[w:w + K, w] = fw
    bw = jnp.asarray(bw_np)

    kernel = _make_ssim_kernel(wd, K, D, H)

    # TODO(synk): for large volumes (e.g. 128^3, v7x's 64 MiB VMEM) add a second grid
    # axis that tiles D with a (K-1)-plane halo instead of streaming whole padded
    # volumes per batch step.
    partial = pl.pallas_call(
        kernel,
        out_shape=jax.ShapeDtypeStruct((N, 1, W), jnp.float32),
        grid_spec=pltpu.PrefetchScalarGridSpec(
            num_scalar_prefetch=0,
            grid=(N,),
            in_specs=[
                pl.BlockSpec((1, Dp, Hp, Wp), lambda n: (n, 0, 0, 0)),
                pl.BlockSpec((1, Dp, Hp, Wp), lambda n: (n, 0, 0, 0)),
                pl.BlockSpec((Wp, W), lambda n: (0, 0)),
            ],
            out_specs=pl.BlockSpec((1, 1, W), lambda n: (n, 0, 0)),
        ),
        compiler_params=pltpu.CompilerParams(
            dimension_semantics=("parallel",)),   # independent per-batch partial sums
    )(x1p, x2p, bw)

    total = jnp.sum(partial)
    # size_average=True: 1 - mean over all elements of the (N,1,D,H,W) ssim map
    return (1.0 - total / (N * D * H * W)).astype(img1.dtype)


def ssim_reference(img1, img2, window_size=5, sigma=1.5):
    """Pure-JAX reference (lax.conv_general_dilated) for verification."""
    window = jnp.asarray(gaussian_kernel_3d(window_size, sigma))[None, None]
    pad = window_size // 2
    x1 = img1[:, 1:2].astype(jnp.float32)
    x2 = img2.astype(jnp.float32)

    def conv(x):
        return jax.lax.conv_general_dilated(
            x, window, window_strides=(1, 1, 1),
            padding=[(pad, pad)] * 3,
            dimension_numbers=("NCDHW", "OIDHW", "NCDHW"))

    mu1, mu2 = conv(x1), conv(x2)
    mu1_sq, mu2_sq, mu1_mu2 = mu1 ** 2, mu2 ** 2, mu1 * mu2
    sigma1_sq = conv(x1 * x1) - mu1_sq
    sigma2_sq = conv(x2 * x2) - mu2_sq
    sigma12 = conv(x1 * x2) - mu1_mu2
    C1, C2 = 0.01 ** 2, 0.03 ** 2
    ssim_map = ((2 * mu1_mu2 + C1) * (2 * sigma12 + C2)) / (
        (mu1_sq + mu2_sq + C1) * (sigma1_sq + sigma2_sq + C2))
    return 1.0 - ssim_map.mean()


if __name__ == "__main__":
    key = jax.random.PRNGKey(0)
    k1, k2 = jax.random.split(key)
    # img1: (N, C, D, H, W) with C>=2; img2: (N, 1, D, H, W)
    img1 = jax.random.uniform(k1, (2, 4, 8, 16, 16), dtype=jnp.float32)
    img2 = jax.random.uniform(k2, (2, 1, 8, 16, 16), dtype=jnp.float32)

    out = jax.block_until_ready(ssim_pallas(img1, img2))
    ref = jax.block_until_ready(ssim_reference(img1, img2))
    # Tolerance accounts for MXU f32 pass decomposition in the W-axis matmul and the
    # refined approximate reciprocal (both well below 1e-3 of the final loss value).
    np.testing.assert_allclose(np.asarray(out), np.asarray(ref),
                               rtol=2e-3, atol=1e-3)
    print("KERNEL_OK")
</pallas_src>

<mosaic_0001>
module attributes {stable_mosaic.version = 11 : i64} {
  func.func @kernel(%arg0: i32, %arg1: memref<1x12x20x20xf32, #tpu.memory_space<vmem>>, %arg2: memref<1x12x20x20xf32, #tpu.memory_space<vmem>>, %arg3: memref<20x16xf32, #tpu.memory_space<vmem>>, %arg4: memref<1x1x16xf32, #tpu.memory_space<vmem>>) attributes {dimension_semantics = [#tpu.dimension_semantics<parallel>], iteration_bounds = array<i64: 2>, scalar_prefetch = 0 : i64, scratch_operands = 0 : i64, tpu.core_type = #tpu.core_type<tc>, window_params = [{transform_indices = @transform_0, window_bounds = array<i64: 1, 12, 20, 20>}, {transform_indices = @transform_1, window_bounds = array<i64: 1, 12, 20, 20>}, {pipeline_mode = #tpu.pipeline_mode<synchronous>, transform_indices = @transform_2, window_bounds = array<i64: 20, 16>}, {transform_indices = @transform_3, window_bounds = array<i64: 1, 1, 16>}]} {
    %c0 = arith.constant 0 : index
    %c0_0 = arith.constant 0 : index
    %c0_1 = arith.constant 0 : index
    %c0_2 = arith.constant 0 : index
    %0 = vector.load %arg1[%c0, %c0_0, %c0_1, %c0_2] : memref<1x12x20x20xf32, #tpu.memory_space<vmem>>, vector<1x12x20x20xf32>
    %1 = vector.shape_cast %0 : vector<1x12x20x20xf32> to vector<12x20x20xf32>
    %c0_3 = arith.constant 0 : index
    %c0_4 = arith.constant 0 : index
    %c0_5 = arith.constant 0 : index
    %c0_6 = arith.constant 0 : index
    %2 = vector.load %arg2[%c0_3, %c0_4, %c0_5, %c0_6] : memref<1x12x20x20xf32, #tpu.memory_space<vmem>>, vector<1x12x20x20xf32>
    %3 = vector.shape_cast %2 : vector<1x12x20x20xf32> to vector<12x20x20xf32>
    %c0_7 = arith.constant 0 : index
    %c0_8 = arith.constant 0 : index
    %4 = vector.load %arg3[%c0_7, %c0_8] : memref<20x16xf32, #tpu.memory_space<vmem>>, vector<20x16xf32>
    %5 = vector.extract_strided_slice %1 {offsets = [0, 0, 0], sizes = [8, 20, 20], strides = [1, 1, 1]} : vector<12x20x20xf32> to vector<8x20x20xf32>
    %cst = arith.constant 0.0240156762 : f32
    %6 = vector.broadcast %cst : f32 to vector<8x20x20xf32>
    %7 = arith.mulf %6, %5 : vector<8x20x20xf32>
    %8 = vector.extract_strided_slice %1 {offsets = [1, 0, 0], sizes = [8, 20, 20], strides = [1, 1, 1]} : vector<12x20x20xf32> to vector<8x20x20xf32>
    %cst_9 = arith.constant 0.0467761531 : f32
    %9 = vector.broadcast %cst_9 : f32 to vector<8x20x20xf32>
    %10 = arith.mulf %9, %8 : vector<8x20x20xf32>
    %11 = arith.addf %7, %10 : vector<8x20x20xf32>
    %12 = vector.extract_strided_slice %1 {offsets = [2, 0, 0], sizes = [8, 20, 20], strides = [1, 1, 1]} : vector<12x20x20xf32> to vector<8x20x20xf32>
    %cst_10 = arith.constant 0.0584163442 : f32
    %13 = vector.broadcast %cst_10 : f32 to vector<8x20x20xf32>
    %14 = arith.mulf %13, %12 : vector<8x20x20xf32>
    %15 = arith.addf %11, %14 : vector<8x20x20xf32>
    %16 = vector.extract_strided_slice %1 {offsets = [3, 0, 0], sizes = [8, 20, 20], strides = [1, 1, 1]} : vector<12x20x20xf32> to vector<8x20x20xf32>
    %cst_11 = arith.constant 0.0467761531 : f32
    %17 = vector.broadcast %cst_11 : f32 to vector<8x20x20xf32>
    %18 = arith.mulf %17, %16 : vector<8x20x20xf32>
    %19 = arith.addf %15, %18 : vector<8x20x20xf32>
    %20 = vector.extract_strided_slice %1 {offsets = [4, 0, 0], sizes = [8, 20, 20], strides = [1, 1, 1]} : vector<12x20x20xf32> to vector<8x20x20xf32>
    %cst_12 = arith.constant 0.0240156762 : f32
    %21 = vector.broadcast %cst_12 : f32 to vector<8x20x20xf32>
    %22 = arith.mulf %21, %20 : vector<8x20x20xf32>
    %23 = arith.addf %19, %22 : vector<8x20x20xf32>
    %24 = vector.extract_strided_slice %23 {offsets = [0, 0, 0], sizes = [8, 16, 20], strides = [1, 1, 1]} : vector<8x20x20xf32> to vector<8x16x20xf32>
    %25 = vector.extract_strided_slice %23 {offsets = [0, 1, 0], sizes = [8, 16, 20], strides = [1, 1, 1]} : vector<8x20x20xf32> to vector<8x16x20xf32>
    %26 = arith.addf %24, %25 : vector<8x16x20xf32>
    %27 = vector.extract_strided_slice %23 {offsets = [0, 2, 0], sizes = [8, 16, 20], strides = [1, 1, 1]} : vector<8x20x20xf32> to vector<8x16x20xf32>
    %28 = arith.addf %26, %27 : vector<8x16x20xf32>
    %29 = vector.extract_strided_slice %23 {offsets = [0, 3, 0], sizes = [8, 16, 20], strides = [1, 1, 1]} : vector<8x20x20xf32> to vector<8x16x20xf32>
    %30 = arith.addf %28, %29 : vector<8x16x20xf32>
    %31 = vector.extract_strided_slice %23 {offsets = [0, 4, 0], sizes = [8, 16, 20], strides = [1, 1, 1]} : vector<8x20x20xf32> to vector<8x16x20xf32>
    %32 = arith.addf %30, %31 : vector<8x16x20xf32>
    %33 = vector.shape_cast %32 : vector<8x16x20xf32> to vector<128x20xf32>
    %cst_13 = arith.constant dense<0.000000e+00> : vector<128x16xf32>
    %34 = tpu.matmul %33, %4, %cst_13 {dimension_numbers = #tpu.dot_dimension_numbers<[1], [0], [0], [1], [0, 0, 1, 1], [], []>} : vector<128x20xf32>, vector<20x16xf32>, vector<128x16xf32> -> vector<128x16xf32>
    %35 = vector.extract_strided_slice %3 {offsets = [0, 0, 0], sizes = [8, 20, 20], strides = [1, 1, 1]} : vector<12x20x20xf32> to vector<8x20x20xf32>
    %cst_14 = arith.constant 0.0240156762 : f32
    %36 = vector.broadcast %cst_14 : f32 to vector<8x20x20xf32>
    %37 = arith.mulf %36, %35 : vector<8x20x20xf32>
    %38 = vector.extract_strided_slice %3 {offsets = [1, 0, 0], sizes = [8, 20, 20], strides = [1, 1, 1]} : vector<12x20x20xf32> to vector<8x20x20xf32>
    %cst_15 = arith.constant 0.0467761531 : f32
    %39 = vector.broadcast %cst_15 : f32 to vector<8x20x20xf32>
    %40 = arith.mulf %39, %38 : vector<8x20x20xf32>
    %41 = arith.addf %37, %40 : vector<8x20x20xf32>
    %42 = vector.extract_strided_slice %3 {offsets = [2, 0, 0], sizes = [8, 20, 20], strides = [1, 1, 1]} : vector<12x20x20xf32> to vector<8x20x20xf32>
    %cst_16 = arith.constant 0.0584163442 : f32
    %43 = vector.broadcast %cst_16 : f32 to vector<8x20x20xf32>
    %44 = arith.mulf %43, %42 : vector<8x20x20xf32>
    %45 = arith.addf %41, %44 : vector<8x20x20xf32>
    %46 = vector.extract_strided_slice %3 {offsets = [3, 0, 0], sizes = [8, 20, 20], strides = [1, 1, 1]} : vector<12x20x20xf32> to vector<8x20x20xf32>
    %cst_17 = arith.constant 0.0467761531 : f32
    %47 = vector.broadcast %cst_17 : f32 to vector<8x20x20xf32>
    %48 = arith.mulf %47, %46 : vector<8x20x20xf32>
    %49 = arith.addf %45, %48 : vector<8x20x20xf32>
    %50 = vector.extract_strided_slice %3 {offsets = [4, 0, 0], sizes = [8, 20, 20], strides = [1, 1, 1]} : vector<12x20x20xf32> to vector<8x20x20xf32>
    %cst_18 = arith.constant 0.0240156762 : f32
    %51 = vector.broadcast %cst_18 : f32 to vector<8x20x20xf32>
    %52 = arith.mulf %51, %50 : vector<8x20x20xf32>
    %53 = arith.addf %49, %52 : vector<8x20x20xf32>
    %54 = vector.extract_strided_slice %53 {offsets = [0, 0, 0], sizes = [8, 16, 20], strides = [1, 1, 1]} : vector<8x20x20xf32> to vector<8x16x20xf32>
    %55 = vector.extract_strided_slice %53 {offsets = [0, 1, 0], sizes = [8, 16, 20], strides = [1, 1, 1]} : vector<8x20x20xf32> to vector<8x16x20xf32>
    %56 = arith.addf %54, %55 : vector<8x16x20xf32>
    %57 = vector.extract_strided_slice %53 {offsets = [0, 2, 0], sizes = [8, 16, 20], strides = [1, 1, 1]} : vector<8x20x20xf32> to vector<8x16x20xf32>
    %58 = arith.addf %56, %57 : vector<8x16x20xf32>
    %59 = vector.extract_strided_slice %53 {offsets = [0, 3, 0], sizes = [8, 16, 20], strides = [1, 1, 1]} : vector<8x20x20xf32> to vector<8x16x20xf32>
    %60 = arith.addf %58, %59 : vector<8x16x20xf32>
    %61 = vector.extract_strided_slice %53 {offsets = [0, 4, 0], sizes = [8, 16, 20], strides = [1, 1, 1]} : vector<8x20x20xf32> to vector<8x16x20xf32>
    %62 = arith.addf %60, %61 : vector<8x16x20xf32>
    %63 = vector.shape_cast %62 : vector<8x16x20xf32> to vector<128x20xf32>
    %cst_19 = arith.constant dense<0.000000e+00> : vector<128x16xf32>
    %64 = tpu.matmul %63, %4, %cst_19 {dimension_numbers = #tpu.dot_dimension_numbers<[1], [0], [0], [1], [0, 0, 1, 1], [], []>} : vector<128x20xf32>, vector<20x16xf32>, vector<128x16xf32> -> vector<128x16xf32>
    %65 = arith.mulf %1, %1 : vector<12x20x20xf32>
    %66 = vector.extract_strided_slice %65 {offsets = [0, 0, 0], sizes = [8, 20, 20], strides = [1, 1, 1]} : vector<12x20x20xf32> to vector<8x20x20xf32>
    %cst_20 = arith.constant 0.0240156762 : f32
    %67 = vector.broadcast %cst_20 : f32 to vector<8x20x20xf32>
    %68 = arith.mulf %67, %66 : vector<8x20x20xf32>
    %69 = vector.extract_strided_slice %65 {offsets = [1, 0, 0], sizes = [8, 20, 20], strides = [1, 1, 1]} : vector<12x20x20xf32> to vector<8x20x20xf32>
    %cst_21 = arith.constant 0.0467761531 : f32
    %70 = vector.broadcast %cst_21 : f32 to vector<8x20x20xf32>
    %71 = arith.mulf %70, %69 : vector<8x20x20xf32>
    %72 = arith.addf %68, %71 : vector<8x20x20xf32>
    %73 = vector.extract_strided_slice %65 {offsets = [2, 0, 0], sizes = [8, 20, 20], strides = [1, 1, 1]} : vector<12x20x20xf32> to vector<8x20x20xf32>
    %cst_22 = arith.constant 0.0584163442 : f32
    %74 = vector.broadcast %cst_22 : f32 to vector<8x20x20xf32>
    %75 = arith.mulf %74, %73 : vector<8x20x20xf32>
    %76 = arith.addf %72, %75 : vector<8x20x20xf32>
    %77 = vector.extract_strided_slice %65 {offsets = [3, 0, 0], sizes = [8, 20, 20], strides = [1, 1, 1]} : vector<12x20x20xf32> to vector<8x20x20xf32>
    %cst_23 = arith.constant 0.0467761531 : f32
    %78 = vector.broadcast %cst_23 : f32 to vector<8x20x20xf32>
    %79 = arith.mulf %78, %77 : vector<8x20x20xf32>
    %80 = arith.addf %76, %79 : vector<8x20x20xf32>
    %81 = vector.extract_strided_slice %65 {offsets = [4, 0, 0], sizes = [8, 20, 20], strides = [1, 1, 1]} : vector<12x20x20xf32> to vector<8x20x20xf32>
    %cst_24 = arith.constant 0.0240156762 : f32
    %82 = vector.broadcast %cst_24 : f32 to vector<8x20x20xf32>
    %83 = arith.mulf %82, %81 : vector<8x20x20xf32>
    %84 = arith.addf %80, %83 : vector<8x20x20xf32>
    %85 = vector.extract_strided_slice %84 {offsets = [0, 0, 0], sizes = [8, 16, 20], strides = [1, 1, 1]} : vector<8x20x20xf32> to vector<8x16x20xf32>
    %86 = vector.extract_strided_slice %84 {offsets = [0, 1, 0], sizes = [8, 16, 20], strides = [1, 1, 1]} : vector<8x20x20xf32> to vector<8x16x20xf32>
    %87 = arith.addf %85, %86 : vector<8x16x20xf32>
    %88 = vector.extract_strided_slice %84 {offsets = [0, 2, 0], sizes = [8, 16, 20], strides = [1, 1, 1]} : vector<8x20x20xf32> to vector<8x16x20xf32>
    %89 = arith.addf %87, %88 : vector<8x16x20xf32>
    %90 = vector.extract_strided_slice %84 {offsets = [0, 3, 0], sizes = [8, 16, 20], strides = [1, 1, 1]} : vector<8x20x20xf32> to vector<8x16x20xf32>
    %91 = arith.addf %89, %90 : vector<8x16x20xf32>
    %92 = vector.extract_strided_slice %84 {offsets = [0, 4, 0], sizes = [8, 16, 20], strides = [1, 1, 1]} : vector<8x20x20xf32> to vector<8x16x20xf32>
    %93 = arith.addf %91, %92 : vector<8x16x20xf32>
    %94 = vector.shape_cast %93 : vector<8x16x20xf32> to vector<128x20xf32>
    %cst_25 = arith.constant dense<0.000000e+00> : vector<128x16xf32>
    %95 = tpu.matmul %94, %4, %cst_25 {dimension_numbers = #tpu.dot_dimension_numbers<[1], [0], [0], [1], [0, 0, 1, 1], [], []>} : vector<128x20xf32>, vector<20x16xf32>, vector<128x16xf32> -> vector<128x16xf32>
    %96 = arith.mulf %3, %3 : vector<12x20x20xf32>
    %97 = vector.extract_strided_slice %96 {offsets = [0, 0, 0], sizes = [8, 20, 20], strides = [1, 1, 1]} : vector<12x20x20xf32> to vector<8x20x20xf32>
    %cst_26 = arith.constant 0.0240156762 : f32
    %98 = vector.broadcast %cst_26 : f32 to vector<8x20x20xf32>
    %99 = arith.mulf %98, %97 : vector<8x20x20xf32>
    %100 = vector.extract_strided_slice %96 {offsets = [1, 0, 0], sizes = [8, 20, 20], strides = [1, 1, 1]} : vector<12x20x20xf32> to vector<8x20x20xf32>
    %cst_27 = arith.constant 0.0467761531 : f32
    %101 = vector.broadcast %cst_27 : f32 to vector<8x20x20xf32>
    %102 = arith.mulf %101, %100 : vector<8x20x20xf32>
    %103 = arith.addf %99, %102 : vector<8x20x20xf32>
    %104 = vector.extract_strided_slice %96 {offsets = [2, 0, 0], sizes = [8, 20, 20], strides = [1, 1, 1]} : vector<12x20x20xf32> to vector<8x20x20xf32>
    %cst_28 = arith.constant 0.0584163442 : f32
    %105 = vector.broadcast %cst_28 : f32 to vector<8x20x20xf32>
    %106 = arith.mulf %105, %104 : vector<8x20x20xf32>
    %107 = arith.addf %103, %106 : vector<8x20x20xf32>
    %108 = vector.extract_strided_slice %96 {offsets = [3, 0, 0], sizes = [8, 20, 20], strides = [1, 1, 1]} : vector<12x20x20xf32> to vector<8x20x20xf32>
    %cst_29 = arith.constant 0.0467761531 : f32
    %109 = vector.broadcast %cst_29 : f32 to vector<8x20x20xf32>
    %110 = arith.mulf %109, %108 : vector<8x20x20xf32>
    %111 = arith.addf %107, %110 : vector<8x20x20xf32>
    %112 = vector.extract_strided_slice %96 {offsets = [4, 0, 0], sizes = [8, 20, 20], strides = [1, 1, 1]} : vector<12x20x20xf32> to vector<8x20x20xf32>
    %cst_30 = arith.constant 0.0240156762 : f32
    %113 = vector.broadcast %cst_30 : f32 to vector<8x20x20xf32>
    %114 = arith.mulf %113, %112 : vector<8x20x20xf32>
    %115 = arith.addf %111, %114 : vector<8x20x20xf32>
    %116 = vector.extract_strided_slice %115 {offsets = [0, 0, 0], sizes = [8, 16, 20], strides = [1, 1, 1]} : vector<8x20x20xf32> to vector<8x16x20xf32>
    %117 = vector.extract_strided_slice %115 {offsets = [0, 1, 0], sizes = [8, 16, 20], strides = [1, 1, 1]} : vector<8x20x20xf32> to vector<8x16x20xf32>
    %118 = arith.addf %116, %117 : vector<8x16x20xf32>
    %119 = vector.extract_strided_slice %115 {offsets = [0, 2, 0], sizes = [8, 16, 20], strides = [1, 1, 1]} : vector<8x20x20xf32> to vector<8x16x20xf32>
    %120 = arith.addf %118, %119 : vector<8x16x20xf32>
    %121 = vector.extract_strided_slice %115 {offsets = [0, 3, 0], sizes = [8, 16, 20], strides = [1, 1, 1]} : vector<8x20x20xf32> to vector<8x16x20xf32>
    %122 = arith.addf %120, %121 : vector<8x16x20xf32>
    %123 = vector.extract_strided_slice %115 {offsets = [0, 4, 0], sizes = [8, 16, 20], strides = [1, 1, 1]} : vector<8x20x20xf32> to vector<8x16x20xf32>
    %124 = arith.addf %122, %123 : vector<8x16x20xf32>
    %125 = vector.shape_cast %124 : vector<8x16x20xf32> to vector<128x20xf32>
    %cst_31 = arith.constant dense<0.000000e+00> : vector<128x16xf32>
    %126 = tpu.matmul %125, %4, %cst_31 {dimension_numbers = #tpu.dot_dimension_numbers<[1], [0], [0], [1], [0, 0, 1, 1], [], []>} : vector<128x20xf32>, vector<20x16xf32>, vector<128x16xf32> -> vector<128x16xf32>
    %127 = arith.mulf %1, %3 : vector<12x20x20xf32>
    %128 = vector.extract_strided_slice %127 {offsets = [0, 0, 0], sizes = [8, 20, 20], strides = [1, 1, 1]} : vector<12x20x20xf32> to vector<8x20x20xf32>
    %cst_32 = arith.constant 0.0240156762 : f32
    %129 = vector.broadcast %cst_32 : f32 to vector<8x20x20xf32>
    %130 = arith.mulf %129, %128 : vector<8x20x20xf32>
    %131 = vector.extract_strided_slice %127 {offsets = [1, 0, 0], sizes = [8, 20, 20], strides = [1, 1, 1]} : vector<12x20x20xf32> to vector<8x20x20xf32>
    %cst_33 = arith.constant 0.0467761531 : f32
    %132 = vector.broadcast %cst_33 : f32 to vector<8x20x20xf32>
    %133 = arith.mulf %132, %131 : vector<8x20x20xf32>
    %134 = arith.addf %130, %133 : vector<8x20x20xf32>
    %135 = vector.extract_strided_slice %127 {offsets = [2, 0, 0], sizes = [8, 20, 20], strides = [1, 1, 1]} : vector<12x20x20xf32> to vector<8x20x20xf32>
    %cst_34 = arith.constant 0.0584163442 : f32
    %136 = vector.broadcast %cst_34 : f32 to vector<8x20x20xf32>
    %137 = arith.mulf %136, %135 : vector<8x20x20xf32>
    %138 = arith.addf %134, %137 : vector<8x20x20xf32>
    %139 = vector.extract_strided_slice %127 {offsets = [3, 0, 0], sizes = [8, 20, 20], strides = [1, 1, 1]} : vector<12x20x20xf32> to vector<8x20x20xf32>
    %cst_35 = arith.constant 0.0467761531 : f32
    %140 = vector.broadcast %cst_35 : f32 to vector<8x20x20xf32>
    %141 = arith.mulf %140, %139 : vector<8x20x20xf32>
    %142 = arith.addf %138, %141 : vector<8x20x20xf32>
    %143 = vector.extract_strided_slice %127 {offsets = [4, 0, 0], sizes = [8, 20, 20], strides = [1, 1, 1]} : vector<12x20x20xf32> to vector<8x20x20xf32>
    %cst_36 = arith.constant 0.0240156762 : f32
    %144 = vector.broadcast %cst_36 : f32 to vector<8x20x20xf32>
    %145 = arith.mulf %144, %143 : vector<8x20x20xf32>
    %146 = arith.addf %142, %145 : vector<8x20x20xf32>
    %147 = vector.extract_strided_slice %146 {offsets = [0, 0, 0], sizes = [8, 16, 20], strides = [1, 1, 1]} : vector<8x20x20xf32> to vector<8x16x20xf32>
    %148 = vector.extract_strided_slice %146 {offsets = [0, 1, 0], sizes = [8, 16, 20], strides = [1, 1, 1]} : vector<8x20x20xf32> to vector<8x16x20xf32>
    %149 = arith.addf %147, %148 : vector<8x16x20xf32>
    %150 = vector.extract_strided_slice %146 {offsets = [0, 2, 0], sizes = [8, 16, 20], strides = [1, 1, 1]} : vector<8x20x20xf32> to vector<8x16x20xf32>
    %151 = arith.addf %149, %150 : vector<8x16x20xf32>
    %152 = vector.extract_strided_slice %146 {offsets = [0, 3, 0], sizes = [8, 16, 20], strides = [1, 1, 1]} : vector<8x20x20xf32> to vector<8x16x20xf32>
    %153 = arith.addf %151, %152 : vector<8x16x20xf32>
    %154 = vector.extract_strided_slice %146 {offsets = [0, 4, 0], sizes = [8, 16, 20], strides = [1, 1, 1]} : vector<8x20x20xf32> to vector<8x16x20xf32>
    %155 = arith.addf %153, %154 : vector<8x16x20xf32>
    %156 = vector.shape_cast %155 : vector<8x16x20xf32> to vector<128x20xf32>
    %cst_37 = arith.constant dense<0.000000e+00> : vector<128x16xf32>
    %157 = tpu.matmul %156, %4, %cst_37 {dimension_numbers = #tpu.dot_dimension_numbers<[1], [0], [0], [1], [0, 0, 1, 1], [], []>} : vector<128x20xf32>, vector<20x16xf32>, vector<128x16xf32> -> vector<128x16xf32>
    %158 = arith.mulf %34, %34 : vector<128x16xf32>
    %159 = arith.mulf %64, %64 : vector<128x16xf32>
    %160 = arith.mulf %34, %64 : vector<128x16xf32>
    %161 = arith.subf %95, %158 : vector<128x16xf32>
    %162 = arith.subf %126, %159 : vector<128x16xf32>
    %163 = arith.subf %157, %160 : vector<128x16xf32>
    %cst_38 = arith.constant 2.000000e+00 : f32
    %164 = vector.broadcast %cst_38 : f32 to vector<128x16xf32>
    %165 = arith.mulf %164, %160 : vector<128x16xf32>
    %cst_39 = arith.constant 9.99999974E-5 : f32
    %166 = vector.broadcast %cst_39 : f32 to vector<128x16xf32>
    %167 = arith.addf %165, %166 : vector<128x16xf32>
    %cst_40 = arith.constant 2.000000e+00 : f32
    %168 = vector.broadcast %cst_40 : f32 to vector<128x16xf32>
    %169 = arith.mulf %168, %163 : vector<128x16xf32>
    %cst_41 = arith.constant 8.99999984E-4 : f32
    %170 = vector.broadcast %cst_41 : f32 to vector<128x16xf32>
    %171 = arith.addf %169, %170 : vector<128x16xf32>
    %172 = arith.mulf %167, %171 : vector<128x16xf32>
    %173 = arith.addf %158, %159 : vector<128x16xf32>
    %cst_42 = arith.constant 9.99999974E-5 : f32
    %174 = vector.broadcast %cst_42 : f32 to vector<128x16xf32>
    %175 = arith.addf %173, %174 : vector<128x16xf32>
    %176 = arith.addf %161, %162 : vector<128x16xf32>
    %cst_43 = arith.constant 8.99999984E-4 : f32
    %177 = vector.broadcast %cst_43 : f32 to vector<128x16xf32>
    %178 = arith.addf %176, %177 : vector<128x16xf32>
    %179 = arith.mulf %175, %178 : vector<128x16xf32>
    %180 = tpu.reciprocal %179 {approx = true} : vector<128x16xf32> -> vector<128x16xf32>
    %181 = arith.mulf %179, %180 : vector<128x16xf32>
    %cst_44 = arith.constant 2.000000e+00 : f32
    %182 = vector.broadcast %cst_44 : f32 to vector<128x16xf32>
    %183 = arith.subf %182, %181 : vector<128x16xf32>
    %184 = arith.mulf %180, %183 : vector<128x16xf32>
    %185 = arith.mulf %172, %184 : vector<128x16xf32>
    %cst_45 = arith.constant dense<0.000000e+00> : vector<16xf32>
    %186 = vector.multi_reduction <add>, %185, %cst_45 [0] : vector<128x16xf32> to vector<16xf32>
    %187 = vector.shape_cast %186 : vector<16xf32> to vector<1x16xf32>
    %c0_46 = arith.constant 0 : index
    %c0_47 = arith.constant 0 : index
    %c0_48 = arith.constant 0 : index
    %188 = vector.load %arg4[%c0_46, %c0_47, %c0_48] : memref<1x1x16xf32, #tpu.memory_space<vmem>>, vector<1x1x16xf32>
    %189 = vector.shape_cast %188 : vector<1x1x16xf32> to vector<1x16xf32>
    %190 = vector.shape_cast %187 : vector<1x16xf32> to vector<1x1x16xf32>
    tpu.vector_store %arg4[%c0_46, %c0_47, %c0_48], %190 {strides = array<i32>} : memref<1x1x16xf32, #tpu.memory_space<vmem>>, vector<1x1x16xf32>,
    return
  }
  func.func @transform_0(%arg0: i32) -> (i32, i32, i32, i32) {
    %c0_i32 = arith.constant 0 : i32
    %c0_i32_0 = arith.constant 0 : i32
    %c0_i32_1 = arith.constant 0 : i32
    %c0_i32_2 = arith.constant 0 : i32
    return %arg0, %c0_i32, %c0_i32_0, %c0_i32_1 : i32, i32, i32, i32
  }
  func.func @transform_1(%arg0: i32) -> (i32, i32, i32, i32) {
    %c0_i32 = arith.constant 0 : i32
    %c0_i32_0 = arith.constant 0 : i32
    %c0_i32_1 = arith.constant 0 : i32
    %c0_i32_2 = arith.constant 0 : i32
    return %arg0, %c0_i32, %c0_i32_0, %c0_i32_1 : i32, i32, i32, i32
  }
  func.func @transform_2(%arg0: i32) -> (i32, i32) {
    %c0_i32 = arith.constant 0 : i32
    %c0_i32_0 = arith.constant 0 : i32
    %c0_i32_1 = arith.constant 0 : i32
    return %c0_i32, %c0_i32_0 : i32, i32
  }
  func.func @transform_3(%arg0: i32) -> (i32, i32, i32) {
    %c0_i32 = arith.constant 0 : i32
    %c0_i32_0 = arith.constant 0 : i32
    %c0_i32_1 = arith.constant 0 : i32
    return %arg0, %c0_i32, %c0_i32_0 : i32, i32, i32
  }
}

</mosaic_0001>

<llo_original>
// kernel: tpu_custom_call.1
$region0: #{tpu_custom_call.1}
  #allocation0 [shape = 'u32[]', space=smem, size = 0x4, offset = 0x4, fixed_abs, tag = 'smem constant byte address 0x4 - core index']
  #allocation1 [shape = 'u32[144,128]{1,0:T(1,128)}', space=vmem, size = 0x12000, scoped, tag = 'internal scratch']
  %s0 = inlined_call_operand.vmem [shape: f32[2,12,20,20], index: 0, kind: input, shape index: {}]
  %s1 = inlined_call_operand.vmem [shape: f32[2,12,20,20], index: 1, kind: input, shape index: {}]
  %s2 = inlined_call_operand.vmem [shape: f32[20,16], index: 2, kind: input, shape index: {}]
  %s3 = inlined_call_operand.hbm [shape: f32[2,1,16], index: 3, kind: output, shape index: {}]
  %s4 = sld [smem:[#allocation0]]
  $region45: #{tpu_custom_call.1} parent=0
    _
  %s6 = ssub.s32 1, %s4
  %s7 = scalar_select 0, %s6, %s4
  $region1: #{tpu_custom_call.1} parent=0
    #allocation2 [shape = 'u8[1024]{0}', space=vmem, size = 0x400, scoped, tag = 'output window, operand 0']
    #allocation3 [shape = 's32[2]{0}', space=sflag, size = 0x8, scoped, tag = 'scoped memory for tpu_custom_call.1']
    %8 = vsyncpa [#allocation3], 0
    %s9 = scalar_lea.sflag [#allocation3], 1
    %10 = vsyncpa %s9, 0
    loop: start=0, step=1, limit=4
    $region2: #{tpu_custom_call.1} parent=1 // loop_pre_header
      _
    $region3: #{tpu_custom_call.1} parent=1 // loop_header
      %s12 = sphi 0, %s16
      %p13 = scmp.ge.s32.totalorder %s12, 4
      %s22 = sphi 0, %s24
      %s25 = sphi 0, %s22
      %s26 = sphi 0, %s25
      %s42 = sphi 0, %s26
      %s48 = sphi 0, %s50
      %s51 = sphi 0, %s48
      %s52 = sphi 0, %s51
      %s68 = sphi 0, %s52
      %s72 = sphi 0, %s72
      %s74 = sphi 0, %s72
      %s75 = sphi 0, %s74
      %s89 = sphi 0, %s75
      %s95 = sphi 0, %s97
      %s98 = sphi 0, %s95
      %s99 = sphi 0, %s98
      %s115 = sphi 0, %s99
    $region4: #{tpu_custom_call.1} parent=1 // loop_header_branch
      %15 = sbr.rel (%p13) target = $region8
    $region5: #{tpu_custom_call.1} parent=1 // loop_body
      %s17 = ssub.s32 %s12, 1
      %s18 = ssub.s32 %s12, 2
      %s19 = sadd.s32 %s12, 1
      %s20 = ssub.s32 %s12, %s19
      %p21 = scmp.eq.s32.totalorder %s20, 0
      %s23 = sadd.s32 %s22, 1
      %s24 = scalar_select %p21, %s22, %s23
      %p27 = pneg %p21
      %p28 = scmp.eq.s32.totalorder %s12, 1
      %p29 = por %p27, %p28
      %p30 = scmp.ne.s32.totalorder %s22, %s25
      %p31 = scmp.eq.s32.totalorder %s12, 0
      %p32 = por %p30, %p31
      %p33 = scmp.ne.s32.totalorder %s22, %s25
      %p34 = scmp.eq.s32.totalorder %s17, 1
      %p35 = por %p33, %p34
      %p36 = scmp.ne.s32.totalorder %s25, %s26
      %p37 = scmp.eq.s32.totalorder %s17, 0
      %p38 = por %p36, %p37
      %p39 = scmp.ne.s32.totalorder %s25, %s26
      %p40 = scmp.eq.s32.totalorder %s18, 1
      %p41 = por %p39, %p40
      %p43 = scmp.ne.s32.totalorder %s26, %s42
      %p44 = scmp.eq.s32.totalorder %s18, 0
      %p45 = por %p43, %p44
      %s46 = ssub.s32 %s12, %s19
      %p47 = scmp.eq.s32.totalorder %s46, 0
      %s49 = sadd.s32 %s48, 1
      %s50 = scalar_select %p47, %s48, %s49
      %p53 = pneg %p47
      %p54 = scmp.eq.s32.totalorder %s12, 1
      %p55 = por %p53, %p54
      %p56 = scmp.ne.s32.totalorder %s48, %s51
      %p57 = scmp.eq.s32.totalorder %s12, 0
      %p58 = por %p56, %p57
      %p59 = scmp.ne.s32.totalorder %s48, %s51
      %p60 = scmp.eq.s32.totalorder %s17, 1
      %p61 = por %p59, %p60
      %p62 = scmp.ne.s32.totalorder %s51, %s52
      %p63 = scmp.eq.s32.totalorder %s17, 0
      %p64 = por %p62, %p63
      %p65 = scmp.ne.s32.totalorder %s51, %s52
      %p66 = scmp.eq.s32.totalorder %s18, 1
      %p67 = por %p65, %p66
      %p69 = scmp.ne.s32.totalorder %s52, %s68
      %p70 = scmp.eq.s32.totalorder %s18, 0
      %p71 = por %p69, %p70
      %s73 = sadd.s32 %s72, 1
      %p76 = scmp.eq.s32.totalorder %s12, 1
      %p77 = scmp.ne.s32.totalorder %s72, %s74
      %p78 = scmp.eq.s32.totalorder %s12, 0
      %p79 = por %p77, %p78
      %p80 = scmp.ne.s32.totalorder %s72, %s74
      %p81 = scmp.eq.s32.totalorder %s17, 1
      %p82 = por %p80, %p81
      %p83 = scmp.ne.s32.totalorder %s74, %s75
      %p84 = scmp.eq.s32.totalorder %s17, 0
      %p85 = por %p83, %p84
      %p86 = scmp.ne.s32.totalorder %s74, %s75
      %p87 = scmp.eq.s32.totalorder %s18, 1
      %p88 = por %p86, %p87
      %p90 = scmp.ne.s32.totalorder %s75, %s89
      %p91 = scmp.eq.s32.totalorder %s18, 0
      %p92 = por %p90, %p91
      %s93 = ssub.s32 %s12, %s19
      %p94 = scmp.eq.s32.totalorder %s93, 0
      %s96 = sadd.s32 %s95, 1
      %s97 = scalar_select %p94, %s95, %s96
      %p100 = pneg %p94
      %p101 = scmp.eq.s32.totalorder %s12, 1
      %p102 = por %p100, %p101
      %p103 = scmp.ne.s32.totalorder %s95, %s98
      %p104 = scmp.eq.s32.totalorder %s12, 0
      %p105 = por %p103, %p104
      %p106 = scmp.ne.s32.totalorder %s95, %s98
      %p107 = scmp.eq.s32.totalorder %s17, 1
      %p108 = por %p106, %p107
      %p109 = scmp.ne.s32.totalorder %s98, %s99
      %p110 = scmp.eq.s32.totalorder %s17, 0
      %p111 = por %p109, %p110
      %p112 = scmp.ne.s32.totalorder %s98, %s99
      %p113 = scmp.eq.s32.totalorder %s18, 1
      %p114 = por %p112, %p113
      %p116 = scmp.ne.s32.totalorder %s99, %s115
      %p117 = scmp.eq.s32.totalorder %s18, 0
      %p118 = por %p116, %p117
      %p119 = scmp.le.s32.totalorder 1, %s12
      %p120 = scmp.lt.s32.totalorder %s12, 3
      %p121 = pnand %p119, %p120
      %p122 = pneg %p121
      // Predicated region
      $region9: #{tpu_custom_call.1} parent=5 // pred_check
        _
      $region10: #{tpu_custom_call.1} parent=5 // pred_check_branch
        %124 = sbr.rel (%p121) target = $region12
      $region11: #{tpu_custom_call.1} parent=5 // pred_region
        %s125 = ssub.s32 %s12, 1
        // Predicated region
        $region13: #{tpu_custom_call.1} parent=11 // pred_check
          %p126 = pneg %p85
        $region14: #{tpu_custom_call.1} parent=11 // pred_check_branch
          %128 = sbr.rel (%p126) target = $region16
        $region15: #{tpu_custom_call.1} parent=11 // pred_region
          _
        $region16: #{tpu_custom_call.1} parent=11 // pred_fallthru
          _
      $region12: #{tpu_custom_call.1} parent=5 // pred_fallthru
        _
      %p129 = scmp.lt.s32.totalorder %s12, 2
      // Predicated region
      $region17: #{tpu_custom_call.1} parent=5 // pred_check
        %p130 = pneg %p129
      $region18: #{tpu_custom_call.1} parent=5 // pred_check_branch
        %132 = sbr.rel (%p130) target = $region20
      $region19: #{tpu_custom_call.1} parent=5 // pred_region
        // Predicated region
        $region21: #{tpu_custom_call.1} parent=19 // pred_check
          %p133 = pneg %p32
        $region22: #{tpu_custom_call.1} parent=19 // pred_check_branch
          %135 = sbr.rel (%p133) target = $region24
        $region23: #{tpu_custom_call.1} parent=19 // pred_region
          %p136 = scmp.lt.s32.totalorder %s12, 1
          %s137 = scalar_select %p136, %s12, 1
          %s138 = smul.addr %s137, 36
          %s139 = smul.addr %s138, 8
          %s140 = scalar_lea.vmem %s0, %s139
        $region24: #{tpu_custom_call.1} parent=19 // pred_fallthru
          _
        // Predicated region
        $region25: #{tpu_custom_call.1} parent=19 // pred_check
          %p141 = pneg %p58
        $region26: #{tpu_custom_call.1} parent=19 // pred_check_branch
          %143 = sbr.rel (%p141) target = $region28
        $region27: #{tpu_custom_call.1} parent=19 // pred_region
          %p144 = scmp.lt.s32.totalorder %s12, 1
          %s145 = scalar_select %p144, %s12, 1
          %s146 = smul.addr %s145, 36
          %s147 = smul.addr %s146, 8
          %s148 = scalar_lea.vmem %s1, %s147
        $region28: #{tpu_custom_call.1} parent=19 // pred_fallthru
          _
      $region20: #{tpu_custom_call.1} parent=5 // pred_fallthru
        _
      %p149 = scmp.le.s32.totalorder 1, %s12
      %p150 = scmp.lt.s32.totalorder %s12, 3
      %p151 = pnand %p149, %p150
      %p152 = pneg %p151
      // Predicated region
      $region29: #{tpu_custom_call.1} parent=5 // pred_check
        _
      $region30: #{tpu_custom_call.1} parent=5 // pred_check_branch
        %154 = sbr.rel (%p151) target = $region32
      $region31: #{tpu_custom_call.1} parent=5 // pred_region
        %s155 = ssub.s32 %s12, 1
        %p156 = scmp.lt.s32.totalorder %s17, 1
        %s157 = scalar_select %p156, %s17, 1
        %s158 = smul.addr %s157, 36
        %s159 = smul.addr %s158, 8
        %s160 = scalar_lea.vmem %s0, %s159
        %p161 = pneg %p38
        %p162 = pneg %p35
        %p163 = scmp.lt.s32.totalorder %s17, 1
        %s164 = scalar_select %p163, %s17, 1
        %s165 = smul.addr %s164, 36
        %s166 = smul.addr %s165, 8
        %s167 = scalar_lea.vmem %s1, %s166
        %p168 = pneg %p64
        %p169 = pneg %p61
        %p170 = pneg %p85
        %p171 = pneg %p82
        %p172 = pneg %p111
        %p173 = pneg %p108
        %s174 = sand.u32 %s98, 1
        %s175 = scalar_lea.sflag [#allocation3], %s174
        %s176 = sand.u32 %s98, 1
        %s177 = scalar_lea.vmem [#allocation2], %s176
        %p178 = scmp.lt.s32.totalorder %s17, 1
        %s179 = scalar_select %p178, %s17, 1
        %s180 = smul.addr %s179, 36
        %s181 = smul.addr %s180, 8
        %s182 = scalar_lea.vmem %s0, %s181
        %p183 = scmp.lt.s32.totalorder %s17, 1
        %s184 = scalar_select %p183, %s17, 1
        %s185 = smul.addr %s184, 36
        %s186 = smul.addr %s185, 8
        %s187 = scalar_lea.vmem %s1, %s186
        %v188 = vld [vmem:[%s182] sm:$0xff]
        %v189 = vld [vmem:[%s182 + $0x8] sm:$0xff]
        %v190 = vld [vmem:[%s182 + $0x10] sm:$0xf]
        %v191 = vld [vmem:[%s182 + $0x18] sm:$0xff]
        %v192 = vld [vmem:[%s182 + $0x20] sm:$0xff]
        %v193 = vld [vmem:[%s182 + $0x28] sm:$0xf]
        %v194 = vld [vmem:[%s182 + $0x30] sm:$0xff]
        %v195 = vld [vmem:[%s182 + $0x38] sm:$0xff]
        %v196 = vld [vmem:[%s182 + $0x40] sm:$0xf]
        %v197 = vld [vmem:[%s182 + $0x48] sm:$0xff]
        %v198 = vld [vmem:[%s182 + $0x50] sm:$0xff]
        %v199 = vld [vmem:[%s182 + $0x58] sm:$0xf]
        %v200 = vld [vmem:[%s182 + $0x60] sm:$0xff]
        %v201 = vld [vmem:[%s182 + $0x68] sm:$0xff]
        %v202 = vld [vmem:[%s182 + $0x70] sm:$0xf]
        %v203 = vld [vmem:[%s182 + $0x78] sm:$0xff]
        %v204 = vld [vmem:[%s182 + $0x80] sm:$0xff]
        %v205 = vld [vmem:[%s182 + $0x88] sm:$0xf]
        %v206 = vld [vmem:[%s182 + $0x90] sm:$0xff]
        %v207 = vld [vmem:[%s182 + $0x98] sm:$0xff]
        %v208 = vld [vmem:[%s182 + $0xa0] sm:$0xf]
        %v209 = vld [vmem:[%s182 + $0xa8] sm:$0xff]
        %v210 = vld [vmem:[%s182 + $0xb0] sm:$0xff]
        %v211 = vld [vmem:[%s182 + $0xb8] sm:$0xf]
        %v212 = vld [vmem:[%s182 + $0xc0] sm:$0xff]
        %v213 = vld [vmem:[%s182 + $0xc8] sm:$0xff]
        %v214 = vld [vmem:[%s182 + $0xd0] sm:$0xf]
        %v215 = vld [vmem:[%s182 + $0xd8] sm:$0xff]
        %v216 = vld [vmem:[%s182 + $0xe0] sm:$0xff]
        %v217 = vld [vmem:[%s182 + $0xe8] sm:$0xf]
        %v218 = vld [vmem:[%s182 + $0xf0] sm:$0xff]
        %v219 = vld [vmem:[%s182 + $0xf8] sm:$0xff]
        %v220 = vld [vmem:[%s182 + $0x100] sm:$0xf]
        %v221 = vld [vmem:[%s182 + $0x108] sm:$0xff]
        %v222 = vld [vmem:[%s182 + $0x110] sm:$0xff]
        %v223 = vld [vmem:[%s182 + $0x118] sm:$0xf]
        %v224 = vld [vmem:[%s187] sm:$0xff]
        %v225 = vld [vmem:[%s187 + $0x8] sm:$0xff]
        %v226 = vld [vmem:[%s187 + $0x10] sm:$0xf]
        %v227 = vld [vmem:[%s187 + $0x18] sm:$0xff]
        %v228 = vld [vmem:[%s187 + $0x20] sm:$0xff]
        %v229 = vld [vmem:[%s187 + $0x28] sm:$0xf]
        %v230 = vld [vmem:[%s187 + $0x30] sm:$0xff]
        %v231 = vld [vmem:[%s187 + $0x38] sm:$0xff]
        %v232 = vld [vmem:[%s187 + $0x40] sm:$0xf]
        %v233 = vld [vmem:[%s187 + $0x48] sm:$0xff]
        %v234 = vld [vmem:[%s187 + $0x50] sm:$0xff]
        %v235 = vld [vmem:[%s187 + $0x58] sm:$0xf]
        %v236 = vld [vmem:[%s187 + $0x60] sm:$0xff]
        %v237 = vld [vmem:[%s187 + $0x68] sm:$0xff]
        %v238 = vld [vmem:[%s187 + $0x70] sm:$0xf]
        %v239 = vld [vmem:[%s187 + $0x78] sm:$0xff]
        %v240 = vld [vmem:[%s187 + $0x80] sm:$0xff]
        %v241 = vld [vmem:[%s187 + $0x88] sm:$0xf]
        %v242 = vld [vmem:[%s187 + $0x90] sm:$0xff]
        %v243 = vld [vmem:[%s187 + $0x98] sm:$0xff]
        %v244 = vld [vmem:[%s187 + $0xa0] sm:$0xf]
        %v245 = vld [vmem:[%s187 + $0xa8] sm:$0xff]
        %v246 = vld [vmem:[%s187 + $0xb0] sm:$0xff]
        %v247 = vld [vmem:[%s187 + $0xb8] sm:$0xf]
        %v248 = vld [vmem:[%s187 + $0xc0] sm:$0xff]
        %v249 = vld [vmem:[%s187 + $0xc8] sm:$0xff]
        %v250 = vld [vmem:[%s187 + $0xd0] sm:$0xf]
        %v251 = vld [vmem:[%s187 + $0xd8] sm:$0xff]
        %v252 = vld [vmem:[%s187 + $0xe0] sm:$0xff]
        %v253 = vld [vmem:[%s187 + $0xe8] sm:$0xf]
        %v254 = vld [vmem:[%s187 + $0xf0] sm:$0xff]
        %v255 = vld [vmem:[%s187 + $0xf8] sm:$0xff]
        %v256 = vld [vmem:[%s187 + $0x100] sm:$0xf]
        %v257 = vld [vmem:[%s187 + $0x108] sm:$0xff]
        %v258 = vld [vmem:[%s187 + $0x110] sm:$0xff]
        %v259 = vld [vmem:[%s187 + $0x118] sm:$0xf]
        %v260 = vld [vmem:[%s2] sm:$0xff]
        %v261 = vld [vmem:[%s2 + $0x8] sm:$0xff]
        %v262 = vld [vmem:[%s2 + $0x10] sm:$0xf]
        %v263 = vmul.f32 %v188, 0.024015676
        %v264 = vmul.f32 %v189, 0.024015676
        %v265 = vmul.f32 %v190, 0.024015676
        %v266 = vmul.f32 %v191, 0.024015676
        %v267 = vmul.f32 %v192, 0.024015676
        %v268 = vmul.f32 %v193, 0.024015676
        %v269 = vmul.f32 %v194, 0.024015676
        %v270 = vmul.f32 %v195, 0.024015676
        %v271 = vmul.f32 %v196, 0.024015676
        %v272 = vmul.f32 %v197, 0.024015676
        %v273 = vmul.f32 %v198, 0.024015676
        %v274 = vmul.f32 %v199, 0.024015676
        %v275 = vmul.f32 %v200, 0.024015676
        %v276 = vmul.f32 %v201, 0.024015676
        %v277 = vmul.f32 %v202, 0.024015676
        %v278 = vmul.f32 %v203, 0.024015676
        %v279 = vmul.f32 %v204, 0.024015676
        %v280 = vmul.f32 %v205, 0.024015676
        %v281 = vmul.f32 %v206, 0.024015676
        %v282 = vmul.f32 %v207, 0.024015676
        %v283 = vmul.f32 %v208, 0.024015676
        %v284 = vmul.f32 %v209, 0.024015676
        %v285 = vmul.f32 %v210, 0.024015676
        %v286 = vmul.f32 %v211, 0.024015676
        %v287 = vmul.f32 %v191, 0.046776153
        %v288 = vmul.f32 %v192, 0.046776153
        %v289 = vmul.f32 %v193, 0.046776153
        %v290 = vmul.f32 %v194, 0.046776153
        %v291 = vmul.f32 %v195, 0.046776153
        %v292 = vmul.f32 %v196, 0.046776153
        %v293 = vmul.f32 %v197, 0.046776153
        %v294 = vmul.f32 %v198, 0.046776153
        %v295 = vmul.f32 %v199, 0.046776153
        %v296 = vmul.f32 %v200, 0.046776153
        %v297 = vmul.f32 %v201, 0.046776153
        %v298 = vmul.f32 %v202, 0.046776153
        %v299 = vmul.f32 %v203, 0.046776153
        %v300 = vmul.f32 %v204, 0.046776153
        %v301 = vmul.f32 %v205, 0.046776153
        %v302 = vmul.f32 %v206, 0.046776153
        %v303 = vmul.f32 %v207, 0.046776153
        %v304 = vmul.f32 %v208, 0.046776153
        %v305 = vmul.f32 %v209, 0.046776153
        %v306 = vmul.f32 %v210, 0.046776153
        %v307 = vmul.f32 %v211, 0.046776153
        %v308 = vmul.f32 %v212, 0.046776153
        %v309 = vmul.f32 %v213, 0.046776153
        %v310 = vmul.f32 %v214, 0.046776153
        %v311 = vadd.f32 %v263, %v287
        %v312 = vadd.f32 %v264, %v288
        %v313 = vadd.f32 %v265, %v289
        %v314 = vadd.f32 %v266, %v290
        %v315 = vadd.f32 %v267, %v291
        %v316 = vadd.f32 %v268, %v292
        %v317 = vadd.f32 %v269, %v293
        %v318 = vadd.f32 %v270, %v294
        %v319 = vadd.f32 %v271, %v295
        %v320 = vadd.f32 %v272, %v296
        %v321 = vadd.f32 %v273, %v297
        %v322 = vadd.f32 %v274, %v298
        %v323 = vadd.f32 %v275, %v299
        %v324 = vadd.f32 %v276, %v300
        %v325 = vadd.f32 %v277, %v301
        %v326 = vadd.f32 %v278, %v302
        %v327 = vadd.f32 %v279, %v303
        %v328 = vadd.f32 %v280, %v304
        %v329 = vadd.f32 %v281, %v305
        %v330 = vadd.f32 %v282, %v306
        %v331 = vadd.f32 %v283, %v307
        %v332 = vadd.f32 %v284, %v308
        %v333 = vadd.f32 %v285, %v309
        %v334 = vadd.f32 %v286, %v310
        %v335 = vmul.f32 %v194, 0.058416344
        %v336 = vmul.f32 %v195, 0.058416344
        %v337 = vmul.f32 %v196, 0.058416344
        %v338 = vmul.f32 %v197, 0.058416344
        %v339 = vmul.f32 %v198, 0.058416344
        %v340 = vmul.f32 %v199, 0.058416344
        %v341 = vmul.f32 %v200, 0.058416344
        %v342 = vmul.f32 %v201, 0.058416344
        %v343 = vmul.f32 %v202, 0.058416344
        %v344 = vmul.f32 %v203, 0.058416344
        %v345 = vmul.f32 %v204, 0.058416344
        %v346 = vmul.f32 %v205, 0.058416344
        %v347 = vmul.f32 %v206, 0.058416344
        %v348 = vmul.f32 %v207, 0.058416344
        %v349 = vmul.f32 %v208, 0.058416344
        %v350 = vmul.f32 %v209, 0.058416344
        %v351 = vmul.f32 %v210, 0.058416344
        %v352 = vmul.f32 %v211, 0.058416344
        %v353 = vmul.f32 %v212, 0.058416344
        %v354 = vmul.f32 %v213, 0.058416344
        %v355 = vmul.f32 %v214, 0.058416344
        %v356 = vmul.f32 %v215, 0.058416344
        %v357 = vmul.f32 %v216, 0.058416344
        %v358 = vmul.f32 %v217, 0.058416344
        %v359 = vadd.f32 %v311, %v335
        %v360 = vadd.f32 %v312, %v336
        %v361 = vadd.f32 %v313, %v337
        %v362 = vadd.f32 %v314, %v338
        %v363 = vadd.f32 %v315, %v339
        %v364 = vadd.f32 %v316, %v340
        %v365 = vadd.f32 %v317, %v341
        %v366 = vadd.f32 %v318, %v342
        %v367 = vadd.f32 %v319, %v343
        %v368 = vadd.f32 %v320, %v344
        %v369 = vadd.f32 %v321, %v345
        %v370 = vadd.f32 %v322, %v346
        %v371 = vadd.f32 %v323, %v347
        %v372 = vadd.f32 %v324, %v348
        %v373 = vadd.f32 %v325, %v349
        %v374 = vadd.f32 %v326, %v350
        %v375 = vadd.f32 %v327, %v351
        %v376 = vadd.f32 %v328, %v352
        %v377 = vadd.f32 %v329, %v353
        %v378 = vadd.f32 %v330, %v354
        %v379 = vadd.f32 %v331, %v355
        %v380 = vadd.f32 %v332, %v356
        %v381 = vadd.f32 %v333, %v357
        %v382 = vadd.f32 %v334, %v358
        %v383 = vmul.f32 %v215, 0.046776153
        %v384 = vmul.f32 %v216, 0.046776153
        %v385 = vmul.f32 %v217, 0.046776153
        %v386 = vmul.f32 %v218, 0.046776153
        %v387 = vmul.f32 %v219, 0.046776153
        %v388 = vmul.f32 %v220, 0.046776153
        %v389 = vadd.f32 %v359, %v293
        %v390 = vadd.f32 %v360, %v294
        %v391 = vadd.f32 %v361, %v295
        %v392 = vadd.f32 %v362, %v296
        %v393 = vadd.f32 %v363, %v297
        %v394 = vadd.f32 %v364, %v298
        %v395 = vadd.f32 %v365, %v299
        %v396 = vadd.f32 %v366, %v300
        %v397 = vadd.f32 %v367, %v301
        %v398 = vadd.f32 %v368, %v302
        %v399 = vadd.f32 %v369, %v303
        %v400 = vadd.f32 %v370, %v304
        %v401 = vadd.f32 %v371, %v305
        %v402 = vadd.f32 %v372, %v306
        %v403 = vadd.f32 %v373, %v307
        %v404 = vadd.f32 %v374, %v308
        %v405 = vadd.f32 %v375, %v309
        %v406 = vadd.f32 %v376, %v310
        %v407 = vadd.f32 %v377, %v383
        %v408 = vadd.f32 %v378, %v384
        %v409 = vadd.f32 %v379, %v385
        %v410 = vadd.f32 %v380, %v386
        %v411 = vadd.f32 %v381, %v387
        %v412 = vadd.f32 %v382, %v388
        %v413 = vmul.f32 %v212, 0.024015676
        %v414 = vmul.f32 %v213, 0.024015676
        %v415 = vmul.f32 %v214, 0.024015676
        %v416 = vmul.f32 %v215, 0.024015676
        %v417 = vmul.f32 %v216, 0.024015676
        %v418 = vmul.f32 %v217, 0.024015676
        %v419 = vmul.f32 %v218, 0.024015676
        %v420 = vmul.f32 %v219, 0.024015676
        %v421 = vmul.f32 %v220, 0.024015676
        %v422 = vmul.f32 %v221, 0.024015676
        %v423 = vmul.f32 %v222, 0.024015676
        %v424 = vmul.f32 %v223, 0.024015676
        %v425 = vadd.f32 %v389, %v275
        %v426 = vadd.f32 %v390, %v276
        %v427 = vadd.f32 %v391, %v277
        %v428 = vadd.f32 %v392, %v278
        %v429 = vadd.f32 %v393, %v279
        %v430 = vadd.f32 %v394, %v280
        %v431 = vadd.f32 %v395, %v281
        %v432 = vadd.f32 %v396, %v282
        %v433 = vadd.f32 %v397, %v283
        %v434 = vadd.f32 %v398, %v284
        %v435 = vadd.f32 %v399, %v285
        %v436 = vadd.f32 %v400, %v286
        %v437 = vadd.f32 %v401, %v413
        %v438 = vadd.f32 %v402, %v414
        %v439 = vadd.f32 %v403, %v415
        %v440 = vadd.f32 %v404, %v416
        %v441 = vadd.f32 %v405, %v417
        %v442 = vadd.f32 %v406, %v418
        %v443 = vadd.f32 %v407, %v419
        %v444 = vadd.f32 %v408, %v420
        %v445 = vadd.f32 %v409, %v421
        %v446 = vadd.f32 %v410, %v422
        %v447 = vadd.f32 %v411, %v423
        %v448 = vadd.f32 %v412, %v424
        %vm473 = vcmask 1046528
        %v474 = vrot.slane %v425, 1
        %v475 = vrot.slane %v426, 1
        %v476 = vsel %vm473, %v474, %v475
        %v477 = vrot.slane %v427, 1
        %v478 = vsel %vm473, %v475, %v477
        %v479 = vrot.slane %v428, 1
        %v480 = vrot.slane %v429, 1
        %v481 = vsel %vm473, %v479, %v480
        %v482 = vrot.slane %v430, 1
        %v483 = vsel %vm473, %v480, %v482
        %v484 = vrot.slane %v431, 1
        %v485 = vrot.slane %v432, 1
        %v486 = vsel %vm473, %v484, %v485
        %v487 = vrot.slane %v433, 1
        %v488 = vsel %vm473, %v485, %v487
        %v489 = vrot.slane %v434, 1
        %v490 = vrot.slane %v435, 1
        %v491 = vsel %vm473, %v489, %v490
        %v492 = vrot.slane %v436, 1
        %v493 = vsel %vm473, %v490, %v492
        %v494 = vrot.slane %v437, 1
        %v495 = vrot.slane %v438, 1
        %v496 = vsel %vm473, %v494, %v495
        %v497 = vrot.slane %v439, 1
        %v498 = vsel %vm473, %v495, %v497
        %v499 = vrot.slane %v440, 1
        %v500 = vrot.slane %v441, 1
        %v501 = vsel %vm473, %v499, %v500
        %v502 = vrot.slane %v442, 1
        %v503 = vsel %vm473, %v500, %v502
        %v504 = vrot.slane %v443, 1
        %v505 = vrot.slane %v444, 1
        %v506 = vsel %vm473, %v504, %v505
        %v507 = vrot.slane %v445, 1
        %v508 = vsel %vm473, %v505, %v507
        %v509 = vrot.slane %v446, 1
        %v510 = vrot.slane %v447, 1
        %v511 = vsel %vm473, %v509, %v510
        %v512 = vrot.slane %v448, 1
        %v513 = vsel %vm473, %v510, %v512
        %v530 = vadd.f32 %v425, %v476
        %v531 = vadd.f32 %v426, %v478
        %v532 = vadd.f32 %v428, %v481
        %v533 = vadd.f32 %v429, %v483
        %v534 = vadd.f32 %v431, %v486
        %v535 = vadd.f32 %v432, %v488
        %v536 = vadd.f32 %v434, %v491
        %v537 = vadd.f32 %v435, %v493
        %v538 = vadd.f32 %v437, %v496
        %v539 = vadd.f32 %v438, %v498
        %v540 = vadd.f32 %v440, %v501
        %v541 = vadd.f32 %v441, %v503
        %v542 = vadd.f32 %v443, %v506
        %v543 = vadd.f32 %v444, %v508
        %v544 = vadd.f32 %v446, %v511
        %v545 = vadd.f32 %v447, %v513
        %vm546 = vcmask 1045504
        %v547 = vrot.slane %v425, 2
        %v548 = vrot.slane %v426, 2
        %v549 = vsel %vm546, %v547, %v548
        %v550 = vrot.slane %v427, 2
        %v551 = vsel %vm546, %v548, %v550
        %v552 = vrot.slane %v428, 2
        %v553 = vrot.slane %v429, 2
        %v554 = vsel %vm546, %v552, %v553
        %v555 = vrot.slane %v430, 2
        %v556 = vsel %vm546, %v553, %v555
        %v557 = vrot.slane %v431, 2
        %v558 = vrot.slane %v432, 2
        %v559 = vsel %vm546, %v557, %v558
        %v560 = vrot.slane %v433, 2
        %v561 = vsel %vm546, %v558, %v560
        %v562 = vrot.slane %v434, 2
        %v563 = vrot.slane %v435, 2
        %v564 = vsel %vm546, %v562, %v563
        %v565 = vrot.slane %v436, 2
        %v566 = vsel %vm546, %v563, %v565
        %v567 = vrot.slane %v437, 2
        %v568 = vrot.slane %v438, 2
        %v569 = vsel %vm546, %v567, %v568
        %v570 = vrot.slane %v439, 2
        %v571 = vsel %vm546, %v568, %v570
        %v572 = vrot.slane %v440, 2
        %v573 = vrot.slane %v441, 2
        %v574 = vsel %vm546, %v572, %v573
        %v575 = vrot.slane %v442, 2
        %v576 = vsel %vm546, %v573, %v575
        %v577 = vrot.slane %v443, 2
        %v578 = vrot.slane %v444, 2
        %v579 = vsel %vm546, %v577, %v578
        %v580 = vrot.slane %v445, 2
        %v581 = vsel %vm546, %v578, %v580
        %v582 = vrot.slane %v446, 2
        %v583 = vrot.slane %v447, 2
        %v584 = vsel %vm546, %v582, %v583
        %v585 = vrot.slane %v448, 2
        %v586 = vsel %vm546, %v583, %v585
        %v603 = vadd.f32 %v530, %v549
        %v604 = vadd.f32 %v531, %v551
        %v605 = vadd.f32 %v532, %v554
        %v606 = vadd.f32 %v533, %v556
        %v607 = vadd.f32 %v534, %v559
        %v608 = vadd.f32 %v535, %v561
        %v609 = vadd.f32 %v536, %v564
        %v610 = vadd.f32 %v537, %v566
        %v611 = vadd.f32 %v538, %v569
        %v612 = vadd.f32 %v539, %v571
        %v613 = vadd.f32 %v540, %v574
        %v614 = vadd.f32 %v541, %v576
        %v615 = vadd.f32 %v542, %v579
        %v616 = vadd.f32 %v543, %v581
        %v617 = vadd.f32 %v544, %v584
        %v618 = vadd.f32 %v545, %v586
        %vm619 = vcmask 1044480
        %v620 = vrot.slane %v425, 3
        %v621 = vrot.slane %v426, 3
        %v622 = vsel %vm619, %v620, %v621
        %v623 = vrot.slane %v427, 3
        %v624 = vsel %vm619, %v621, %v623
        %v625 = vrot.slane %v428, 3
        %v626 = vrot.slane %v429, 3
        %v627 = vsel %vm619, %v625, %v626
        %v628 = vrot.slane %v430, 3
        %v629 = vsel %vm619, %v626, %v628
        %v630 = vrot.slane %v431, 3
        %v631 = vrot.slane %v432, 3
        %v632 = vsel %vm619, %v630, %v631
        %v633 = vrot.slane %v433, 3
        %v634 = vsel %vm619, %v631, %v633
        %v635 = vrot.slane %v434, 3
        %v636 = vrot.slane %v435, 3
        %v637 = vsel %vm619, %v635, %v636
        %v638 = vrot.slane %v436, 3
        %v639 = vsel %vm619, %v636, %v638
        %v640 = vrot.slane %v437, 3
        %v641 = vrot.slane %v438, 3
        %v642 = vsel %vm619, %v640, %v641
        %v643 = vrot.slane %v439, 3
        %v644 = vsel %vm619, %v641, %v643
        %v645 = vrot.slane %v440, 3
        %v646 = vrot.slane %v441, 3
        %v647 = vsel %vm619, %v645, %v646
        %v648 = vrot.slane %v442, 3
        %v649 = vsel %vm619, %v646, %v648
        %v650 = vrot.slane %v443, 3
        %v651 = vrot.slane %v444, 3
        %v652 = vsel %vm619, %v650, %v651
        %v653 = vrot.slane %v445, 3
        %v654 = vsel %vm619, %v651, %v653
        %v655 = vrot.slane %v446, 3
        %v656 = vrot.slane %v447, 3
        %v657 = vsel %vm619, %v655, %v656
        %v658 = vrot.slane %v448, 3
        %v659 = vsel %vm619, %v656, %v658
        %v676 = vadd.f32 %v603, %v622
        %v677 = vadd.f32 %v604, %v624
        %v678 = vadd.f32 %v605, %v627
        %v679 = vadd.f32 %v606, %v629
        %v680 = vadd.f32 %v607, %v632
        %v681 = vadd.f32 %v608, %v634
        %v682 = vadd.f32 %v609, %v637
        %v683 = vadd.f32 %v610, %v639
        %v684 = vadd.f32 %v611, %v642
        %v685 = vadd.f32 %v612, %v644
        %v686 = vadd.f32 %v613, %v647
        %v687 = vadd.f32 %v614, %v649
        %v688 = vadd.f32 %v615, %v652
        %v689 = vadd.f32 %v616, %v654
        %v690 = vadd.f32 %v617, %v657
        %v691 = vadd.f32 %v618, %v659
        %vm692 = vcmask 1043456
        %v693 = vrot.slane %v425, 4
        %v694 = vrot.slane %v426, 4
        %v695 = vsel %vm692, %v693, %v694
        %v696 = vrot.slane %v427, 4
        %v697 = vsel %vm692, %v694, %v696
        %v698 = vrot.slane %v428, 4
        %v699 = vrot.slane %v429, 4
        %v700 = vsel %vm692, %v698, %v699
        %v701 = vrot.slane %v430, 4
        %v702 = vsel %vm692, %v699, %v701
        %v703 = vrot.slane %v431, 4
        %v704 = vrot.slane %v432, 4
        %v705 = vsel %vm692, %v703, %v704
        %v706 = vrot.slane %v433, 4
        %v707 = vsel %vm692, %v704, %v706
        %v708 = vrot.slane %v434, 4
        %v709 = vrot.slane %v435, 4
        %v710 = vsel %vm692, %v708, %v709
        %v711 = vrot.slane %v436, 4
        %v712 = vsel %vm692, %v709, %v711
        %v713 = vrot.slane %v437, 4
        %v714 = vrot.slane %v438, 4
        %v715 = vsel %vm692, %v713, %v714
        %v716 = vrot.slane %v439, 4
        %v717 = vsel %vm692, %v714, %v716
        %v718 = vrot.slane %v440, 4
        %v719 = vrot.slane %v441, 4
        %v720 = vsel %vm692, %v718, %v719
        %v721 = vrot.slane %v442, 4
        %v722 = vsel %vm692, %v719, %v721
        %v723 = vrot.slane %v443, 4
        %v724 = vrot.slane %v444, 4
        %v725 = vsel %vm692, %v723, %v724
        %v726 = vrot.slane %v445, 4
        %v727 = vsel %vm692, %v724, %v726
        %v728 = vrot.slane %v446, 4
        %v729 = vrot.slane %v447, 4
        %v730 = vsel %vm692, %v728, %v729
        %v731 = vrot.slane %v448, 4
        %v732 = vsel %vm692, %v729, %v731
        %v749 = vadd.f32 %v676, %v695
        %v750 = vadd.f32 %v677, %v697
        %v751 = vadd.f32 %v678, %v700
        %v752 = vadd.f32 %v679, %v702
        %v753 = vadd.f32 %v680, %v705
        %v754 = vadd.f32 %v681, %v707
        %v755 = vadd.f32 %v682, %v710
        %v756 = vadd.f32 %v683, %v712
        %v757 = vadd.f32 %v684, %v715
        %v758 = vadd.f32 %v685, %v717
        %v759 = vadd.f32 %v686, %v720
        %v760 = vadd.f32 %v687, %v722
        %v761 = vadd.f32 %v688, %v725
        %v762 = vadd.f32 %v689, %v727
        %v763 = vadd.f32 %v690, %v730
        %v764 = vadd.f32 %v691, %v732
        %vm765 = vcmask 162816
        %v767 = vsel %vm765, %v749, 0
        %v770 = vsel %vm765, %v750, 0
        %v773 = vsel %vm765, %v751, 0
        %v776 = vsel %vm765, %v752, 0
        %v779 = vsel %vm765, %v753, 0
        %v782 = vsel %vm765, %v754, 0
        %v785 = vsel %vm765, %v755, 0
        %v788 = vsel %vm765, %v756, 0
        %v791 = vsel %vm765, %v757, 0
        %v794 = vsel %vm765, %v758, 0
        %v797 = vsel %vm765, %v759, 0
        %v800 = vsel %vm765, %v760, 0
        %v803 = vsel %vm765, %v761, 0
        %v806 = vsel %vm765, %v762, 0
        %v809 = vsel %vm765, %v763, 0
        %v812 = vsel %vm765, %v764, 0
        %v815 = vsel %vm692, %v262, 0
        %817 = vmatprep.subr.mxu0 0.0
        %818 = vmatpush1.msra.mxu0 0.0
        %819 = vmatprep.subr.mxu0 0.0
        %820 = vmatpush1.msra.mxu0 0.0
        %821 = vmatprep.subr.mxu0 0.0
        %822 = vmatpush1.msra.mxu0 0.0
        %823 = vmatprep.subr.mxu0 0.0
        %824 = vmatpush1.msra.mxu0 0.0
        %825 = vmatprep.subr.mxu0 0.0
        %826 = vmatpush1.msra.mxu0 0.0
        %827 = vmatprep.subr.mxu0 0.0
        %828 = vmatpush1.msra.mxu0 0.0
        %829 = vmatprep.subr.mxu0 0.0
        %830 = vmatpush1.msra.mxu0 0.0
        %831 = vmatprep.subr.mxu0 0.0
        %832 = vmatpush1.msra.mxu0 0.0
        %833 = vmatprep.subr.mxu0 0.0
        %834 = vmatpush1.msra.mxu0 0.0
        %835 = vmatprep.subr.mxu0 0.0
        %836 = vmatpush1.msra.mxu0 0.0
        %837 = vmatprep.subr.mxu0 0.0
        %838 = vmatpush1.msra.mxu0 0.0
        %839 = vmatprep.subr.mxu0 0.0
        %840 = vmatpush1.msra.mxu0 0.0
        %841 = vmatprep.subr.mxu0 0.0
        %842 = vmatpush1.msra.mxu0 0.0
        %843 = vmatprep.subr.mxu0 0.0
        %844 = vmatpush1.msra.mxu0 %v815
        %845 = vmatprep.subr.mxu0 0.0
        %846 = vmatpush1.msra.mxu0 %v261
        %847 = vmatprep.subr.mxu0 0.0
        %848 = vmatpush1.msra.mxu0 %v260
        %849 = vmatprep.subr.mxu0 0.0
        %850 = vmatpush2.msra.mxu0 0.0
        %851 = vmatprep.subr.mxu0 0.0
        %852 = vmatpush2.msra.mxu0 0.0
        %853 = vmatprep.subr.mxu0 0.0
        %854 = vmatpush2.msra.mxu0 0.0
        %855 = vmatprep.subr.mxu0 0.0
        %856 = vmatpush2.msra.mxu0 0.0
        %857 = vmatprep.subr.mxu0 0.0
        %858 = vmatpush2.msra.mxu0 0.0
        %859 = vmatprep.subr.mxu0 0.0
        %860 = vmatpush2.msra.mxu0 0.0
        %861 = vmatprep.subr.mxu0 0.0
        %862 = vmatpush2.msra.mxu0 0.0
        %863 = vmatprep.subr.mxu0 0.0
        %864 = vmatpush2.msra.mxu0 0.0
        %865 = vmatprep.subr.mxu0 0.0
        %866 = vmatpush2.msra.mxu0 0.0
        %867 = vmatprep.subr.mxu0 0.0
        %868 = vmatpush2.msra.mxu0 0.0
        %869 = vmatprep.subr.mxu0 0.0
        %870 = vmatpush2.msra.mxu0 0.0
        %871 = vmatprep.subr.mxu0 0.0
        %872 = vmatpush2.msra.mxu0 0.0
        %873 = vmatprep.subr.mxu0 0.0
        %874 = vmatpush2.msra.mxu0 0.0
        %875 = vmatprep.subr.mxu0 0.0
        %876 = vmatpush2.msra.mxu0 0.0
        %877 = vmatprep.subr.mxu0 0.0
        %878 = vmatpush2.msra.mxu0 0.0
        %879 = vmatprep.subr.mxu0 0.0
        %880 = vmatpush2.msra.mxu0 0.0
        %881 = vmatprep.mubr.f32.mxu0 0.0
        %882 = vmatmul.mubr.f32.gmra.mxu0 %v767
        %v883 = vpop.f32.mrf.mxu0
        %v884 = vadd.f32 0.0, %v883
        %v885 = vpop.f32.mrf.mxu0
        %886 = vmatprep.mubr.f32.mxu0 0.0
        %887 = vmatmul.mubr.f32.gmra.mxu0 %v770
        %v888 = vpop.f32.mrf.mxu0
        %v889 = vadd.f32 0.0, %v888
        %v890 = vpop.f32.mrf.mxu0
        %891 = vmatprep.mubr.f32.mxu0 0.0
        %892 = vmatmul.mubr.f32.gmra.mxu0 %v773
        %v893 = vpop.f32.mrf.mxu0
        %v894 = vadd.f32 0.0, %v893
        %v895 = vpop.f32.mrf.mxu0
        %896 = vmatprep.mubr.f32.mxu0 0.0
        %897 = vmatmul.mubr.f32.gmra.mxu0 %v776
        %v898 = vpop.f32.mrf.mxu0
        %v899 = vadd.f32 0.0, %v898
        %v900 = vpop.f32.mrf.mxu0
        %901 = vmatprep.mubr.f32.mxu0 0.0
        %902 = vmatmul.mubr.f32.gmra.mxu0 %v779
        %v903 = vpop.f32.mrf.mxu0
        %v904 = vadd.f32 0.0, %v903
        %v905 = vpop.f32.mrf.mxu0
        %906 = vmatprep.mubr.f32.mxu0 0.0
        %907 = vmatmul.mubr.f32.gmra.mxu0 %v782
        %v908 = vpop.f32.mrf.mxu0
        %v909 = vadd.f32 0.0, %v908
        %v910 = vpop.f32.mrf.mxu0
        %911 = vmatprep.mubr.f32.mxu0 0.0
        %912 = vmatmul.mubr.f32.gmra.mxu0 %v785
        %v913 = vpop.f32.mrf.mxu0
        %v914 = vadd.f32 0.0, %v913
        %v915 = vpop.f32.mrf.mxu0
        %916 = vmatprep.mubr.f32.mxu0 0.0
        %917 = vmatmul.mubr.f32.gmra.mxu0 %v788
        %v918 = vpop.f32.mrf.mxu0
        %v919 = vadd.f32 0.0, %v918
        %v920 = vpop.f32.mrf.mxu0
        %921 = vmatprep.mubr.f32.mxu0 0.0
        %922 = vmatmul.mubr.f32.gmra.mxu0 %v791
        %v923 = vpop.f32.mrf.mxu0
        %v924 = vadd.f32 0.0, %v923
        %v925 = vpop.f32.mrf.mxu0
        %926 = vmatprep.mubr.f32.mxu0 0.0
        %927 = vmatmul.mubr.f32.gmra.mxu0 %v794
        %v928 = vpop.f32.mrf.mxu0
        %v929 = vadd.f32 0.0, %v928
        %v930 = vpop.f32.mrf.mxu0
        %931 = vmatprep.mubr.f32.mxu0 0.0
        %932 = vmatmul.mubr.f32.gmra.mxu0 %v797
        %v933 = vpop.f32.mrf.mxu0
        %v934 = vadd.f32 0.0, %v933
        %v935 = vpop.f32.mrf.mxu0
        %936 = vmatprep.mubr.f32.mxu0 0.0
        %937 = vmatmul.mubr.f32.gmra.mxu0 %v800
        %v938 = vpop.f32.mrf.mxu0
        %v939 = vadd.f32 0.0, %v938
        %v940 = vpop.f32.mrf.mxu0
        %941 = vmatprep.mubr.f32.mxu0 0.0
        %942 = vmatmul.mubr.f32.gmra.mxu0 %v803
        %v943 = vpop.f32.mrf.mxu0
        %v944 = vadd.f32 0.0, %v943
        %v945 = vpop.f32.mrf.mxu0
        %946 = vmatprep.mubr.f32.mxu0 0.0
        %947 = vmatmul.mubr.f32.gmra.mxu0 %v806
        %v948 = vpop.f32.mrf.mxu0
        %v949 = vadd.f32 0.0, %v948
        %v950 = vpop.f32.mrf.mxu0
        %951 = vmatprep.mubr.f32.mxu0 0.0
        %952 = vmatmul.mubr.f32.gmra.mxu0 %v809
        %v953 = vpop.f32.mrf.mxu0
        %v954 = vadd.f32 0.0, %v953
        %v955 = vpop.f32.mrf.mxu0
        %956 = vmatprep.mubr.f32.mxu0 0.0
        %957 = vmatmul.mubr.f32.gmra.mxu0 %v812
        %v958 = vpop.f32.mrf.mxu0
        %v959 = vadd.f32 0.0, %v958
        %v960 = vpop.f32.mrf.mxu0
        %961 = vdwg.mxu0
        %v962 = vmul.f32 %v224, 0.024015676
        %v963 = vmul.f32 %v225, 0.024015676
        %v964 = vmul.f32 %v226, 0.024015676
        %v965 = vmul.f32 %v227, 0.024015676
        %v966 = vmul.f32 %v228, 0.024015676
        %v967 = vmul.f32 %v229, 0.024015676
        %v968 = vmul.f32 %v230, 0.024015676
        %v969 = vmul.f32 %v231, 0.024015676
        %v970 = vmul.f32 %v232, 0.024015676
        %v971 = vmul.f32 %v233, 0.024015676
        %v972 = vmul.f32 %v234, 0.024015676
        %v973 = vmul.f32 %v235, 0.024015676
        %v974 = vmul.f32 %v236, 0.024015676
        %v975 = vmul.f32 %v237, 0.024015676
        %v976 = vmul.f32 %v238, 0.024015676
        %v977 = vmul.f32 %v239, 0.024015676
        %v978 = vmul.f32 %v240, 0.024015676
        %v979 = vmul.f32 %v241, 0.024015676
        %v980 = vmul.f32 %v242, 0.024015676
        %v981 = vmul.f32 %v243, 0.024015676
        %v982 = vmul.f32 %v244, 0.024015676
        %v983 = vmul.f32 %v245, 0.024015676
        %v984 = vmul.f32 %v246, 0.024015676
        %v985 = vmul.f32 %v247, 0.024015676
        %v986 = vmul.f32 %v227, 0.046776153
        %v987 = vmul.f32 %v228, 0.046776153
        %v988 = vmul.f32 %v229, 0.046776153
        %v989 = vmul.f32 %v230, 0.046776153
        %v990 = vmul.f32 %v231, 0.046776153
        %v991 = vmul.f32 %v232, 0.046776153
        %v992 = vmul.f32 %v233, 0.046776153
        %v993 = vmul.f32 %v234, 0.046776153
        %v994 = vmul.f32 %v235, 0.046776153
        %v995 = vmul.f32 %v236, 0.046776153
        %v996 = vmul.f32 %v237, 0.046776153
        %v997 = vmul.f32 %v238, 0.046776153
        %v998 = vmul.f32 %v239, 0.046776153
        %v999 = vmul.f32 %v240, 0.046776153
        %v1000 = vmul.f32 %v241, 0.046776153
        %v1001 = vmul.f32 %v242, 0.046776153
        %v1002 = vmul.f32 %v243, 0.046776153
        %v1003 = vmul.f32 %v244, 0.046776153
        %v1004 = vmul.f32 %v245, 0.046776153
        %v1005 = vmul.f32 %v246, 0.046776153
        %v1006 = vmul.f32 %v247, 0.046776153
        %v1007 = vmul.f32 %v248, 0.046776153
        %v1008 = vmul.f32 %v249, 0.046776153
        %v1009 = vmul.f32 %v250, 0.046776153
        %v1010 = vadd.f32 %v962, %v986
        %v1011 = vadd.f32 %v963, %v987
        %v1012 = vadd.f32 %v964, %v988
        %v1013 = vadd.f32 %v965, %v989
        %v1014 = vadd.f32 %v966, %v990
        %v1015 = vadd.f32 %v967, %v991
        %v1016 = vadd.f32 %v968, %v992
        %v1017 = vadd.f32 %v969, %v993
        %v1018 = vadd.f32 %v970, %v994
        %v1019 = vadd.f32 %v971, %v995
        %v1020 = vadd.f32 %v972, %v996
        %v1021 = vadd.f32 %v973, %v997
        %v1022 = vadd.f32 %v974, %v998
        %v1023 = vadd.f32 %v975, %v999
        %v1024 = vadd.f32 %v976, %v1000
        %v1025 = vadd.f32 %v977, %v1001
        %v1026 = vadd.f32 %v978, %v1002
        %v1027 = vadd.f32 %v979, %v1003
        %v1028 = vadd.f32 %v980, %v1004
        %v1029 = vadd.f32 %v981, %v1005
        %v1030 = vadd.f32 %v982, %v1006
        %v1031 = vadd.f32 %v983, %v1007
        %v1032 = vadd.f32 %v984, %v1008
        %v1033 = vadd.f32 %v985, %v1009
        %v1034 = vmul.f32 %v230, 0.058416344
        %v1035 = vmul.f32 %v231, 0.058416344
        %v1036 = vmul.f32 %v232, 0.058416344
        %v1037 = vmul.f32 %v233, 0.058416344
        %v1038 = vmul.f32 %v234, 0.058416344
        %v1039 = vmul.f32 %v235, 0.058416344
        %v1040 = vmul.f32 %v236, 0.058416344
        %v1041 = vmul.f32 %v237, 0.058416344
        %v1042 = vmul.f32 %v238, 0.058416344
        %v1043 = vmul.f32 %v239, 0.058416344
        %v1044 = vmul.f32 %v240, 0.058416344
        %v1045 = vmul.f32 %v241, 0.058416344
        %v1046 = vmul.f32 %v242, 0.058416344
        %v1047 = vmul.f32 %v243, 0.058416344
        %v1048 = vmul.f32 %v244, 0.058416344
        %v1049 = vmul.f32 %v245, 0.058416344
        %v1050 = vmul.f32 %v246, 0.058416344
        %v1051 = vmul.f32 %v247, 0.058416344
        %v1052 = vmul.f32 %v248, 0.058416344
        %v1053 = vmul.f32 %v249, 0.058416344
        %v1054 = vmul.f32 %v250, 0.058416344
        %v1055 = vmul.f32 %v251, 0.058416344
        %v1056 = vmul.f32 %v252, 0.058416344
        %v1057 = vmul.f32 %v253, 0.058416344
        %v1058 = vadd.f32 %v1010, %v1034
        %v1059 = vadd.f32 %v1011, %v1035
        %v1060 = vadd.f32 %v1012, %v1036
        %v1061 = vadd.f32 %v1013, %v1037
        %v1062 = vadd.f32 %v1014, %v1038
        %v1063 = vadd.f32 %v1015, %v1039
        %v1064 = vadd.f32 %v1016, %v1040
        %v1065 = vadd.f32 %v1017, %v1041
        %v1066 = vadd.f32 %v1018, %v1042
        %v1067 = vadd.f32 %v1019, %v1043
        %v1068 = vadd.f32 %v1020, %v1044
        %v1069 = vadd.f32 %v1021, %v1045
        %v1070 = vadd.f32 %v1022, %v1046
        %v1071 = vadd.f32 %v1023, %v1047
        %v1072 = vadd.f32 %v1024, %v1048
        %v1073 = vadd.f32 %v1025, %v1049
        %v1074 = vadd.f32 %v1026, %v1050
        %v1075 = vadd.f32 %v1027, %v1051
        %v1076 = vadd.f32 %v1028, %v1052
        %v1077 = vadd.f32 %v1029, %v1053
        %v1078 = vadd.f32 %v1030, %v1054
        %v1079 = vadd.f32 %v1031, %v1055
        %v1080 = vadd.f32 %v1032, %v1056
        %v1081 = vadd.f32 %v1033, %v1057
        %v1082 = vmul.f32 %v251, 0.046776153
        %v1083 = vmul.f32 %v252, 0.046776153
        %v1084 = vmul.f32 %v253, 0.046776153
        %v1085 = vmul.f32 %v254, 0.046776153
        %v1086 = vmul.f32 %v255, 0.046776153
        %v1087 = vmul.f32 %v256, 0.046776153
        %v1088 = vadd.f32 %v1058, %v992
        %v1089 = vadd.f32 %v1059, %v993
        %v1090 = vadd.f32 %v1060, %v994
        %v1091 = vadd.f32 %v1061, %v995
        %v1092 = vadd.f32 %v1062, %v996
        %v1093 = vadd.f32 %v1063, %v997
        %v1094 = vadd.f32 %v1064, %v998
        %v1095 = vadd.f32 %v1065, %v999
        %v1096 = vadd.f32 %v1066, %v1000
        %v1097 = vadd.f32 %v1067, %v1001
        %v1098 = vadd.f32 %v1068, %v1002
        %v1099 = vadd.f32 %v1069, %v1003
        %v1100 = vadd.f32 %v1070, %v1004
        %v1101 = vadd.f32 %v1071, %v1005
        %v1102 = vadd.f32 %v1072, %v1006
        %v1103 = vadd.f32 %v1073, %v1007
        %v1104 = vadd.f32 %v1074, %v1008
        %v1105 = vadd.f32 %v1075, %v1009
        %v1106 = vadd.f32 %v1076, %v1082
        %v1107 = vadd.f32 %v1077, %v1083
        %v1108 = vadd.f32 %v1078, %v1084
        %v1109 = vadd.f32 %v1079, %v1085
        %v1110 = vadd.f32 %v1080, %v1086
        %v1111 = vadd.f32 %v1081, %v1087
        %v1112 = vmul.f32 %v248, 0.024015676
        %v1113 = vmul.f32 %v249, 0.024015676
        %v1114 = vmul.f32 %v250, 0.024015676
        %v1115 = vmul.f32 %v251, 0.024015676
        %v1116 = vmul.f32 %v252, 0.024015676
        %v1117 = vmul.f32 %v253, 0.024015676
        %v1118 = vmul.f32 %v254, 0.024015676
        %v1119 = vmul.f32 %v255, 0.024015676
        %v1120 = vmul.f32 %v256, 0.024015676
        %v1121 = vmul.f32 %v257, 0.024015676
        %v1122 = vmul.f32 %v258, 0.024015676
        %v1123 = vmul.f32 %v259, 0.024015676
        %v1124 = vadd.f32 %v1088, %v974
        %v1125 = vadd.f32 %v1089, %v975
        %v1126 = vadd.f32 %v1090, %v976
        %v1127 = vadd.f32 %v1091, %v977
        %v1128 = vadd.f32 %v1092, %v978
        %v1129 = vadd.f32 %v1093, %v979
        %v1130 = vadd.f32 %v1094, %v980
        %v1131 = vadd.f32 %v1095, %v981
        %v1132 = vadd.f32 %v1096, %v982
        %v1133 = vadd.f32 %v1097, %v983
        %v1134 = vadd.f32 %v1098, %v984
        %v1135 = vadd.f32 %v1099, %v985
        %v1136 = vadd.f32 %v1100, %v1112
        %v1137 = vadd.f32 %v1101, %v1113
        %v1138 = vadd.f32 %v1102, %v1114
        %v1139 = vadd.f32 %v1103, %v1115
        %v1140 = vadd.f32 %v1104, %v1116
        %v1141 = vadd.f32 %v1105, %v1117
        %v1142 = vadd.f32 %v1106, %v1118
        %v1143 = vadd.f32 %v1107, %v1119
        %v1144 = vadd.f32 %v1108, %v1120
        %v1145 = vadd.f32 %v1109, %v1121
        %v1146 = vadd.f32 %v1110, %v1122
        %v1147 = vadd.f32 %v1111, %v1123
        %v1172 = vrot.slane %v1124, 1
        %v1173 = vrot.slane %v1125, 1
        %v1174 = vsel %vm473, %v1172, %v1173
        %v1175 = vrot.slane %v1126, 1
        %v1176 = vsel %vm473, %v1173, %v1175
        %v1177 = vrot.slane %v1127, 1
        %v1178 = vrot.slane %v1128, 1
        %v1179 = vsel %vm473, %v1177, %v1178
        %v1180 = vrot.slane %v1129, 1
        %v1181 = vsel %vm473, %v1178, %v1180
        %v1182 = vrot.slane %v1130, 1
        %v1183 = vrot.slane %v1131, 1
        %v1184 = vsel %vm473, %v1182, %v1183
        %v1185 = vrot.slane %v1132, 1
        %v1186 = vsel %vm473, %v1183, %v1185
        %v1187 = vrot.slane %v1133, 1
        %v1188 = vrot.slane %v1134, 1
        %v1189 = vsel %vm473, %v1187, %v1188
        %v1190 = vrot.slane %v1135, 1
        %v1191 = vsel %vm473, %v1188, %v1190
        %v1192 = vrot.slane %v1136, 1
        %v1193 = vrot.slane %v1137, 1
        %v1194 = vsel %vm473, %v1192, %v1193
        %v1195 = vrot.slane %v1138, 1
        %v1196 = vsel %vm473, %v1193, %v1195
        %v1197 = vrot.slane %v1139, 1
        %v1198 = vrot.slane %v1140, 1
        %v1199 = vsel %vm473, %v1197, %v1198
        %v1200 = vrot.slane %v1141, 1
        %v1201 = vsel %vm473, %v1198, %v1200
        %v1202 = vrot.slane %v1142, 1
        %v1203 = vrot.slane %v1143, 1
        %v1204 = vsel %vm473, %v1202, %v1203
        %v1205 = vrot.slane %v1144, 1
        %v1206 = vsel %vm473, %v1203, %v1205
        %v1207 = vrot.slane %v1145, 1
        %v1208 = vrot.slane %v1146, 1
        %v1209 = vsel %vm473, %v1207, %v1208
        %v1210 = vrot.slane %v1147, 1
        %v1211 = vsel %vm473, %v1208, %v1210
        %v1228 = vadd.f32 %v1124, %v1174
        %v1229 = vadd.f32 %v1125, %v1176
        %v1230 = vadd.f32 %v1127, %v1179
        %v1231 = vadd.f32 %v1128, %v1181
        %v1232 = vadd.f32 %v1130, %v1184
        %v1233 = vadd.f32 %v1131, %v1186
        %v1234 = vadd.f32 %v1133, %v1189
        %v1235 = vadd.f32 %v1134, %v1191
        %v1236 = vadd.f32 %v1136, %v1194
        %v1237 = vadd.f32 %v1137, %v1196
        %v1238 = vadd.f32 %v1139, %v1199
        %v1239 = vadd.f32 %v1140, %v1201
        %v1240 = vadd.f32 %v1142, %v1204
        %v1241 = vadd.f32 %v1143, %v1206
        %v1242 = vadd.f32 %v1145, %v1209
        %v1243 = vadd.f32 %v1146, %v1211
        %v1244 = vrot.slane %v1124, 2
        %v1245 = vrot.slane %v1125, 2
        %v1246 = vsel %vm546, %v1244, %v1245
        %v1247 = vrot.slane %v1126, 2
        %v1248 = vsel %vm546, %v1245, %v1247
        %v1249 = vrot.slane %v1127, 2
        %v1250 = vrot.slane %v1128, 2
        %v1251 = vsel %vm546, %v1249, %v1250
        %v1252 = vrot.slane %v1129, 2
        %v1253 = vsel %vm546, %v1250, %v1252
        %v1254 = vrot.slane %v1130, 2
        %v1255 = vrot.slane %v1131, 2
        %v1256 = vsel %vm546, %v1254, %v1255
        %v1257 = vrot.slane %v1132, 2
        %v1258 = vsel %vm546, %v1255, %v1257
        %v1259 = vrot.slane %v1133, 2
        %v1260 = vrot.slane %v1134, 2
        %v1261 = vsel %vm546, %v1259, %v1260
        %v1262 = vrot.slane %v1135, 2
        %v1263 = vsel %vm546, %v1260, %v1262
        %v1264 = vrot.slane %v1136, 2
        %v1265 = vrot.slane %v1137, 2
        %v1266 = vsel %vm546, %v1264, %v1265
        %v1267 = vrot.slane %v1138, 2
        %v1268 = vsel %vm546, %v1265, %v1267
        %v1269 = vrot.slane %v1139, 2
        %v1270 = vrot.slane %v1140, 2
        %v1271 = vsel %vm546, %v1269, %v1270
        %v1272 = vrot.slane %v1141, 2
        %v1273 = vsel %vm546, %v1270, %v1272
        %v1274 = vrot.slane %v1142, 2
        %v1275 = vrot.slane %v1143, 2
        %v1276 = vsel %vm546, %v1274, %v1275
        %v1277 = vrot.slane %v1144, 2
        %v1278 = vsel %vm546, %v1275, %v1277
        %v1279 = vrot.slane %v1145, 2
        %v1280 = vrot.slane %v1146, 2
        %v1281 = vsel %vm546, %v1279, %v1280
        %v1282 = vrot.slane %v1147, 2
        %v1283 = vsel %vm546, %v1280, %v1282
        %v1300 = vadd.f32 %v1228, %v1246
        %v1301 = vadd.f32 %v1229, %v1248
        %v1302 = vadd.f32 %v1230, %v1251
        %v1303 = vadd.f32 %v1231, %v1253
        %v1304 = vadd.f32 %v1232, %v1256
        %v1305 = vadd.f32 %v1233, %v1258
        %v1306 = vadd.f32 %v1234, %v1261
        %v1307 = vadd.f32 %v1235, %v1263
        %v1308 = vadd.f32 %v1236, %v1266
        %v1309 = vadd.f32 %v1237, %v1268
        %v1310 = vadd.f32 %v1238, %v1271
        %v1311 = vadd.f32 %v1239, %v1273
        %v1312 = vadd.f32 %v1240, %v1276
        %v1313 = vadd.f32 %v1241, %v1278
        %v1314 = vadd.f32 %v1242, %v1281
        %v1315 = vadd.f32 %v1243, %v1283
        %v1316 = vrot.slane %v1124, 3
        %v1317 = vrot.slane %v1125, 3
        %v1318 = vsel %vm619, %v1316, %v1317
        %v1319 = vrot.slane %v1126, 3
        %v1320 = vsel %vm619, %v1317, %v1319
        %v1321 = vrot.slane %v1127, 3
        %v1322 = vrot.slane %v1128, 3
        %v1323 = vsel %vm619, %v1321, %v1322
        %v1324 = vrot.slane %v1129, 3
        %v1325 = vsel %vm619, %v1322, %v1324
        %v1326 = vrot.slane %v1130, 3
        %v1327 = vrot.slane %v1131, 3
        %v1328 = vsel %vm619, %v1326, %v1327
        %v1329 = vrot.slane %v1132, 3
        %v1330 = vsel %vm619, %v1327, %v1329
        %v1331 = vrot.slane %v1133, 3
        %v1332 = vrot.slane %v1134, 3
        %v1333 = vsel %vm619, %v1331, %v1332
        %v1334 = vrot.slane %v1135, 3
        %v1335 = vsel %vm619, %v1332, %v1334
        %v1336 = vrot.slane %v1136, 3
        %v1337 = vrot.slane %v1137, 3
        %v1338 = vsel %vm619, %v1336, %v1337
        %v1339 = vrot.slane %v1138, 3
        %v1340 = vsel %vm619, %v1337, %v1339
        %v1341 = vrot.slane %v1139, 3
        %v1342 = vrot.slane %v1140, 3
        %v1343 = vsel %vm619, %v1341, %v1342
        %v1344 = vrot.slane %v1141, 3
        %v1345 = vsel %vm619, %v1342, %v1344
        %v1346 = vrot.slane %v1142, 3
        %v1347 = vrot.slane %v1143, 3
        %v1348 = vsel %vm619, %v1346, %v1347
        %v1349 = vrot.slane %v1144, 3
        %v1350 = vsel %vm619, %v1347, %v1349
        %v1351 = vrot.slane %v1145, 3
        %v1352 = vrot.slane %v1146, 3
        %v1353 = vsel %vm619, %v1351, %v1352
        %v1354 = vrot.slane %v1147, 3
        %v1355 = vsel %vm619, %v1352, %v1354
        %v1372 = vadd.f32 %v1300, %v1318
        %v1373 = vadd.f32 %v1301, %v1320
        %v1374 = vadd.f32 %v1302, %v1323
        %v1375 = vadd.f32 %v1303, %v1325
        %v1376 = vadd.f32 %v1304, %v1328
        %v1377 = vadd.f32 %v1305, %v1330
        %v1378 = vadd.f32 %v1306, %v1333
        %v1379 = vadd.f32 %v1307, %v1335
        %v1380 = vadd.f32 %v1308, %v1338
        %v1381 = vadd.f32 %v1309, %v1340
        %v1382 = vadd.f32 %v1310, %v1343
        %v1383 = vadd.f32 %v1311, %v1345
        %v1384 = vadd.f32 %v1312, %v1348
        %v1385 = vadd.f32 %v1313, %v1350
        %v1386 = vadd.f32 %v1314, %v1353
        %v1387 = vadd.f32 %v1315, %v1355
        %v1388 = vrot.slane %v1124, 4
        %v1389 = vrot.slane %v1125, 4
        %v1390 = vsel %vm692, %v1388, %v1389
        %v1391 = vrot.slane %v1126, 4
        %v1392 = vsel %vm692, %v1389, %v1391
        %v1393 = vrot.slane %v1127, 4
        %v1394 = vrot.slane %v1128, 4
        %v1395 = vsel %vm692, %v1393, %v1394
        %v1396 = vrot.slane %v1129, 4
        %v1397 = vsel %vm692, %v1394, %v1396
        %v1398 = vrot.slane %v1130, 4
        %v1399 = vrot.slane %v1131, 4
        %v1400 = vsel %vm692, %v1398, %v1399
        %v1401 = vrot.slane %v1132, 4
        %v1402 = vsel %vm692, %v1399, %v1401
        %v1403 = vrot.slane %v1133, 4
        %v1404 = vrot.slane %v1134, 4
        %v1405 = vsel %vm692, %v1403, %v1404
        %v1406 = vrot.slane %v1135, 4
        %v1407 = vsel %vm692, %v1404, %v1406
        %v1408 = vrot.slane %v1136, 4
        %v1409 = vrot.slane %v1137, 4
        %v1410 = vsel %vm692, %v1408, %v1409
        %v1411 = vrot.slane %v1138, 4
        %v1412 = vsel %vm692, %v1409, %v1411
        %v1413 = vrot.slane %v1139, 4
        %v1414 = vrot.slane %v1140, 4
        %v1415 = vsel %vm692, %v1413, %v1414
        %v1416 = vrot.slane %v1141, 4
        %v1417 = vsel %vm692, %v1414, %v1416
        %v1418 = vrot.slane %v1142, 4
        %v1419 = vrot.slane %v1143, 4
        %v1420 = vsel %vm692, %v1418, %v1419
        %v1421 = vrot.slane %v1144, 4
        %v1422 = vsel %vm692, %v1419, %v1421
        %v1423 = vrot.slane %v1145, 4
        %v1424 = vrot.slane %v1146, 4
        %v1425 = vsel %vm692, %v1423, %v1424
        %v1426 = vrot.slane %v1147, 4
        %v1427 = vsel %vm692, %v1424, %v1426
        %v1444 = vadd.f32 %v1372, %v1390
        %v1445 = vadd.f32 %v1373, %v1392
        %v1446 = vadd.f32 %v1374, %v1395
        %v1447 = vadd.f32 %v1375, %v1397
        %v1448 = vadd.f32 %v1376, %v1400
        %v1449 = vadd.f32 %v1377, %v1402
        %v1450 = vadd.f32 %v1378, %v1405
        %v1451 = vadd.f32 %v1379, %v1407
        %v1452 = vadd.f32 %v1380, %v1410
        %v1453 = vadd.f32 %v1381, %v1412
        %v1454 = vadd.f32 %v1382, %v1415
        %v1455 = vadd.f32 %v1383, %v1417
        %v1456 = vadd.f32 %v1384, %v1420
        %v1457 = vadd.f32 %v1385, %v1422
        %v1458 = vadd.f32 %v1386, %v1425
        %v1459 = vadd.f32 %v1387, %v1427
        %v1461 = vsel %vm765, %v1444, 0
        %v1464 = vsel %vm765, %v1445, 0
        %v1467 = vsel %vm765, %v1446, 0
        %v1470 = vsel %vm765, %v1447, 0
        %v1473 = vsel %vm765, %v1448, 0
        %v1476 = vsel %vm765, %v1449, 0
        %v1479 = vsel %vm765, %v1450, 0
        %v1482 = vsel %vm765, %v1451, 0
        %v1485 = vsel %vm765, %v1452, 0
        %v1488 = vsel %vm765, %v1453, 0
        %v1491 = vsel %vm765, %v1454, 0
        %v1494 = vsel %vm765, %v1455, 0
        %v1497 = vsel %vm765, %v1456, 0
        %v1500 = vsel %vm765, %v1457, 0
        %v1503 = vsel %vm765, %v1458, 0
        %v1506 = vsel %vm765, %v1459, 0
        %1508 = vmatprep.subr.mxu0 0.0
        %1509 = vmatpush1.msra.mxu0 0.0
        %1510 = vmatprep.subr.mxu0 0.0
        %1511 = vmatpush1.msra.mxu0 0.0
        %1512 = vmatprep.subr.mxu0 0.0
        %1513 = vmatpush1.msra.mxu0 0.0
        %1514 = vmatprep.subr.mxu0 0.0
        %1515 = vmatpush1.msra.mxu0 0.0
        %1516 = vmatprep.subr.mxu0 0.0
        %1517 = vmatpush1.msra.mxu0 0.0
        %1518 = vmatprep.subr.mxu0 0.0
        %1519 = vmatpush1.msra.mxu0 0.0
        %1520 = vmatprep.subr.mxu0 0.0
        %1521 = vmatpush1.msra.mxu0 0.0
        %1522 = vmatprep.subr.mxu0 0.0
        %1523 = vmatpush1.msra.mxu0 0.0
        %1524 = vmatprep.subr.mxu0 0.0
        %1525 = vmatpush1.msra.mxu0 0.0
        %1526 = vmatprep.subr.mxu0 0.0
        %1527 = vmatpush1.msra.mxu0 0.0
        %1528 = vmatprep.subr.mxu0 0.0
        %1529 = vmatpush1.msra.mxu0 0.0
        %1530 = vmatprep.subr.mxu0 0.0
        %1531 = vmatpush1.msra.mxu0 0.0
        %1532 = vmatprep.subr.mxu0 0.0
        %1533 = vmatpush1.msra.mxu0 0.0
        %1534 = vmatprep.subr.mxu0 0.0
        %1535 = vmatpush1.msra.mxu0 %v815
        %1536 = vmatprep.subr.mxu0 0.0
        %1537 = vmatpush1.msra.mxu0 %v261
        %1538 = vmatprep.subr.mxu0 0.0
        %1539 = vmatpush1.msra.mxu0 %v260
        %1540 = vmatprep.subr.mxu0 0.0
        %1541 = vmatpush2.msra.mxu0 0.0
        %1542 = vmatprep.subr.mxu0 0.0
        %1543 = vmatpush2.msra.mxu0 0.0
        %1544 = vmatprep.subr.mxu0 0.0
        %1545 = vmatpush2.msra.mxu0 0.0
        %1546 = vmatprep.subr.mxu0 0.0
        %1547 = vmatpush2.msra.mxu0 0.0
        %1548 = vmatprep.subr.mxu0 0.0
        %1549 = vmatpush2.msra.mxu0 0.0
        %1550 = vmatprep.subr.mxu0 0.0
        %1551 = vmatpush2.msra.mxu0 0.0
        %1552 = vmatprep.subr.mxu0 0.0
        %1553 = vmatpush2.msra.mxu0 0.0
        %1554 = vmatprep.subr.mxu0 0.0
        %1555 = vmatpush2.msra.mxu0 0.0
        %1556 = vmatprep.subr.mxu0 0.0
        %1557 = vmatpush2.msra.mxu0 0.0
        %1558 = vmatprep.subr.mxu0 0.0
        %1559 = vmatpush2.msra.mxu0 0.0
        %1560 = vmatprep.subr.mxu0 0.0
        %1561 = vmatpush2.msra.mxu0 0.0
        %1562 = vmatprep.subr.mxu0 0.0
        %1563 = vmatpush2.msra.mxu0 0.0
        %1564 = vmatprep.subr.mxu0 0.0
        %1565 = vmatpush2.msra.mxu0 0.0
        %1566 = vmatprep.subr.mxu0 0.0
        %1567 = vmatpush2.msra.mxu0 0.0
        %1568 = vmatprep.subr.mxu0 0.0
        %1569 = vmatpush2.msra.mxu0 0.0
        %1570 = vmatprep.subr.mxu0 0.0
        %1571 = vmatpush2.msra.mxu0 0.0
        %1572 = vmatprep.mubr.f32.mxu0 0.0
        %1573 = vmatmul.mubr.f32.gmra.mxu0 %v1461
        %v1574 = vpop.f32.mrf.mxu0
        %v1575 = vadd.f32 0.0, %v1574
        %v1576 = vpop.f32.mrf.mxu0
        %1577 = vmatprep.mubr.f32.mxu0 0.0
        %1578 = vmatmul.mubr.f32.gmra.mxu0 %v1464
        %v1579 = vpop.f32.mrf.mxu0
        %v1580 = vadd.f32 0.0, %v1579
        %v1581 = vpop.f32.mrf.mxu0
        %1582 = vmatprep.mubr.f32.mxu0 0.0
        %1583 = vmatmul.mubr.f32.gmra.mxu0 %v1467
        %v1584 = vpop.f32.mrf.mxu0
        %v1585 = vadd.f32 0.0, %v1584
        %v1586 = vpop.f32.mrf.mxu0
        %1587 = vmatprep.mubr.f32.mxu0 0.0
        %1588 = vmatmul.mubr.f32.gmra.mxu0 %v1470
        %v1589 = vpop.f32.mrf.mxu0
        %v1590 = vadd.f32 0.0, %v1589
        %v1591 = vpop.f32.mrf.mxu0
        %1592 = vmatprep.mubr.f32.mxu0 0.0
        %1593 = vmatmul.mubr.f32.gmra.mxu0 %v1473
        %v1594 = vpop.f32.mrf.mxu0
        %v1595 = vadd.f32 0.0, %v1594
        %v1596 = vpop.f32.mrf.mxu0
        %1597 = vmatprep.mubr.f32.mxu0 0.0
        %1598 = vmatmul.mubr.f32.gmra.mxu0 %v1476
        %v1599 = vpop.f32.mrf.mxu0
        %v1600 = vadd.f32 0.0, %v1599
        %v1601 = vpop.f32.mrf.mxu0
        %1602 = vmatprep.mubr.f32.mxu0 0.0
        %1603 = vmatmul.mubr.f32.gmra.mxu0 %v1479
        %v1604 = vpop.f32.mrf.mxu0
        %v1605 = vadd.f32 0.0, %v1604
        %v1606 = vpop.f32.mrf.mxu0
        %1607 = vmatprep.mubr.f32.mxu0 0.0
        %1608 = vmatmul.mubr.f32.gmra.mxu0 %v1482
        %v1609 = vpop.f32.mrf.mxu0
        %v1610 = vadd.f32 0.0, %v1609
        %v1611 = vpop.f32.mrf.mxu0
        %1612 = vmatprep.mubr.f32.mxu0 0.0
        %1613 = vmatmul.mubr.f32.gmra.mxu0 %v1485
        %v1614 = vpop.f32.mrf.mxu0
        %v1615 = vadd.f32 0.0, %v1614
        %v1616 = vpop.f32.mrf.mxu0
        %1617 = vmatprep.mubr.f32.mxu0 0.0
        %1618 = vmatmul.mubr.f32.gmra.mxu0 %v1488
        %v1619 = vpop.f32.mrf.mxu0
        %v1620 = vadd.f32 0.0, %v1619
        %v1621 = vpop.f32.mrf.mxu0
        %1622 = vmatprep.mubr.f32.mxu0 0.0
        %1623 = vmatmul.mubr.f32.gmra.mxu0 %v1491
        %v1624 = vpop.f32.mrf.mxu0
        %v1625 = vadd.f32 0.0, %v1624
        %v1626 = vpop.f32.mrf.mxu0
        %1627 = vmatprep.mubr.f32.mxu0 0.0
        %1628 = vmatmul.mubr.f32.gmra.mxu0 %v1494
        %v1629 = vpop.f32.mrf.mxu0
        %v1630 = vadd.f32 0.0, %v1629
        %v1631 = vpop.f32.mrf.mxu0
        %1632 = vmatprep.mubr.f32.mxu0 0.0
        %1633 = vmatmul.mubr.f32.gmra.mxu0 %v1497
        %v1634 = vpop.f32.mrf.mxu0
        %v1635 = vadd.f32 0.0, %v1634
        %v1636 = vpop.f32.mrf.mxu0
        %1637 = vmatprep.mubr.f32.mxu0 0.0
        %1638 = vmatmul.mubr.f32.gmra.mxu0 %v1500
        %v1639 = vpop.f32.mrf.mxu0
        %v1640 = vadd.f32 0.0, %v1639
        %v1641 = vpop.f32.mrf.mxu0
        %1642 = vmatprep.mubr.f32.mxu0 0.0
        %1643 = vmatmul.mubr.f32.gmra.mxu0 %v1503
        %v1644 = vpop.f32.mrf.mxu0
        %v1645 = vadd.f32 0.0, %v1644
        %v1646 = vpop.f32.mrf.mxu0
        %1647 = vmatprep.mubr.f32.mxu0 0.0
        %1648 = vmatmul.mubr.f32.gmra.mxu0 %v1506
        %v1649 = vpop.f32.mrf.mxu0
        %v1650 = vadd.f32 0.0, %v1649
        %v1651 = vpop.f32.mrf.mxu0
        %1652 = vdwg.mxu0
        %v1653 = vmul.f32 %v188, %v188
        %v1654 = vmul.f32 %v189, %v189
        %v1655 = vmul.f32 %v190, %v190
        %v1656 = vmul.f32 %v191, %v191
        %v1657 = vmul.f32 %v192, %v192
        %v1658 = vmul.f32 %v193, %v193
        %v1659 = vmul.f32 %v194, %v194
        %v1660 = vmul.f32 %v195, %v195
        %v1661 = vmul.f32 %v196, %v196
        %v1662 = vmul.f32 %v197, %v197
        %v1663 = vmul.f32 %v198, %v198
        %v1664 = vmul.f32 %v199, %v199
        %v1665 = vmul.f32 %v200, %v200
        %v1666 = vmul.f32 %v201, %v201
        %v1667 = vmul.f32 %v202, %v202
        %v1668 = vmul.f32 %v203, %v203
        %v1669 = vmul.f32 %v204, %v204
        %v1670 = vmul.f32 %v205, %v205
        %v1671 = vmul.f32 %v206, %v206
        %v1672 = vmul.f32 %v207, %v207
        %v1673 = vmul.f32 %v208, %v208
        %v1674 = vmul.f32 %v209, %v209
        %v1675 = vmul.f32 %v210, %v210
        %v1676 = vmul.f32 %v211, %v211
        %v1677 = vmul.f32 %v212, %v212
        %v1678 = vmul.f32 %v213, %v213
        %v1679 = vmul.f32 %v214, %v214
        %v1680 = vmul.f32 %v215, %v215
        %v1681 = vmul.f32 %v216, %v216
        %v1682 = vmul.f32 %v217, %v217
        %v1683 = vmul.f32 %v218, %v218
        %v1684 = vmul.f32 %v219, %v219
        %v1685 = vmul.f32 %v220, %v220
        %v1686 = vmul.f32 %v221, %v221
        %v1687 = vmul.f32 %v222, %v222
        %v1688 = vmul.f32 %v223, %v223
        %v1689 = vmul.f32 %v1653, 0.024015676
        %v1690 = vmul.f32 %v1654, 0.024015676
        %v1691 = vmul.f32 %v1655, 0.024015676
        %v1692 = vmul.f32 %v1656, 0.024015676
        %v1693 = vmul.f32 %v1657, 0.024015676
        %v1694 = vmul.f32 %v1658, 0.024015676
        %v1695 = vmul.f32 %v1659, 0.024015676
        %v1696 = vmul.f32 %v1660, 0.024015676
        %v1697 = vmul.f32 %v1661, 0.024015676
        %v1698 = vmul.f32 %v1662, 0.024015676
        %v1699 = vmul.f32 %v1663, 0.024015676
        %v1700 = vmul.f32 %v1664, 0.024015676
        %v1701 = vmul.f32 %v1665, 0.024015676
        %v1702 = vmul.f32 %v1666, 0.024015676
        %v1703 = vmul.f32 %v1667, 0.024015676
        %v1704 = vmul.f32 %v1668, 0.024015676
        %v1705 = vmul.f32 %v1669, 0.024015676
        %v1706 = vmul.f32 %v1670, 0.024015676
        %v1707 = vmul.f32 %v1671, 0.024015676
        %v1708 = vmul.f32 %v1672, 0.024015676
        %v1709 = vmul.f32 %v1673, 0.024015676
        %v1710 = vmul.f32 %v1674, 0.024015676
        %v1711 = vmul.f32 %v1675, 0.024015676
        %v1712 = vmul.f32 %v1676, 0.024015676
        %v1713 = vmul.f32 %v1656, 0.046776153
        %v1714 = vmul.f32 %v1657, 0.046776153
        %v1715 = vmul.f32 %v1658, 0.046776153
        %v1716 = vmul.f32 %v1659, 0.046776153
        %v1717 = vmul.f32 %v1660, 0.046776153
        %v1718 = vmul.f32 %v1661, 0.046776153
        %v1719 = vmul.f32 %v1662, 0.046776153
        %v1720 = vmul.f32 %v1663, 0.046776153
        %v1721 = vmul.f32 %v1664, 0.046776153
        %v1722 = vmul.f32 %v1665, 0.046776153
        %v1723 = vmul.f32 %v1666, 0.046776153
        %v1724 = vmul.f32 %v1667, 0.046776153
        %v1725 = vmul.f32 %v1668, 0.046776153
        %v1726 = vmul.f32 %v1669, 0.046776153
        %v1727 = vmul.f32 %v1670, 0.046776153
        %v1728 = vmul.f32 %v1671, 0.046776153
        %v1729 = vmul.f32 %v1672, 0.046776153
        %v1730 = vmul.f32 %v1673, 0.046776153
        %v1731 = vmul.f32 %v1674, 0.046776153
        %v1732 = vmul.f32 %v1675, 0.046776153
        %v1733 = vmul.f32 %v1676, 0.046776153
        %v1734 = vmul.f32 %v1677, 0.046776153
        %v1735 = vmul.f32 %v1678, 0.046776153
        %v1736 = vmul.f32 %v1679, 0.046776153
        %v1737 = vadd.f32 %v1689, %v1713
        %v1738 = vadd.f32 %v1690, %v1714
        %v1739 = vadd.f32 %v1691, %v1715
        %v1740 = vadd.f32 %v1692, %v1716
        %v1741 = vadd.f32 %v1693, %v1717
        %v1742 = vadd.f32 %v1694, %v1718
        %v1743 = vadd.f32 %v1695, %v1719
        %v1744 = vadd.f32 %v1696, %v1720
        %v1745 = vadd.f32 %v1697, %v1721
        %v1746 = vadd.f32 %v1698, %v1722
        %v1747 = vadd.f32 %v1699, %v1723
        %v1748 = vadd.f32 %v1700, %v1724
        %v1749 = vadd.f32 %v1701, %v1725
        %v1750 = vadd.f32 %v1702, %v1726
        %v1751 = vadd.f32 %v1703, %v1727
        %v1752 = vadd.f32 %v1704, %v1728
        %v1753 = vadd.f32 %v1705, %v1729
        %v1754 = vadd.f32 %v1706, %v1730
        %v1755 = vadd.f32 %v1707, %v1731
        %v1756 = vadd.f32 %v1708, %v1732
        %v1757 = vadd.f32 %v1709, %v1733
        %v1758 = vadd.f32 %v1710, %v1734
        %v1759 = vadd.f32 %v1711, %v1735
        %v1760 = vadd.f32 %v1712, %v1736
        %v1761 = vmul.f32 %v1659, 0.058416344
        %v1762 = vmul.f32 %v1660, 0.058416344
        %v1763 = vmul.f32 %v1661, 0.058416344
        %v1764 = vmul.f32 %v1662, 0.058416344
        %v1765 = vmul.f32 %v1663, 0.058416344
        %v1766 = vmul.f32 %v1664, 0.058416344
        %v1767 = vmul.f32 %v1665, 0.058416344
        %v1768 = vmul.f32 %v1666, 0.058416344
        %v1769 = vmul.f32 %v1667, 0.058416344
        %v1770 = vmul.f32 %v1668, 0.058416344
        %v1771 = vmul.f32 %v1669, 0.058416344
        %v1772 = vmul.f32 %v1670, 0.058416344
        %v1773 = vmul.f32 %v1671, 0.058416344
        %v1774 = vmul.f32 %v1672, 0.058416344
        %v1775 = vmul.f32 %v1673, 0.058416344
        %v1776 = vmul.f32 %v1674, 0.058416344
        %v1777 = vmul.f32 %v1675, 0.058416344
        %v1778 = vmul.f32 %v1676, 0.058416344
        %v1779 = vmul.f32 %v1677, 0.058416344
        %v1780 = vmul.f32 %v1678, 0.058416344
        %v1781 = vmul.f32 %v1679, 0.058416344
        %v1782 = vmul.f32 %v1680, 0.058416344
        %v1783 = vmul.f32 %v1681, 0.058416344
        %v1784 = vmul.f32 %v1682, 0.058416344
        %v1785 = vadd.f32 %v1737, %v1761
        %v1786 = vadd.f32 %v1738, %v1762
        %v1787 = vadd.f32 %v1739, %v1763
        %v1788 = vadd.f32 %v1740, %v1764
        %v1789 = vadd.f32 %v1741, %v1765
        %v1790 = vadd.f32 %v1742, %v1766
        %v1791 = vadd.f32 %v1743, %v1767
        %v1792 = vadd.f32 %v1744, %v1768
        %v1793 = vadd.f32 %v1745, %v1769
        %v1794 = vadd.f32 %v1746, %v1770
        %v1795 = vadd.f32 %v1747, %v1771
        %v1796 = vadd.f32 %v1748, %v1772
        %v1797 = vadd.f32 %v1749, %v1773
        %v1798 = vadd.f32 %v1750, %v1774
        %v1799 = vadd.f32 %v1751, %v1775
        %v1800 = vadd.f32 %v1752, %v1776
        %v1801 = vadd.f32 %v1753, %v1777
        %v1802 = vadd.f32 %v1754, %v1778
        %v1803 = vadd.f32 %v1755, %v1779
        %v1804 = vadd.f32 %v1756, %v1780
        %v1805 = vadd.f32 %v1757, %v1781
        %v1806 = vadd.f32 %v1758, %v1782
        %v1807 = vadd.f32 %v1759, %v1783
        %v1808 = vadd.f32 %v1760, %v1784
        %v1809 = vmul.f32 %v1680, 0.046776153
        %v1810 = vmul.f32 %v1681, 0.046776153
        %v1811 = vmul.f32 %v1682, 0.046776153
        %v1812 = vmul.f32 %v1683, 0.046776153
        %v1813 = vmul.f32 %v1684, 0.046776153
        %v1814 = vmul.f32 %v1685, 0.046776153
        %v1815 = vadd.f32 %v1785, %v1719
        %v1816 = vadd.f32 %v1786, %v1720
        %v1817 = vadd.f32 %v1787, %v1721
        %v1818 = vadd.f32 %v1788, %v1722
        %v1819 = vadd.f32 %v1789, %v1723
        %v1820 = vadd.f32 %v1790, %v1724
        %v1821 = vadd.f32 %v1791, %v1725
        %v1822 = vadd.f32 %v1792, %v1726
        %v1823 = vadd.f32 %v1793, %v1727
        %v1824 = vadd.f32 %v1794, %v1728
        %v1825 = vadd.f32 %v1795, %v1729
        %v1826 = vadd.f32 %v1796, %v1730
        %v1827 = vadd.f32 %v1797, %v1731
        %v1828 = vadd.f32 %v1798, %v1732
        %v1829 = vadd.f32 %v1799, %v1733
        %v1830 = vadd.f32 %v1800, %v1734
        %v1831 = vadd.f32 %v1801, %v1735
        %v1832 = vadd.f32 %v1802, %v1736
        %v1833 = vadd.f32 %v1803, %v1809
        %v1834 = vadd.f32 %v1804, %v1810
        %v1835 = vadd.f32 %v1805, %v1811
        %v1836 = vadd.f32 %v1806, %v1812
        %v1837 = vadd.f32 %v1807, %v1813
        %v1838 = vadd.f32 %v1808, %v1814
        %v1839 = vmul.f32 %v1677, 0.024015676
        %v1840 = vmul.f32 %v1678, 0.024015676
        %v1841 = vmul.f32 %v1679, 0.024015676
        %v1842 = vmul.f32 %v1680, 0.024015676
        %v1843 = vmul.f32 %v1681, 0.024015676
        %v1844 = vmul.f32 %v1682, 0.024015676
        %v1845 = vmul.f32 %v1683, 0.024015676
        %v1846 = vmul.f32 %v1684, 0.024015676
        %v1847 = vmul.f32 %v1685, 0.024015676
        %v1848 = vmul.f32 %v1686, 0.024015676
        %v1849 = vmul.f32 %v1687, 0.024015676
        %v1850 = vmul.f32 %v1688, 0.024015676
        %v1851 = vadd.f32 %v1815, %v1701
        %v1852 = vadd.f32 %v1816, %v1702
        %v1853 = vadd.f32 %v1817, %v1703
        %v1854 = vadd.f32 %v1818, %v1704
        %v1855 = vadd.f32 %v1819, %v1705
        %v1856 = vadd.f32 %v1820, %v1706
        %v1857 = vadd.f32 %v1821, %v1707
        %v1858 = vadd.f32 %v1822, %v1708
        %v1859 = vadd.f32 %v1823, %v1709
        %v1860 = vadd.f32 %v1824, %v1710
        %v1861 = vadd.f32 %v1825, %v1711
        %v1862 = vadd.f32 %v1826, %v1712
        %v1863 = vadd.f32 %v1827, %v1839
        %v1864 = vadd.f32 %v1828, %v1840
        %v1865 = vadd.f32 %v1829, %v1841
        %v1866 = vadd.f32 %v1830, %v1842
        %v1867 = vadd.f32 %v1831, %v1843
        %v1868 = vadd.f32 %v1832, %v1844
        %v1869 = vadd.f32 %v1833, %v1845
        %v1870 = vadd.f32 %v1834, %v1846
        %v1871 = vadd.f32 %v1835, %v1847
        %v1872 = vadd.f32 %v1836, %v1848
        %v1873 = vadd.f32 %v1837, %v1849
        %v1874 = vadd.f32 %v1838, %v1850
        %v1899 = vrot.slane %v1851, 1
        %v1900 = vrot.slane %v1852, 1
        %v1901 = vsel %vm473, %v1899, %v1900
        %v1902 = vrot.slane %v1853, 1
        %v1903 = vsel %vm473, %v1900, %v1902
        %v1904 = vrot.slane %v1854, 1
        %v1905 = vrot.slane %v1855, 1
        %v1906 = vsel %vm473, %v1904, %v1905
        %v1907 = vrot.slane %v1856, 1
        %v1908 = vsel %vm473, %v1905, %v1907
        %v1909 = vrot.slane %v1857, 1
        %v1910 = vrot.slane %v1858, 1
        %v1911 = vsel %vm473, %v1909, %v1910
        %v1912 = vrot.slane %v1859, 1
        %v1913 = vsel %vm473, %v1910, %v1912
        %v1914 = vrot.slane %v1860, 1
        %v1915 = vrot.slane %v1861, 1
        %v1916 = vsel %vm473, %v1914, %v1915
        %v1917 = vrot.slane %v1862, 1
        %v1918 = vsel %vm473, %v1915, %v1917
        %v1919 = vrot.slane %v1863, 1
        %v1920 = vrot.slane %v1864, 1
        %v1921 = vsel %vm473, %v1919, %v1920
        %v1922 = vrot.slane %v1865, 1
        %v1923 = vsel %vm473, %v1920, %v1922
        %v1924 = vrot.slane %v1866, 1
        %v1925 = vrot.slane %v1867, 1
        %v1926 = vsel %vm473, %v1924, %v1925
        %v1927 = vrot.slane %v1868, 1
        %v1928 = vsel %vm473, %v1925, %v1927
        %v1929 = vrot.slane %v1869, 1
        %v1930 = vrot.slane %v1870, 1
        %v1931 = vsel %vm473, %v1929, %v1930
        %v1932 = vrot.slane %v1871, 1
        %v1933 = vsel %vm473, %v1930, %v1932
        %v1934 = vrot.slane %v1872, 1
        %v1935 = vrot.slane %v1873, 1
        %v1936 = vsel %vm473, %v1934, %v1935
        %v1937 = vrot.slane %v1874, 1
        %v1938 = vsel %vm473, %v1935, %v1937
        %v1955 = vadd.f32 %v1851, %v1901
        %v1956 = vadd.f32 %v1852, %v1903
        %v1957 = vadd.f32 %v1854, %v1906
        %v1958 = vadd.f32 %v1855, %v1908
        %v1959 = vadd.f32 %v1857, %v1911
        %v1960 = vadd.f32 %v1858, %v1913
        %v1961 = vadd.f32 %v1860, %v1916
        %v1962 = vadd.f32 %v1861, %v1918
        %v1963 = vadd.f32 %v1863, %v1921
        %v1964 = vadd.f32 %v1864, %v1923
        %v1965 = vadd.f32 %v1866, %v1926
        %v1966 = vadd.f32 %v1867, %v1928
        %v1967 = vadd.f32 %v1869, %v1931
        %v1968 = vadd.f32 %v1870, %v1933
        %v1969 = vadd.f32 %v1872, %v1936
        %v1970 = vadd.f32 %v1873, %v1938
        %v1971 = vrot.slane %v1851, 2
        %v1972 = vrot.slane %v1852, 2
        %v1973 = vsel %vm546, %v1971, %v1972
        %v1974 = vrot.slane %v1853, 2
        %v1975 = vsel %vm546, %v1972, %v1974
        %v1976 = vrot.slane %v1854, 2
        %v1977 = vrot.slane %v1855, 2
        %v1978 = vsel %vm546, %v1976, %v1977
        %v1979 = vrot.slane %v1856, 2
        %v1980 = vsel %vm546, %v1977, %v1979
        %v1981 = vrot.slane %v1857, 2
        %v1982 = vrot.slane %v1858, 2
        %v1983 = vsel %vm546, %v1981, %v1982
        %v1984 = vrot.slane %v1859, 2
        %v1985 = vsel %vm546, %v1982, %v1984
        %v1986 = vrot.slane %v1860, 2
        %v1987 = vrot.slane %v1861, 2
        %v1988 = vsel %vm546, %v1986, %v1987
        %v1989 = vrot.slane %v1862, 2
        %v1990 = vsel %vm546, %v1987, %v1989
        %v1991 = vrot.slane %v1863, 2
        %v1992 = vrot.slane %v1864, 2
        %v1993 = vsel %vm546, %v1991, %v1992
        %v1994 = vrot.slane %v1865, 2
        %v1995 = vsel %vm546, %v1992, %v1994
        %v1996 = vrot.slane %v1866, 2
        %v1997 = vrot.slane %v1867, 2
        %v1998 = vsel %vm546, %v1996, %v1997
        %v1999 = vrot.slane %v1868, 2
        %v2000 = vsel %vm546, %v1997, %v1999
        %v2001 = vrot.slane %v1869, 2
        %v2002 = vrot.slane %v1870, 2
        %v2003 = vsel %vm546, %v2001, %v2002
        %v2004 = vrot.slane %v1871, 2
        %v2005 = vsel %vm546, %v2002, %v2004
        %v2006 = vrot.slane %v1872, 2
        %v2007 = vrot.slane %v1873, 2
        %v2008 = vsel %vm546, %v2006, %v2007
        %v2009 = vrot.slane %v1874, 2
        %v2010 = vsel %vm546, %v2007, %v2009
        %v2027 = vadd.f32 %v1955, %v1973
        %v2028 = vadd.f32 %v1956, %v1975
        %v2029 = vadd.f32 %v1957, %v1978
        %v2030 = vadd.f32 %v1958, %v1980
        %v2031 = vadd.f32 %v1959, %v1983
        %v2032 = vadd.f32 %v1960, %v1985
        %v2033 = vadd.f32 %v1961, %v1988
        %v2034 = vadd.f32 %v1962, %v1990
        %v2035 = vadd.f32 %v1963, %v1993
        %v2036 = vadd.f32 %v1964, %v1995
        %v2037 = vadd.f32 %v1965, %v1998
        %v2038 = vadd.f32 %v1966, %v2000
        %v2039 = vadd.f32 %v1967, %v2003
        %v2040 = vadd.f32 %v1968, %v2005
        %v2041 = vadd.f32 %v1969, %v2008
        %v2042 = vadd.f32 %v1970, %v2010
        %v2043 = vrot.slane %v1851, 3
        %v2044 = vrot.slane %v1852, 3
        %v2045 = vsel %vm619, %v2043, %v2044
        %v2046 = vrot.slane %v1853, 3
        %v2047 = vsel %vm619, %v2044, %v2046
        %v2048 = vrot.slane %v1854, 3
        %v2049 = vrot.slane %v1855, 3
        %v2050 = vsel %vm619, %v2048, %v2049
        %v2051 = vrot.slane %v1856, 3
        %v2052 = vsel %vm619, %v2049, %v2051
        %v2053 = vrot.slane %v1857, 3
        %v2054 = vrot.slane %v1858, 3
        %v2055 = vsel %vm619, %v2053, %v2054
        %v2056 = vrot.slane %v1859, 3
        %v2057 = vsel %vm619, %v2054, %v2056
        %v2058 = vrot.slane %v1860, 3
        %v2059 = vrot.slane %v1861, 3
        %v2060 = vsel %vm619, %v2058, %v2059
        %v2061 = vrot.slane %v1862, 3
        %v2062 = vsel %vm619, %v2059, %v2061
        %v2063 = vrot.slane %v1863, 3
        %v2064 = vrot.slane %v1864, 3
        %v2065 = vsel %vm619, %v2063, %v2064
        %v2066 = vrot.slane %v1865, 3
        %v2067 = vsel %vm619, %v2064, %v2066
        %v2068 = vrot.slane %v1866, 3
        %v2069 = vrot.slane %v1867, 3
        %v2070 = vsel %vm619, %v2068, %v2069
        %v2071 = vrot.slane %v1868, 3
        %v2072 = vsel %vm619, %v2069, %v2071
        %v2073 = vrot.slane %v1869, 3
        %v2074 = vrot.slane %v1870, 3
        %v2075 = vsel %vm619, %v2073, %v2074
        %v2076 = vrot.slane %v1871, 3
        %v2077 = vsel %vm619, %v2074, %v2076
        %v2078 = vrot.slane %v1872, 3
        %v2079 = vrot.slane %v1873, 3
        %v2080 = vsel %vm619, %v2078, %v2079
        %v2081 = vrot.slane %v1874, 3
        %v2082 = vsel %vm619, %v2079, %v2081
        %v2099 = vadd.f32 %v2027, %v2045
        %v2100 = vadd.f32 %v2028, %v2047
        %v2101 = vadd.f32 %v2029, %v2050
        %v2102 = vadd.f32 %v2030, %v2052
        %v2103 = vadd.f32 %v2031, %v2055
        %v2104 = vadd.f32 %v2032, %v2057
        %v2105 = vadd.f32 %v2033, %v2060
        %v2106 = vadd.f32 %v2034, %v2062
        %v2107 = vadd.f32 %v2035, %v2065
        %v2108 = vadd.f32 %v2036, %v2067
        %v2109 = vadd.f32 %v2037, %v2070
        %v2110 = vadd.f32 %v2038, %v2072
        %v2111 = vadd.f32 %v2039, %v2075
        %v2112 = vadd.f32 %v2040, %v2077
        %v2113 = vadd.f32 %v2041, %v2080
        %v2114 = vadd.f32 %v2042, %v2082
        %v2115 = vrot.slane %v1851, 4
        %v2116 = vrot.slane %v1852, 4
        %v2117 = vsel %vm692, %v2115, %v2116
        %v2118 = vrot.slane %v1853, 4
        %v2119 = vsel %vm692, %v2116, %v2118
        %v2120 = vrot.slane %v1854, 4
        %v2121 = vrot.slane %v1855, 4
        %v2122 = vsel %vm692, %v2120, %v2121
        %v2123 = vrot.slane %v1856, 4
        %v2124 = vsel %vm692, %v2121, %v2123
        %v2125 = vrot.slane %v1857, 4
        %v2126 = vrot.slane %v1858, 4
        %v2127 = vsel %vm692, %v2125, %v2126
        %v2128 = vrot.slane %v1859, 4
        %v2129 = vsel %vm692, %v2126, %v2128
        %v2130 = vrot.slane %v1860, 4
        %v2131 = vrot.slane %v1861, 4
        %v2132 = vsel %vm692, %v2130, %v2131
        %v2133 = vrot.slane %v1862, 4
        %v2134 = vsel %vm692, %v2131, %v2133
        %v2135 = vrot.slane %v1863, 4
        %v2136 = vrot.slane %v1864, 4
        %v2137 = vsel %vm692, %v2135, %v2136
        %v2138 = vrot.slane %v1865, 4
        %v2139 = vsel %vm692, %v2136, %v2138
        %v2140 = vrot.slane %v1866, 4
        %v2141 = vrot.slane %v1867, 4
        %v2142 = vsel %vm692, %v2140, %v2141
        %v2143 = vrot.slane %v1868, 4
        %v2144 = vsel %vm692, %v2141, %v2143
        %v2145 = vrot.slane %v1869, 4
        %v2146 = vrot.slane %v1870, 4
        %v2147 = vsel %vm692, %v2145, %v2146
        %v2148 = vrot.slane %v1871, 4
        %v2149 = vsel %vm692, %v2146, %v2148
        %v2150 = vrot.slane %v1872, 4
        %v2151 = vrot.slane %v1873, 4
        %v2152 = vsel %vm692, %v2150, %v2151
        %v2153 = vrot.slane %v1874, 4
        %v2154 = vsel %vm692, %v2151, %v2153
        %v2171 = vadd.f32 %v2099, %v2117
        %v2172 = vadd.f32 %v2100, %v2119
        %v2173 = vadd.f32 %v2101, %v2122
        %v2174 = vadd.f32 %v2102, %v2124
        %v2175 = vadd.f32 %v2103, %v2127
        %v2176 = vadd.f32 %v2104, %v2129
        %v2177 = vadd.f32 %v2105, %v2132
        %v2178 = vadd.f32 %v2106, %v2134
        %v2179 = vadd.f32 %v2107, %v2137
        %v2180 = vadd.f32 %v2108, %v2139
        %v2181 = vadd.f32 %v2109, %v2142
        %v2182 = vadd.f32 %v2110, %v2144
        %v2183 = vadd.f32 %v2111, %v2147
        %v2184 = vadd.f32 %v2112, %v2149
        %v2185 = vadd.f32 %v2113, %v2152
        %v2186 = vadd.f32 %v2114, %v2154
        %v2188 = vsel %vm765, %v2171, 0
        %v2191 = vsel %vm765, %v2172, 0
        %v2194 = vsel %vm765, %v2173, 0
        %v2197 = vsel %vm765, %v2174, 0
        %v2200 = vsel %vm765, %v2175, 0
        %v2203 = vsel %vm765, %v2176, 0
        %v2206 = vsel %vm765, %v2177, 0
        %v2209 = vsel %vm765, %v2178, 0
        %v2212 = vsel %vm765, %v2179, 0
        %v2215 = vsel %vm765, %v2180, 0
        %v2218 = vsel %vm765, %v2181, 0
        %v2221 = vsel %vm765, %v2182, 0
        %v2224 = vsel %vm765, %v2183, 0
        %v2227 = vsel %vm765, %v2184, 0
        %v2230 = vsel %vm765, %v2185, 0
        %v2233 = vsel %vm765, %v2186, 0
        %2235 = vmatprep.subr.mxu0 0.0
        %2236 = vmatpush1.msra.mxu0 0.0
        %2237 = vmatprep.subr.mxu0 0.0
        %2238 = vmatpush1.msra.mxu0 0.0
        %2239 = vmatprep.subr.mxu0 0.0
        %2240 = vmatpush1.msra.mxu0 0.0
        %2241 = vmatprep.subr.mxu0 0.0
        %2242 = vmatpush1.msra.mxu0 0.0
        %2243 = vmatprep.subr.mxu0 0.0
        %2244 = vmatpush1.msra.mxu0 0.0
        %2245 = vmatprep.subr.mxu0 0.0
        %2246 = vmatpush1.msra.mxu0 0.0
        %2247 = vmatprep.subr.mxu0 0.0
        %2248 = vmatpush1.msra.mxu0 0.0
        %2249 = vmatprep.subr.mxu0 0.0
        %2250 = vmatpush1.msra.mxu0 0.0
        %2251 = vmatprep.subr.mxu0 0.0
        %2252 = vmatpush1.msra.mxu0 0.0
        %2253 = vmatprep.subr.mxu0 0.0
        %2254 = vmatpush1.msra.mxu0 0.0
        %2255 = vmatprep.subr.mxu0 0.0
        %2256 = vmatpush1.msra.mxu0 0.0
        %2257 = vmatprep.subr.mxu0 0.0
        %2258 = vmatpush1.msra.mxu0 0.0
        %2259 = vmatprep.subr.mxu0 0.0
        %2260 = vmatpush1.msra.mxu0 0.0
        %2261 = vmatprep.subr.mxu0 0.0
        %2262 = vmatpush1.msra.mxu0 %v815
        %2263 = vmatprep.subr.mxu0 0.0
        %2264 = vmatpush1.msra.mxu0 %v261
        %2265 = vmatprep.subr.mxu0 0.0
        %2266 = vmatpush1.msra.mxu0 %v260
        %2267 = vmatprep.subr.mxu0 0.0
        %2268 = vmatpush2.msra.mxu0 0.0
        %2269 = vmatprep.subr.mxu0 0.0
        %2270 = vmatpush2.msra.mxu0 0.0
        %2271 = vmatprep.subr.mxu0 0.0
        %2272 = vmatpush2.msra.mxu0 0.0
        %2273 = vmatprep.subr.mxu0 0.0
        %2274 = vmatpush2.msra.mxu0 0.0
        %2275 = vmatprep.subr.mxu0 0.0
        %2276 = vmatpush2.msra.mxu0 0.0
        %2277 = vmatprep.subr.mxu0 0.0
        %2278 = vmatpush2.msra.mxu0 0.0
        %2279 = vmatprep.subr.mxu0 0.0
        %2280 = vmatpush2.msra.mxu0 0.0
        %2281 = vmatprep.subr.mxu0 0.0
        %2282 = vmatpush2.msra.mxu0 0.0
        %2283 = vmatprep.subr.mxu0 0.0
        %2284 = vmatpush2.msra.mxu0 0.0
        %2285 = vmatprep.subr.mxu0 0.0
        %2286 = vmatpush2.msra.mxu0 0.0
        %2287 = vmatprep.subr.mxu0 0.0
        %2288 = vmatpush2.msra.mxu0 0.0
        %2289 = vmatprep.subr.mxu0 0.0
        %2290 = vmatpush2.msra.mxu0 0.0
        %2291 = vmatprep.subr.mxu0 0.0
        %2292 = vmatpush2.msra.mxu0 0.0
        %2293 = vmatprep.subr.mxu0 0.0
        %2294 = vmatpush2.msra.mxu0 0.0
        %2295 = vmatprep.subr.mxu0 0.0
        %2296 = vmatpush2.msra.mxu0 0.0
        %2297 = vmatprep.subr.mxu0 0.0
        %2298 = vmatpush2.msra.mxu0 0.0
        %2299 = vmatprep.mubr.f32.mxu0 0.0
        %2300 = vmatmul.mubr.f32.gmra.mxu0 %v2188
        %v2301 = vpop.f32.mrf.mxu0
        %v2302 = vadd.f32 0.0, %v2301
        %v2303 = vpop.f32.mrf.mxu0
        %2304 = vmatprep.mubr.f32.mxu0 0.0
        %2305 = vmatmul.mubr.f32.gmra.mxu0 %v2191
        %v2306 = vpop.f32.mrf.mxu0
        %v2307 = vadd.f32 0.0, %v2306
        %v2308 = vpop.f32.mrf.mxu0
        %2309 = vmatprep.mubr.f32.mxu0 0.0
        %2310 = vmatmul.mubr.f32.gmra.mxu0 %v2194
        %v2311 = vpop.f32.mrf.mxu0
        %v2312 = vadd.f32 0.0, %v2311
        %v2313 = vpop.f32.mrf.mxu0
        %2314 = vmatprep.mubr.f32.mxu0 0.0
        %2315 = vmatmul.mubr.f32.gmra.mxu0 %v2197
        %v2316 = vpop.f32.mrf.mxu0
        %v2317 = vadd.f32 0.0, %v2316
        %v2318 = vpop.f32.mrf.mxu0
        %2319 = vmatprep.mubr.f32.mxu0 0.0
        %2320 = vmatmul.mubr.f32.gmra.mxu0 %v2200
        %v2321 = vpop.f32.mrf.mxu0
        %v2322 = vadd.f32 0.0, %v2321
        %v2323 = vpop.f32.mrf.mxu0
        %2324 = vmatprep.mubr.f32.mxu0 0.0
        %2325 = vmatmul.mubr.f32.gmra.mxu0 %v2203
        %v2326 = vpop.f32.mrf.mxu0
        %v2327 = vadd.f32 0.0, %v2326
        %v2328 = vpop.f32.mrf.mxu0
        %2329 = vmatprep.mubr.f32.mxu0 0.0
        %2330 = vmatmul.mubr.f32.gmra.mxu0 %v2206
        %v2331 = vpop.f32.mrf.mxu0
        %v2332 = vadd.f32 0.0, %v2331
        %v2333 = vpop.f32.mrf.mxu0
        %2334 = vmatprep.mubr.f32.mxu0 0.0
        %2335 = vmatmul.mubr.f32.gmra.mxu0 %v2209
        %v2336 = vpop.f32.mrf.mxu0
        %v2337 = vadd.f32 0.0, %v2336
        %v2338 = vpop.f32.mrf.mxu0
        %2339 = vmatprep.mubr.f32.mxu0 0.0
        %2340 = vmatmul.mubr.f32.gmra.mxu0 %v2212
        %v2341 = vpop.f32.mrf.mxu0
        %v2342 = vadd.f32 0.0, %v2341
        %v2343 = vpop.f32.mrf.mxu0
        %2344 = vmatprep.mubr.f32.mxu0 0.0
        %2345 = vmatmul.mubr.f32.gmra.mxu0 %v2215
        %v2346 = vpop.f32.mrf.mxu0
        %v2347 = vadd.f32 0.0, %v2346
        %v2348 = vpop.f32.mrf.mxu0
        %2349 = vmatprep.mubr.f32.mxu0 0.0
        %2350 = vmatmul.mubr.f32.gmra.mxu0 %v2218
        %v2351 = vpop.f32.mrf.mxu0
        %v2352 = vadd.f32 0.0, %v2351
        %v2353 = vpop.f32.mrf.mxu0
        %2354 = vmatprep.mubr.f32.mxu0 0.0
        %2355 = vmatmul.mubr.f32.gmra.mxu0 %v2221
        %v2356 = vpop.f32.mrf.mxu0
        %v2357 = vadd.f32 0.0, %v2356
        %v2358 = vpop.f32.mrf.mxu0
        %2359 = vmatprep.mubr.f32.mxu0 0.0
        %2360 = vmatmul.mubr.f32.gmra.mxu0 %v2224
        %v2361 = vpop.f32.mrf.mxu0
        %v2362 = vadd.f32 0.0, %v2361
        %v2363 = vpop.f32.mrf.mxu0
        %2364 = vmatprep.mubr.f32.mxu0 0.0
        %2365 = vmatmul.mubr.f32.gmra.mxu0 %v2227
        %v2366 = vpop.f32.mrf.mxu0
        %v2367 = vadd.f32 0.0, %v2366
        %v2368 = vpop.f32.mrf.mxu0
        %2369 = vmatprep.mubr.f32.mxu0 0.0
        %2370 = vmatmul.mubr.f32.gmra.mxu0 %v2230
        %v2371 = vpop.f32.mrf.mxu0
        %v2372 = vadd.f32 0.0, %v2371
        %v2373 = vpop.f32.mrf.mxu0
        %2374 = vmatprep.mubr.f32.mxu0 0.0
        %2375 = vmatmul.mubr.f32.gmra.mxu0 %v2233
        %v2376 = vpop.f32.mrf.mxu0
        %v2377 = vadd.f32 0.0, %v2376
        %v2378 = vpop.f32.mrf.mxu0
        %2379 = vdwg.mxu0
        %v2380 = vmul.f32 %v224, %v224
        %v2381 = vmul.f32 %v225, %v225
        %v2382 = vmul.f32 %v226, %v226
        %v2383 = vmul.f32 %v227, %v227
        %v2384 = vmul.f32 %v228, %v228
        %v2385 = vmul.f32 %v229, %v229
        %v2386 = vmul.f32 %v230, %v230
        %v2387 = vmul.f32 %v231, %v231
        %v2388 = vmul.f32 %v232, %v232
        %v2389 = vmul.f32 %v233, %v233
        %v2390 = vmul.f32 %v234, %v234
        %v2391 = vmul.f32 %v235, %v235
        %v2392 = vmul.f32 %v236, %v236
        %v2393 = vmul.f32 %v237, %v237
        %v2394 = vmul.f32 %v238, %v238
        %v2395 = vmul.f32 %v239, %v239
        %v2396 = vmul.f32 %v240, %v240
        %v2397 = vmul.f32 %v241, %v241
        %v2398 = vmul.f32 %v242, %v242
        %v2399 = vmul.f32 %v243, %v243
        %v2400 = vmul.f32 %v244, %v244
        %v2401 = vmul.f32 %v245, %v245
        %v2402 = vmul.f32 %v246, %v246
        %v2403 = vmul.f32 %v247, %v247
        %v2404 = vmul.f32 %v248, %v248
        %v2405 = vmul.f32 %v249, %v249
        %v2406 = vmul.f32 %v250, %v250
        %v2407 = vmul.f32 %v251, %v251
        %v2408 = vmul.f32 %v252, %v252
        %v2409 = vmul.f32 %v253, %v253
        %v2410 = vmul.f32 %v254, %v254
        %v2411 = vmul.f32 %v255, %v255
        %v2412 = vmul.f32 %v256, %v256
        %v2413 = vmul.f32 %v257, %v257
        %v2414 = vmul.f32 %v258, %v258
        %v2415 = vmul.f32 %v259, %v259
        %v2416 = vmul.f32 %v2380, 0.024015676
        %v2417 = vmul.f32 %v2381, 0.024015676
        %v2418 = vmul.f32 %v2382, 0.024015676
        %v2419 = vmul.f32 %v2383, 0.024015676
        %v2420 = vmul.f32 %v2384, 0.024015676
        %v2421 = vmul.f32 %v2385, 0.024015676
        %v2422 = vmul.f32 %v2386, 0.024015676
        %v2423 = vmul.f32 %v2387, 0.024015676
        %v2424 = vmul.f32 %v2388, 0.024015676
        %v2425 = vmul.f32 %v2389, 0.024015676
        %v2426 = vmul.f32 %v2390, 0.024015676
        %v2427 = vmul.f32 %v2391, 0.024015676
        %v2428 = vmul.f32 %v2392, 0.024015676
        %v2429 = vmul.f32 %v2393, 0.024015676
        %v2430 = vmul.f32 %v2394, 0.024015676
        %v2431 = vmul.f32 %v2395, 0.024015676
        %v2432 = vmul.f32 %v2396, 0.024015676
        %v2433 = vmul.f32 %v2397, 0.024015676
        %v2434 = vmul.f32 %v2398, 0.024015676
        %v2435 = vmul.f32 %v2399, 0.024015676
        %v2436 = vmul.f32 %v2400, 0.024015676
        %v2437 = vmul.f32 %v2401, 0.024015676
        %v2438 = vmul.f32 %v2402, 0.024015676
        %v2439 = vmul.f32 %v2403, 0.024015676
        %v2440 = vmul.f32 %v2383, 0.046776153
        %v2441 = vmul.f32 %v2384, 0.046776153
        %v2442 = vmul.f32 %v2385, 0.046776153
        %v2443 = vmul.f32 %v2386, 0.046776153
        %v2444 = vmul.f32 %v2387, 0.046776153
        %v2445 = vmul.f32 %v2388, 0.046776153
        %v2446 = vmul.f32 %v2389, 0.046776153
        %v2447 = vmul.f32 %v2390, 0.046776153
        %v2448 = vmul.f32 %v2391, 0.046776153
        %v2449 = vmul.f32 %v2392, 0.046776153
        %v2450 = vmul.f32 %v2393, 0.046776153
        %v2451 = vmul.f32 %v2394, 0.046776153
        %v2452 = vmul.f32 %v2395, 0.046776153
        %v2453 = vmul.f32 %v2396, 0.046776153
        %v2454 = vmul.f32 %v2397, 0.046776153
        %v2455 = vmul.f32 %v2398, 0.046776153
        %v2456 = vmul.f32 %v2399, 0.046776153
        %v2457 = vmul.f32 %v2400, 0.046776153
        %v2458 = vmul.f32 %v2401, 0.046776153
        %v2459 = vmul.f32 %v2402, 0.046776153
        %v2460 = vmul.f32 %v2403, 0.046776153
        %v2461 = vmul.f32 %v2404, 0.046776153
        %v2462 = vmul.f32 %v2405, 0.046776153
        %v2463 = vmul.f32 %v2406, 0.046776153
        %v2464 = vadd.f32 %v2416, %v2440
        %v2465 = vadd.f32 %v2417, %v2441
        %v2466 = vadd.f32 %v2418, %v2442
        %v2467 = vadd.f32 %v2419, %v2443
        %v2468 = vadd.f32 %v2420, %v2444
        %v2469 = vadd.f32 %v2421, %v2445
        %v2470 = vadd.f32 %v2422, %v2446
        %v2471 = vadd.f32 %v2423, %v2447
        %v2472 = vadd.f32 %v2424, %v2448
        %v2473 = vadd.f32 %v2425, %v2449
        %v2474 = vadd.f32 %v2426, %v2450
        %v2475 = vadd.f32 %v2427, %v2451
        %v2476 = vadd.f32 %v2428, %v2452
        %v2477 = vadd.f32 %v2429, %v2453
        %v2478 = vadd.f32 %v2430, %v2454
        %v2479 = vadd.f32 %v2431, %v2455
        %v2480 = vadd.f32 %v2432, %v2456
        %v2481 = vadd.f32 %v2433, %v2457
        %v2482 = vadd.f32 %v2434, %v2458
        %v2483 = vadd.f32 %v2435, %v2459
        %v2484 = vadd.f32 %v2436, %v2460
        %v2485 = vadd.f32 %v2437, %v2461
        %v2486 = vadd.f32 %v2438, %v2462
        %v2487 = vadd.f32 %v2439, %v2463
        %v2488 = vmul.f32 %v2386, 0.058416344
        %v2489 = vmul.f32 %v2387, 0.058416344
        %v2490 = vmul.f32 %v2388, 0.058416344
        %v2491 = vmul.f32 %v2389, 0.058416344
        %v2492 = vmul.f32 %v2390, 0.058416344
        %v2493 = vmul.f32 %v2391, 0.058416344
        %v2494 = vmul.f32 %v2392, 0.058416344
        %v2495 = vmul.f32 %v2393, 0.058416344
        %v2496 = vmul.f32 %v2394, 0.058416344
        %v2497 = vmul.f32 %v2395, 0.058416344
        %v2498 = vmul.f32 %v2396, 0.058416344
        %v2499 = vmul.f32 %v2397, 0.058416344
        %v2500 = vmul.f32 %v2398, 0.058416344
        %v2501 = vmul.f32 %v2399, 0.058416344
        %v2502 = vmul.f32 %v2400, 0.058416344
        %v2503 = vmul.f32 %v2401, 0.058416344
        %v2504 = vmul.f32 %v2402, 0.058416344
        %v2505 = vmul.f32 %v2403, 0.058416344
        %v2506 = vmul.f32 %v2404, 0.058416344
        %v2507 = vmul.f32 %v2405, 0.058416344
        %v2508 = vmul.f32 %v2406, 0.058416344
        %v2509 = vmul.f32 %v2407, 0.058416344
        %v2510 = vmul.f32 %v2408, 0.058416344
        %v2511 = vmul.f32 %v2409, 0.058416344
        %v2512 = vadd.f32 %v2464, %v2488
        %v2513 = vadd.f32 %v2465, %v2489
        %v2514 = vadd.f32 %v2466, %v2490
        %v2515 = vadd.f32 %v2467, %v2491
        %v2516 = vadd.f32 %v2468, %v2492
        %v2517 = vadd.f32 %v2469, %v2493
        %v2518 = vadd.f32 %v2470, %v2494
        %v2519 = vadd.f32 %v2471, %v2495
        %v2520 = vadd.f32 %v2472, %v2496
        %v2521 = vadd.f32 %v2473, %v2497
        %v2522 = vadd.f32 %v2474, %v2498
        %v2523 = vadd.f32 %v2475, %v2499
        %v2524 = vadd.f32 %v2476, %v2500
        %v2525 = vadd.f32 %v2477, %v2501
        %v2526 = vadd.f32 %v2478, %v2502
        %v2527 = vadd.f32 %v2479, %v2503
        %v2528 = vadd.f32 %v2480, %v2504
        %v2529 = vadd.f32 %v2481, %v2505
        %v2530 = vadd.f32 %v2482, %v2506
        %v2531 = vadd.f32 %v2483, %v2507
        %v2532 = vadd.f32 %v2484, %v2508
        %v2533 = vadd.f32 %v2485, %v2509
        %v2534 = vadd.f32 %v2486, %v2510
        %v2535 = vadd.f32 %v2487, %v2511
        %v2536 = vmul.f32 %v2407, 0.046776153
        %v2537 = vmul.f32 %v2408, 0.046776153
        %v2538 = vmul.f32 %v2409, 0.046776153
        %v2539 = vmul.f32 %v2410, 0.046776153
        %v2540 = vmul.f32 %v2411, 0.046776153
        %v2541 = vmul.f32 %v2412, 0.046776153
        %v2542 = vadd.f32 %v2512, %v2446
        %v2543 = vadd.f32 %v2513, %v2447
        %v2544 = vadd.f32 %v2514, %v2448
        %v2545 = vadd.f32 %v2515, %v2449
        %v2546 = vadd.f32 %v2516, %v2450
        %v2547 = vadd.f32 %v2517, %v2451
        %v2548 = vadd.f32 %v2518, %v2452
        %v2549 = vadd.f32 %v2519, %v2453
        %v2550 = vadd.f32 %v2520, %v2454
        %v2551 = vadd.f32 %v2521, %v2455
        %v2552 = vadd.f32 %v2522, %v2456
        %v2553 = vadd.f32 %v2523, %v2457
        %v2554 = vadd.f32 %v2524, %v2458
        %v2555 = vadd.f32 %v2525, %v2459
        %v2556 = vadd.f32 %v2526, %v2460
        %v2557 = vadd.f32 %v2527, %v2461
        %v2558 = vadd.f32 %v2528, %v2462
        %v2559 = vadd.f32 %v2529, %v2463
        %v2560 = vadd.f32 %v2530, %v2536
        %v2561 = vadd.f32 %v2531, %v2537
        %v2562 = vadd.f32 %v2532, %v2538
        %v2563 = vadd.f32 %v2533, %v2539
        %v2564 = vadd.f32 %v2534, %v2540
        %v2565 = vadd.f32 %v2535, %v2541
        %v2566 = vmul.f32 %v2404, 0.024015676
        %v2567 = vmul.f32 %v2405, 0.024015676
        %v2568 = vmul.f32 %v2406, 0.024015676
        %v2569 = vmul.f32 %v2407, 0.024015676
        %v2570 = vmul.f32 %v2408, 0.024015676
        %v2571 = vmul.f32 %v2409, 0.024015676
        %v2572 = vmul.f32 %v2410, 0.024015676
        %v2573 = vmul.f32 %v2411, 0.024015676
        %v2574 = vmul.f32 %v2412, 0.024015676
        %v2575 = vmul.f32 %v2413, 0.024015676
        %v2576 = vmul.f32 %v2414, 0.024015676
        %v2577 = vmul.f32 %v2415, 0.024015676
        %v2578 = vadd.f32 %v2542, %v2428
        %v2579 = vadd.f32 %v2543, %v2429
        %v2580 = vadd.f32 %v2544, %v2430
        %v2581 = vadd.f32 %v2545, %v2431
        %v2582 = vadd.f32 %v2546, %v2432
        %v2583 = vadd.f32 %v2547, %v2433
        %v2584 = vadd.f32 %v2548, %v2434
        %v2585 = vadd.f32 %v2549, %v2435
        %v2586 = vadd.f32 %v2550, %v2436
        %v2587 = vadd.f32 %v2551, %v2437
        %v2588 = vadd.f32 %v2552, %v2438
        %v2589 = vadd.f32 %v2553, %v2439
        %v2590 = vadd.f32 %v2554, %v2566
        %v2591 = vadd.f32 %v2555, %v2567
        %v2592 = vadd.f32 %v2556, %v2568
        %v2593 = vadd.f32 %v2557, %v2569
        %v2594 = vadd.f32 %v2558, %v2570
        %v2595 = vadd.f32 %v2559, %v2571
        %v2596 = vadd.f32 %v2560, %v2572
        %v2597 = vadd.f32 %v2561, %v2573
        %v2598 = vadd.f32 %v2562, %v2574
        %v2599 = vadd.f32 %v2563, %v2575
        %v2600 = vadd.f32 %v2564, %v2576
        %v2601 = vadd.f32 %v2565, %v2577
        %v2626 = vrot.slane %v2578, 1
        %v2627 = vrot.slane %v2579, 1
        %v2628 = vsel %vm473, %v2626, %v2627
        %v2629 = vrot.slane %v2580, 1
        %v2630 = vsel %vm473, %v2627, %v2629
        %v2631 = vrot.slane %v2581, 1
        %v2632 = vrot.slane %v2582, 1
        %v2633 = vsel %vm473, %v2631, %v2632
        %v2634 = vrot.slane %v2583, 1
        %v2635 = vsel %vm473, %v2632, %v2634
        %v2636 = vrot.slane %v2584, 1
        %v2637 = vrot.slane %v2585, 1
        %v2638 = vsel %vm473, %v2636, %v2637
        %v2639 = vrot.slane %v2586, 1
        %v2640 = vsel %vm473, %v2637, %v2639
        %v2641 = vrot.slane %v2587, 1
        %v2642 = vrot.slane %v2588, 1
        %v2643 = vsel %vm473, %v2641, %v2642
        %v2644 = vrot.slane %v2589, 1
        %v2645 = vsel %vm473, %v2642, %v2644
        %v2646 = vrot.slane %v2590, 1
        %v2647 = vrot.slane %v2591, 1
        %v2648 = vsel %vm473, %v2646, %v2647
        %v2649 = vrot.slane %v2592, 1
        %v2650 = vsel %vm473, %v2647, %v2649
        %v2651 = vrot.slane %v2593, 1
        %v2652 = vrot.slane %v2594, 1
        %v2653 = vsel %vm473, %v2651, %v2652
        %v2654 = vrot.slane %v2595, 1
        %v2655 = vsel %vm473, %v2652, %v2654
        %v2656 = vrot.slane %v2596, 1
        %v2657 = vrot.slane %v2597, 1
        %v2658 = vsel %vm473, %v2656, %v2657
        %v2659 = vrot.slane %v2598, 1
        %v2660 = vsel %vm473, %v2657, %v2659
        %v2661 = vrot.slane %v2599, 1
        %v2662 = vrot.slane %v2600, 1
        %v2663 = vsel %vm473, %v2661, %v2662
        %v2664 = vrot.slane %v2601, 1
        %v2665 = vsel %vm473, %v2662, %v2664
        %v2682 = vadd.f32 %v2578, %v2628
        %v2683 = vadd.f32 %v2579, %v2630
        %v2684 = vadd.f32 %v2581, %v2633
        %v2685 = vadd.f32 %v2582, %v2635
        %v2686 = vadd.f32 %v2584, %v2638
        %v2687 = vadd.f32 %v2585, %v2640
        %v2688 = vadd.f32 %v2587, %v2643
        %v2689 = vadd.f32 %v2588, %v2645
        %v2690 = vadd.f32 %v2590, %v2648
        %v2691 = vadd.f32 %v2591, %v2650
        %v2692 = vadd.f32 %v2593, %v2653
        %v2693 = vadd.f32 %v2594, %v2655
        %v2694 = vadd.f32 %v2596, %v2658
        %v2695 = vadd.f32 %v2597, %v2660
        %v2696 = vadd.f32 %v2599, %v2663
        %v2697 = vadd.f32 %v2600, %v2665
        %v2698 = vrot.slane %v2578, 2
        %v2699 = vrot.slane %v2579, 2
        %v2700 = vsel %vm546, %v2698, %v2699
        %v2701 = vrot.slane %v2580, 2
        %v2702 = vsel %vm546, %v2699, %v2701
        %v2703 = vrot.slane %v2581, 2
        %v2704 = vrot.slane %v2582, 2
        %v2705 = vsel %vm546, %v2703, %v2704
        %v2706 = vrot.slane %v2583, 2
        %v2707 = vsel %vm546, %v2704, %v2706
        %v2708 = vrot.slane %v2584, 2
        %v2709 = vrot.slane %v2585, 2
        %v2710 = vsel %vm546, %v2708, %v2709
        %v2711 = vrot.slane %v2586, 2
        %v2712 = vsel %vm546, %v2709, %v2711
        %v2713 = vrot.slane %v2587, 2
        %v2714 = vrot.slane %v2588, 2
        %v2715 = vsel %vm546, %v2713, %v2714
        %v2716 = vrot.slane %v2589, 2
        %v2717 = vsel %vm546, %v2714, %v2716
        %v2718 = vrot.slane %v2590, 2
        %v2719 = vrot.slane %v2591, 2
        %v2720 = vsel %vm546, %v2718, %v2719
        %v2721 = vrot.slane %v2592, 2
        %v2722 = vsel %vm546, %v2719, %v2721
        %v2723 = vrot.slane %v2593, 2
        %v2724 = vrot.slane %v2594, 2
        %v2725 = vsel %vm546, %v2723, %v2724
        %v2726 = vrot.slane %v2595, 2
        %v2727 = vsel %vm546, %v2724, %v2726
        %v2728 = vrot.slane %v2596, 2
        %v2729 = vrot.slane %v2597, 2
        %v2730 = vsel %vm546, %v2728, %v2729
        %v2731 = vrot.slane %v2598, 2
        %v2732 = vsel %vm546, %v2729, %v2731
        %v2733 = vrot.slane %v2599, 2
        %v2734 = vrot.slane %v2600, 2
        %v2735 = vsel %vm546, %v2733, %v2734
        %v2736 = vrot.slane %v2601, 2
        %v2737 = vsel %vm546, %v2734, %v2736
        %v2754 = vadd.f32 %v2682, %v2700
        %v2755 = vadd.f32 %v2683, %v2702
        %v2756 = vadd.f32 %v2684, %v2705
        %v2757 = vadd.f32 %v2685, %v2707
        %v2758 = vadd.f32 %v2686, %v2710
        %v2759 = vadd.f32 %v2687, %v2712
        %v2760 = vadd.f32 %v2688, %v2715
        %v2761 = vadd.f32 %v2689, %v2717
        %v2762 = vadd.f32 %v2690, %v2720
        %v2763 = vadd.f32 %v2691, %v2722
        %v2764 = vadd.f32 %v2692, %v2725
        %v2765 = vadd.f32 %v2693, %v2727
        %v2766 = vadd.f32 %v2694, %v2730
        %v2767 = vadd.f32 %v2695, %v2732
        %v2768 = vadd.f32 %v2696, %v2735
        %v2769 = vadd.f32 %v2697, %v2737
        %v2770 = vrot.slane %v2578, 3
        %v2771 = vrot.slane %v2579, 3
        %v2772 = vsel %vm619, %v2770, %v2771
        %v2773 = vrot.slane %v2580, 3
        %v2774 = vsel %vm619, %v2771, %v2773
        %v2775 = vrot.slane %v2581, 3
        %v2776 = vrot.slane %v2582, 3
        %v2777 = vsel %vm619, %v2775, %v2776
        %v2778 = vrot.slane %v2583, 3
        %v2779 = vsel %vm619, %v2776, %v2778
        %v2780 = vrot.slane %v2584, 3
        %v2781 = vrot.slane %v2585, 3
        %v2782 = vsel %vm619, %v2780, %v2781
        %v2783 = vrot.slane %v2586, 3
        %v2784 = vsel %vm619, %v2781, %v2783
        %v2785 = vrot.slane %v2587, 3
        %v2786 = vrot.slane %v2588, 3
        %v2787 = vsel %vm619, %v2785, %v2786
        %v2788 = vrot.slane %v2589, 3
        %v2789 = vsel %vm619, %v2786, %v2788
        %v2790 = vrot.slane %v2590, 3
        %v2791 = vrot.slane %v2591, 3
        %v2792 = vsel %vm619, %v2790, %v2791
        %v2793 = vrot.slane %v2592, 3
        %v2794 = vsel %vm619, %v2791, %v2793
        %v2795 = vrot.slane %v2593, 3
        %v2796 = vrot.slane %v2594, 3
        %v2797 = vsel %vm619, %v2795, %v2796
        %v2798 = vrot.slane %v2595, 3
        %v2799 = vsel %vm619, %v2796, %v2798
        %v2800 = vrot.slane %v2596, 3
        %v2801 = vrot.slane %v2597, 3
        %v2802 = vsel %vm619, %v2800, %v2801
        %v2803 = vrot.slane %v2598, 3
        %v2804 = vsel %vm619, %v2801, %v2803
        %v2805 = vrot.slane %v2599, 3
        %v2806 = vrot.slane %v2600, 3
        %v2807 = vsel %vm619, %v2805, %v2806
        %v2808 = vrot.slane %v2601, 3
        %v2809 = vsel %vm619, %v2806, %v2808
        %v2826 = vadd.f32 %v2754, %v2772
        %v2827 = vadd.f32 %v2755, %v2774
        %v2828 = vadd.f32 %v2756, %v2777
        %v2829 = vadd.f32 %v2757, %v2779
        %v2830 = vadd.f32 %v2758, %v2782
        %v2831 = vadd.f32 %v2759, %v2784
        %v2832 = vadd.f32 %v2760, %v2787
        %v2833 = vadd.f32 %v2761, %v2789
        %v2834 = vadd.f32 %v2762, %v2792
        %v2835 = vadd.f32 %v2763, %v2794
        %v2836 = vadd.f32 %v2764, %v2797
        %v2837 = vadd.f32 %v2765, %v2799
        %v2838 = vadd.f32 %v2766, %v2802
        %v2839 = vadd.f32 %v2767, %v2804
        %v2840 = vadd.f32 %v2768, %v2807
        %v2841 = vadd.f32 %v2769, %v2809
        %v2842 = vrot.slane %v2578, 4
        %v2843 = vrot.slane %v2579, 4
        %v2844 = vsel %vm692, %v2842, %v2843
        %v2845 = vrot.slane %v2580, 4
        %v2846 = vsel %vm692, %v2843, %v2845
        %v2847 = vrot.slane %v2581, 4
        %v2848 = vrot.slane %v2582, 4
        %v2849 = vsel %vm692, %v2847, %v2848
        %v2850 = vrot.slane %v2583, 4
        %v2851 = vsel %vm692, %v2848, %v2850
        %v2852 = vrot.slane %v2584, 4
        %v2853 = vrot.slane %v2585, 4
        %v2854 = vsel %vm692, %v2852, %v2853
        %v2855 = vrot.slane %v2586, 4
        %v2856 = vsel %vm692, %v2853, %v2855
        %v2857 = vrot.slane %v2587, 4
        %v2858 = vrot.slane %v2588, 4
        %v2859 = vsel %vm692, %v2857, %v2858
        %v2860 = vrot.slane %v2589, 4
        %v2861 = vsel %vm692, %v2858, %v2860
        %v2862 = vrot.slane %v2590, 4
        %v2863 = vrot.slane %v2591, 4
        %v2864 = vsel %vm692, %v2862, %v2863
        %v2865 = vrot.slane %v2592, 4
        %v2866 = vsel %vm692, %v2863, %v2865
        %v2867 = vrot.slane %v2593, 4
        %v2868 = vrot.slane %v2594, 4
        %v2869 = vsel %vm692, %v2867, %v2868
        %v2870 = vrot.slane %v2595, 4
        %v2871 = vsel %vm692, %v2868, %v2870
        %v2872 = vrot.slane %v2596, 4
        %v2873 = vrot.slane %v2597, 4
        %v2874 = vsel %vm692, %v2872, %v2873
        %v2875 = vrot.slane %v2598, 4
        %v2876 = vsel %vm692, %v2873, %v2875
        %v2877 = vrot.slane %v2599, 4
        %v2878 = vrot.slane %v2600, 4
        %v2879 = vsel %vm692, %v2877, %v2878
        %v2880 = vrot.slane %v2601, 4
        %v2881 = vsel %vm692, %v2878, %v2880
        %v2898 = vadd.f32 %v2826, %v2844
        %v2899 = vadd.f32 %v2827, %v2846
        %v2900 = vadd.f32 %v2828, %v2849
        %v2901 = vadd.f32 %v2829, %v2851
        %v2902 = vadd.f32 %v2830, %v2854
        %v2903 = vadd.f32 %v2831, %v2856
        %v2904 = vadd.f32 %v2832, %v2859
        %v2905 = vadd.f32 %v2833, %v2861
        %v2906 = vadd.f32 %v2834, %v2864
        %v2907 = vadd.f32 %v2835, %v2866
        %v2908 = vadd.f32 %v2836, %v2869
        %v2909 = vadd.f32 %v2837, %v2871
        %v2910 = vadd.f32 %v2838, %v2874
        %v2911 = vadd.f32 %v2839, %v2876
        %v2912 = vadd.f32 %v2840, %v2879
        %v2913 = vadd.f32 %v2841, %v2881
        %v2915 = vsel %vm765, %v2898, 0
        %v2918 = vsel %vm765, %v2899, 0
        %v2921 = vsel %vm765, %v2900, 0
        %v2924 = vsel %vm765, %v2901, 0
        %v2927 = vsel %vm765, %v2902, 0
        %v2930 = vsel %vm765, %v2903, 0
        %v2933 = vsel %vm765, %v2904, 0
        %v2936 = vsel %vm765, %v2905, 0
        %v2939 = vsel %vm765, %v2906, 0
        %v2942 = vsel %vm765, %v2907, 0
        %v2945 = vsel %vm765, %v2908, 0
        %v2948 = vsel %vm765, %v2909, 0
        %v2951 = vsel %vm765, %v2910, 0
        %v2954 = vsel %vm765, %v2911, 0
        %v2957 = vsel %vm765, %v2912, 0
        %v2960 = vsel %vm765, %v2913, 0
        %2962 = vmatprep.subr.mxu0 0.0
        %2963 = vmatpush1.msra.mxu0 0.0
        %2964 = vmatprep.subr.mxu0 0.0
        %2965 = vmatpush1.msra.mxu0 0.0
        %2966 = vmatprep.subr.mxu0 0.0
        %2967 = vmatpush1.msra.mxu0 0.0
        %2968 = vmatprep.subr.mxu0 0.0
        %2969 = vmatpush1.msra.mxu0 0.0
        %2970 = vmatprep.subr.mxu0 0.0
        %2971 = vmatpush1.msra.mxu0 0.0
        %2972 = vmatprep.subr.mxu0 0.0
        %2973 = vmatpush1.msra.mxu0 0.0
        %2974 = vmatprep.subr.mxu0 0.0
        %2975 = vmatpush1.msra.mxu0 0.0
        %2976 = vmatprep.subr.mxu0 0.0
        %2977 = vmatpush1.msra.mxu0 0.0
        %2978 = vmatprep.subr.mxu0 0.0
        %2979 = vmatpush1.msra.mxu0 0.0
        %2980 = vmatprep.subr.mxu0 0.0
        %2981 = vmatpush1.msra.mxu0 0.0
        %2982 = vmatprep.subr.mxu0 0.0
        %2983 = vmatpush1.msra.mxu0 0.0
        %2984 = vmatprep.subr.mxu0 0.0
        %2985 = vmatpush1.msra.mxu0 0.0
        %2986 = vmatprep.subr.mxu0 0.0
        %2987 = vmatpush1.msra.mxu0 0.0
        %2988 = vmatprep.subr.mxu0 0.0
        %2989 = vmatpush1.msra.mxu0 %v815
        %2990 = vmatprep.subr.mxu0 0.0
        %2991 = vmatpush1.msra.mxu0 %v261
        %2992 = vmatprep.subr.mxu0 0.0
        %2993 = vmatpush1.msra.mxu0 %v260
        %2994 = vmatprep.subr.mxu0 0.0
        %2995 = vmatpush2.msra.mxu0 0.0
        %2996 = vmatprep.subr.mxu0 0.0
        %2997 = vmatpush2.msra.mxu0 0.0
        %2998 = vmatprep.subr.mxu0 0.0
        %2999 = vmatpush2.msra.mxu0 0.0
        %3000 = vmatprep.subr.mxu0 0.0
        %3001 = vmatpush2.msra.mxu0 0.0
        %3002 = vmatprep.subr.mxu0 0.0
        %3003 = vmatpush2.msra.mxu0 0.0
        %3004 = vmatprep.subr.mxu0 0.0
        %3005 = vmatpush2.msra.mxu0 0.0
        %3006 = vmatprep.subr.mxu0 0.0
        %3007 = vmatpush2.msra.mxu0 0.0
        %3008 = vmatprep.subr.mxu0 0.0
        %3009 = vmatpush2.msra.mxu0 0.0
        %3010 = vmatprep.subr.mxu0 0.0
        %3011 = vmatpush2.msra.mxu0 0.0
        %3012 = vmatprep.subr.mxu0 0.0
        %3013 = vmatpush2.msra.mxu0 0.0
        %3014 = vmatprep.subr.mxu0 0.0
        %3015 = vmatpush2.msra.mxu0 0.0
        %3016 = vmatprep.subr.mxu0 0.0
        %3017 = vmatpush2.msra.mxu0 0.0
        %3018 = vmatprep.subr.mxu0 0.0
        %3019 = vmatpush2.msra.mxu0 0.0
        %3020 = vmatprep.subr.mxu0 0.0
        %3021 = vmatpush2.msra.mxu0 0.0
        %3022 = vmatprep.subr.mxu0 0.0
        %3023 = vmatpush2.msra.mxu0 0.0
        %3024 = vmatprep.subr.mxu0 0.0
        %3025 = vmatpush2.msra.mxu0 0.0
        %3026 = vmatprep.mubr.f32.mxu0 0.0
        %3027 = vmatmul.mubr.f32.gmra.mxu0 %v2915
        %v3028 = vpop.f32.mrf.mxu0
        %v3029 = vadd.f32 0.0, %v3028
        %v3030 = vpop.f32.mrf.mxu0
        %3031 = vmatprep.mubr.f32.mxu0 0.0
        %3032 = vmatmul.mubr.f32.gmra.mxu0 %v2918
        %v3033 = vpop.f32.mrf.mxu0
        %v3034 = vadd.f32 0.0, %v3033
        %v3035 = vpop.f32.mrf.mxu0
        %3036 = vmatprep.mubr.f32.mxu0 0.0
        %3037 = vmatmul.mubr.f32.gmra.mxu0 %v2921
        %v3038 = vpop.f32.mrf.mxu0
        %v3039 = vadd.f32 0.0, %v3038
        %v3040 = vpop.f32.mrf.mxu0
        %3041 = vmatprep.mubr.f32.mxu0 0.0
        %3042 = vmatmul.mubr.f32.gmra.mxu0 %v2924
        %v3043 = vpop.f32.mrf.mxu0
        %v3044 = vadd.f32 0.0, %v3043
        %v3045 = vpop.f32.mrf.mxu0
        %3046 = vmatprep.mubr.f32.mxu0 0.0
        %3047 = vmatmul.mubr.f32.gmra.mxu0 %v2927
        %v3048 = vpop.f32.mrf.mxu0
        %v3049 = vadd.f32 0.0, %v3048
        %v3050 = vpop.f32.mrf.mxu0
        %3051 = vmatprep.mubr.f32.mxu0 0.0
        %3052 = vmatmul.mubr.f32.gmra.mxu0 %v2930
        %v3053 = vpop.f32.mrf.mxu0
        %v3054 = vadd.f32 0.0, %v3053
        %v3055 = vpop.f32.mrf.mxu0
        %3056 = vmatprep.mubr.f32.mxu0 0.0
        %3057 = vmatmul.mubr.f32.gmra.mxu0 %v2933
        %v3058 = vpop.f32.mrf.mxu0
        %v3059 = vadd.f32 0.0, %v3058
        %v3060 = vpop.f32.mrf.mxu0
        %3061 = vmatprep.mubr.f32.mxu0 0.0
        %3062 = vmatmul.mubr.f32.gmra.mxu0 %v2936
        %v3063 = vpop.f32.mrf.mxu0
        %v3064 = vadd.f32 0.0, %v3063
        %v3065 = vpop.f32.mrf.mxu0
        %3066 = vmatprep.mubr.f32.mxu0 0.0
        %3067 = vmatmul.mubr.f32.gmra.mxu0 %v2939
        %v3068 = vpop.f32.mrf.mxu0
        %v3069 = vadd.f32 0.0, %v3068
        %v3070 = vpop.f32.mrf.mxu0
        %3071 = vmatprep.mubr.f32.mxu0 0.0
        %3072 = vmatmul.mubr.f32.gmra.mxu0 %v2942
        %v3073 = vpop.f32.mrf.mxu0
        %v3074 = vadd.f32 0.0, %v3073
        %v3075 = vpop.f32.mrf.mxu0
        %3076 = vmatprep.mubr.f32.mxu0 0.0
        %3077 = vmatmul.mubr.f32.gmra.mxu0 %v2945
        %v3078 = vpop.f32.mrf.mxu0
        %v3079 = vadd.f32 0.0, %v3078
        %v3080 = vpop.f32.mrf.mxu0
        %3081 = vmatprep.mubr.f32.mxu0 0.0
        %3082 = vmatmul.mubr.f32.gmra.mxu0 %v2948
        %v3083 = vpop.f32.mrf.mxu0
        %v3084 = vadd.f32 0.0, %v3083
        %v3085 = vpop.f32.mrf.mxu0
        %3086 = vmatprep.mubr.f32.mxu0 0.0
        %3087 = vmatmul.mubr.f32.gmra.mxu0 %v2951
        %v3088 = vpop.f32.mrf.mxu0
        %v3089 = vadd.f32 0.0, %v3088
        %v3090 = vpop.f32.mrf.mxu0
        %3091 = vmatprep.mubr.f32.mxu0 0.0
        %3092 = vmatmul.mubr.f32.gmra.mxu0 %v2954
        %v3093 = vpop.f32.mrf.mxu0
        %v3094 = vadd.f32 0.0, %v3093
        %v3095 = vpop.f32.mrf.mxu0
        %3096 = vmatprep.mubr.f32.mxu0 0.0
        %3097 = vmatmul.mubr.f32.gmra.mxu0 %v2957
        %v3098 = vpop.f32.mrf.mxu0
        %v3099 = vadd.f32 0.0, %v3098
        %v3100 = vpop.f32.mrf.mxu0
        %3101 = vmatprep.mubr.f32.mxu0 0.0
        %3102 = vmatmul.mubr.f32.gmra.mxu0 %v2960
        %v3103 = vpop.f32.mrf.mxu0
        %v3104 = vadd.f32 0.0, %v3103
        %v3105 = vpop.f32.mrf.mxu0
        %3106 = vdwg.mxu0
        %v3107 = vmul.f32 %v188, %v224
        %v3108 = vmul.f32 %v189, %v225
        %v3109 = vmul.f32 %v190, %v226
        %v3110 = vmul.f32 %v191, %v227
        %v3111 = vmul.f32 %v192, %v228
        %v3112 = vmul.f32 %v193, %v229
        %v3113 = vmul.f32 %v194, %v230
        %v3114 = vmul.f32 %v195, %v231
        %v3115 = vmul.f32 %v196, %v232
        %v3116 = vmul.f32 %v197, %v233
        %v3117 = vmul.f32 %v198, %v234
        %v3118 = vmul.f32 %v199, %v235
        %v3119 = vmul.f32 %v200, %v236
        %v3120 = vmul.f32 %v201, %v237
        %v3121 = vmul.f32 %v202, %v238
        %v3122 = vmul.f32 %v203, %v239
        %v3123 = vmul.f32 %v204, %v240
        %v3124 = vmul.f32 %v205, %v241
        %v3125 = vmul.f32 %v206, %v242
        %v3126 = vmul.f32 %v207, %v243
        %v3127 = vmul.f32 %v208, %v244
        %v3128 = vmul.f32 %v209, %v245
        %v3129 = vmul.f32 %v210, %v246
        %v3130 = vmul.f32 %v211, %v247
        %v3131 = vmul.f32 %v212, %v248
        %v3132 = vmul.f32 %v213, %v249
        %v3133 = vmul.f32 %v214, %v250
        %v3134 = vmul.f32 %v215, %v251
        %v3135 = vmul.f32 %v216, %v252
        %v3136 = vmul.f32 %v217, %v253
        %v3137 = vmul.f32 %v218, %v254
        %v3138 = vmul.f32 %v219, %v255
        %v3139 = vmul.f32 %v220, %v256
        %v3140 = vmul.f32 %v221, %v257
        %v3141 = vmul.f32 %v222, %v258
        %v3142 = vmul.f32 %v223, %v259
        %v3143 = vmul.f32 %v3107, 0.024015676
        %v3144 = vmul.f32 %v3108, 0.024015676
        %v3145 = vmul.f32 %v3109, 0.024015676
        %v3146 = vmul.f32 %v3110, 0.024015676
        %v3147 = vmul.f32 %v3111, 0.024015676
        %v3148 = vmul.f32 %v3112, 0.024015676
        %v3149 = vmul.f32 %v3113, 0.024015676
        %v3150 = vmul.f32 %v3114, 0.024015676
        %v3151 = vmul.f32 %v3115, 0.024015676
        %v3152 = vmul.f32 %v3116, 0.024015676
        %v3153 = vmul.f32 %v3117, 0.024015676
        %v3154 = vmul.f32 %v3118, 0.024015676
        %v3155 = vmul.f32 %v3119, 0.024015676
        %v3156 = vmul.f32 %v3120, 0.024015676
        %v3157 = vmul.f32 %v3121, 0.024015676
        %v3158 = vmul.f32 %v3122, 0.024015676
        %v3159 = vmul.f32 %v3123, 0.024015676
        %v3160 = vmul.f32 %v3124, 0.024015676
        %v3161 = vmul.f32 %v3125, 0.024015676
        %v3162 = vmul.f32 %v3126, 0.024015676
        %v3163 = vmul.f32 %v3127, 0.024015676
        %v3164 = vmul.f32 %v3128, 0.024015676
        %v3165 = vmul.f32 %v3129, 0.024015676
        %v3166 = vmul.f32 %v3130, 0.024015676
        %v3167 = vmul.f32 %v3110, 0.046776153
        %v3168 = vmul.f32 %v3111, 0.046776153
        %v3169 = vmul.f32 %v3112, 0.046776153
        %v3170 = vmul.f32 %v3113, 0.046776153
        %v3171 = vmul.f32 %v3114, 0.046776153
        %v3172 = vmul.f32 %v3115, 0.046776153
        %v3173 = vmul.f32 %v3116, 0.046776153
        %v3174 = vmul.f32 %v3117, 0.046776153
        %v3175 = vmul.f32 %v3118, 0.046776153
        %v3176 = vmul.f32 %v3119, 0.046776153
        %v3177 = vmul.f32 %v3120, 0.046776153
        %v3178 = vmul.f32 %v3121, 0.046776153
        %v3179 = vmul.f32 %v3122, 0.046776153
        %v3180 = vmul.f32 %v3123, 0.046776153
        %v3181 = vmul.f32 %v3124, 0.046776153
        %v3182 = vmul.f32 %v3125, 0.046776153
        %v3183 = vmul.f32 %v3126, 0.046776153
        %v3184 = vmul.f32 %v3127, 0.046776153
        %v3185 = vmul.f32 %v3128, 0.046776153
        %v3186 = vmul.f32 %v3129, 0.046776153
        %v3187 = vmul.f32 %v3130, 0.046776153
        %v3188 = vmul.f32 %v3131, 0.046776153
        %v3189 = vmul.f32 %v3132, 0.046776153
        %v3190 = vmul.f32 %v3133, 0.046776153
        %v3191 = vadd.f32 %v3143, %v3167
        %v3192 = vadd.f32 %v3144, %v3168
        %v3193 = vadd.f32 %v3145, %v3169
        %v3194 = vadd.f32 %v3146, %v3170
        %v3195 = vadd.f32 %v3147, %v3171
        %v3196 = vadd.f32 %v3148, %v3172
        %v3197 = vadd.f32 %v3149, %v3173
        %v3198 = vadd.f32 %v3150, %v3174
        %v3199 = vadd.f32 %v3151, %v3175
        %v3200 = vadd.f32 %v3152, %v3176
        %v3201 = vadd.f32 %v3153, %v3177
        %v3202 = vadd.f32 %v3154, %v3178
        %v3203 = vadd.f32 %v3155, %v3179
        %v3204 = vadd.f32 %v3156, %v3180
        %v3205 = vadd.f32 %v3157, %v3181
        %v3206 = vadd.f32 %v3158, %v3182
        %v3207 = vadd.f32 %v3159, %v3183
        %v3208 = vadd.f32 %v3160, %v3184
        %v3209 = vadd.f32 %v3161, %v3185
        %v3210 = vadd.f32 %v3162, %v3186
        %v3211 = vadd.f32 %v3163, %v3187
        %v3212 = vadd.f32 %v3164, %v3188
        %v3213 = vadd.f32 %v3165, %v3189
        %v3214 = vadd.f32 %v3166, %v3190
        %v3215 = vmul.f32 %v3113, 0.058416344
        %v3216 = vmul.f32 %v3114, 0.058416344
        %v3217 = vmul.f32 %v3115, 0.058416344
        %v3218 = vmul.f32 %v3116, 0.058416344
        %v3219 = vmul.f32 %v3117, 0.058416344
        %v3220 = vmul.f32 %v3118, 0.058416344
        %v3221 = vmul.f32 %v3119, 0.058416344
        %v3222 = vmul.f32 %v3120, 0.058416344
        %v3223 = vmul.f32 %v3121, 0.058416344
        %v3224 = vmul.f32 %v3122, 0.058416344
        %v3225 = vmul.f32 %v3123, 0.058416344
        %v3226 = vmul.f32 %v3124, 0.058416344
        %v3227 = vmul.f32 %v3125, 0.058416344
        %v3228 = vmul.f32 %v3126, 0.058416344
        %v3229 = vmul.f32 %v3127, 0.058416344
        %v3230 = vmul.f32 %v3128, 0.058416344
        %v3231 = vmul.f32 %v3129, 0.058416344
        %v3232 = vmul.f32 %v3130, 0.058416344
        %v3233 = vmul.f32 %v3131, 0.058416344
        %v3234 = vmul.f32 %v3132, 0.058416344
        %v3235 = vmul.f32 %v3133, 0.058416344
        %v3236 = vmul.f32 %v3134, 0.058416344
        %v3237 = vmul.f32 %v3135, 0.058416344
        %v3238 = vmul.f32 %v3136, 0.058416344
        %v3239 = vadd.f32 %v3191, %v3215
        %v3240 = vadd.f32 %v3192, %v3216
        %v3241 = vadd.f32 %v3193, %v3217
        %v3242 = vadd.f32 %v3194, %v3218
        %v3243 = vadd.f32 %v3195, %v3219
        %v3244 = vadd.f32 %v3196, %v3220
        %v3245 = vadd.f32 %v3197, %v3221
        %v3246 = vadd.f32 %v3198, %v3222
        %v3247 = vadd.f32 %v3199, %v3223
        %v3248 = vadd.f32 %v3200, %v3224
        %v3249 = vadd.f32 %v3201, %v3225
        %v3250 = vadd.f32 %v3202, %v3226
        %v3251 = vadd.f32 %v3203, %v3227
        %v3252 = vadd.f32 %v3204, %v3228
        %v3253 = vadd.f32 %v3205, %v3229
        %v3254 = vadd.f32 %v3206, %v3230
        %v3255 = vadd.f32 %v3207, %v3231
        %v3256 = vadd.f32 %v3208, %v3232
        %v3257 = vadd.f32 %v3209, %v3233
        %v3258 = vadd.f32 %v3210, %v3234
        %v3259 = vadd.f32 %v3211, %v3235
        %v3260 = vadd.f32 %v3212, %v3236
        %v3261 = vadd.f32 %v3213, %v3237
        %v3262 = vadd.f32 %v3214, %v3238
        %v3263 = vmul.f32 %v3134, 0.046776153
        %v3264 = vmul.f32 %v3135, 0.046776153
        %v3265 = vmul.f32 %v3136, 0.046776153
        %v3266 = vmul.f32 %v3137, 0.046776153
        %v3267 = vmul.f32 %v3138, 0.046776153
        %v3268 = vmul.f32 %v3139, 0.046776153
        %v3269 = vadd.f32 %v3239, %v3173
        %v3270 = vadd.f32 %v3240, %v3174
        %v3271 = vadd.f32 %v3241, %v3175
        %v3272 = vadd.f32 %v3242, %v3176
        %v3273 = vadd.f32 %v3243, %v3177
        %v3274 = vadd.f32 %v3244, %v3178
        %v3275 = vadd.f32 %v3245, %v3179
        %v3276 = vadd.f32 %v3246, %v3180
        %v3277 = vadd.f32 %v3247, %v3181
        %v3278 = vadd.f32 %v3248, %v3182
        %v3279 = vadd.f32 %v3249, %v3183
        %v3280 = vadd.f32 %v3250, %v3184
        %v3281 = vadd.f32 %v3251, %v3185
        %v3282 = vadd.f32 %v3252, %v3186
        %v3283 = vadd.f32 %v3253, %v3187
        %v3284 = vadd.f32 %v3254, %v3188
        %v3285 = vadd.f32 %v3255, %v3189
        %v3286 = vadd.f32 %v3256, %v3190
        %v3287 = vadd.f32 %v3257, %v3263
        %v3288 = vadd.f32 %v3258, %v3264
        %v3289 = vadd.f32 %v3259, %v3265
        %v3290 = vadd.f32 %v3260, %v3266
        %v3291 = vadd.f32 %v3261, %v3267
        %v3292 = vadd.f32 %v3262, %v3268
        %v3293 = vmul.f32 %v3131, 0.024015676
        %v3294 = vmul.f32 %v3132, 0.024015676
        %v3295 = vmul.f32 %v3133, 0.024015676
        %v3296 = vmul.f32 %v3134, 0.024015676
        %v3297 = vmul.f32 %v3135, 0.024015676
        %v3298 = vmul.f32 %v3136, 0.024015676
        %v3299 = vmul.f32 %v3137, 0.024015676
        %v3300 = vmul.f32 %v3138, 0.024015676
        %v3301 = vmul.f32 %v3139, 0.024015676
        %v3302 = vmul.f32 %v3140, 0.024015676
        %v3303 = vmul.f32 %v3141, 0.024015676
        %v3304 = vmul.f32 %v3142, 0.024015676
        %v3305 = vadd.f32 %v3269, %v3155
        %v3306 = vadd.f32 %v3270, %v3156
        %v3307 = vadd.f32 %v3271, %v3157
        %v3308 = vadd.f32 %v3272, %v3158
        %v3309 = vadd.f32 %v3273, %v3159
        %v3310 = vadd.f32 %v3274, %v3160
        %v3311 = vadd.f32 %v3275, %v3161
        %v3312 = vadd.f32 %v3276, %v3162
        %v3313 = vadd.f32 %v3277, %v3163
        %v3314 = vadd.f32 %v3278, %v3164
        %v3315 = vadd.f32 %v3279, %v3165
        %v3316 = vadd.f32 %v3280, %v3166
        %v3317 = vadd.f32 %v3281, %v3293
        %v3318 = vadd.f32 %v3282, %v3294
        %v3319 = vadd.f32 %v3283, %v3295
        %v3320 = vadd.f32 %v3284, %v3296
        %v3321 = vadd.f32 %v3285, %v3297
        %v3322 = vadd.f32 %v3286, %v3298
        %v3323 = vadd.f32 %v3287, %v3299
        %v3324 = vadd.f32 %v3288, %v3300
        %v3325 = vadd.f32 %v3289, %v3301
        %v3326 = vadd.f32 %v3290, %v3302
        %v3327 = vadd.f32 %v3291, %v3303
        %v3328 = vadd.f32 %v3292, %v3304
        %v3353 = vrot.slane %v3305, 1
        %v3354 = vrot.slane %v3306, 1
        %v3355 = vsel %vm473, %v3353, %v3354
        %v3356 = vrot.slane %v3307, 1
        %v3357 = vsel %vm473, %v3354, %v3356
        %v3358 = vrot.slane %v3308, 1
        %v3359 = vrot.slane %v3309, 1
        %v3360 = vsel %vm473, %v3358, %v3359
        %v3361 = vrot.slane %v3310, 1
        %v3362 = vsel %vm473, %v3359, %v3361
        %v3363 = vrot.slane %v3311, 1
        %v3364 = vrot.slane %v3312, 1
        %v3365 = vsel %vm473, %v3363, %v3364
        %v3366 = vrot.slane %v3313, 1
        %v3367 = vsel %vm473, %v3364, %v3366
        %v3368 = vrot.slane %v3314, 1
        %v3369 = vrot.slane %v3315, 1
        %v3370 = vsel %vm473, %v3368, %v3369
        %v3371 = vrot.slane %v3316, 1
        %v3372 = vsel %vm473, %v3369, %v3371
        %v3373 = vrot.slane %v3317, 1
        %v3374 = vrot.slane %v3318, 1
        %v3375 = vsel %vm473, %v3373, %v3374
        %v3376 = vrot.slane %v3319, 1
        %v3377 = vsel %vm473, %v3374, %v3376
        %v3378 = vrot.slane %v3320, 1
        %v3379 = vrot.slane %v3321, 1
        %v3380 = vsel %vm473, %v3378, %v3379
        %v3381 = vrot.slane %v3322, 1
        %v3382 = vsel %vm473, %v3379, %v3381
        %v3383 = vrot.slane %v3323, 1
        %v3384 = vrot.slane %v3324, 1
        %v3385 = vsel %vm473, %v3383, %v3384
        %v3386 = vrot.slane %v3325, 1
        %v3387 = vsel %vm473, %v3384, %v3386
        %v3388 = vrot.slane %v3326, 1
        %v3389 = vrot.slane %v3327, 1
        %v3390 = vsel %vm473, %v3388, %v3389
        %v3391 = vrot.slane %v3328, 1
        %v3392 = vsel %vm473, %v3389, %v3391
        %v3409 = vadd.f32 %v3305, %v3355
        %v3410 = vadd.f32 %v3306, %v3357
        %v3411 = vadd.f32 %v3308, %v3360
        %v3412 = vadd.f32 %v3309, %v3362
        %v3413 = vadd.f32 %v3311, %v3365
        %v3414 = vadd.f32 %v3312, %v3367
        %v3415 = vadd.f32 %v3314, %v3370
        %v3416 = vadd.f32 %v3315, %v3372
        %v3417 = vadd.f32 %v3317, %v3375
        %v3418 = vadd.f32 %v3318, %v3377
        %v3419 = vadd.f32 %v3320, %v3380
        %v3420 = vadd.f32 %v3321, %v3382
        %v3421 = vadd.f32 %v3323, %v3385
        %v3422 = vadd.f32 %v3324, %v3387
        %v3423 = vadd.f32 %v3326, %v3390
        %v3424 = vadd.f32 %v3327, %v3392
        %v3425 = vrot.slane %v3305, 2
        %v3426 = vrot.slane %v3306, 2
        %v3427 = vsel %vm546, %v3425, %v3426
        %v3428 = vrot.slane %v3307, 2
        %v3429 = vsel %vm546, %v3426, %v3428
        %v3430 = vrot.slane %v3308, 2
        %v3431 = vrot.slane %v3309, 2
        %v3432 = vsel %vm546, %v3430, %v3431
        %v3433 = vrot.slane %v3310, 2
        %v3434 = vsel %vm546, %v3431, %v3433
        %v3435 = vrot.slane %v3311, 2
        %v3436 = vrot.slane %v3312, 2
        %v3437 = vsel %vm546, %v3435, %v3436
        %v3438 = vrot.slane %v3313, 2
        %v3439 = vsel %vm546, %v3436, %v3438
        %v3440 = vrot.slane %v3314, 2
        %v3441 = vrot.slane %v3315, 2
        %v3442 = vsel %vm546, %v3440, %v3441
        %v3443 = vrot.slane %v3316, 2
        %v3444 = vsel %vm546, %v3441, %v3443
        %v3445 = vrot.slane %v3317, 2
        %v3446 = vrot.slane %v3318, 2
        %v3447 = vsel %vm546, %v3445, %v3446
        %v3448 = vrot.slane %v3319, 2
        %v3449 = vsel %vm546, %v3446, %v3448
        %v3450 = vrot.slane %v3320, 2
        %v3451 = vrot.slane %v3321, 2
        %v3452 = vsel %vm546, %v3450, %v3451
        %v3453 = vrot.slane %v3322, 2
        %v3454 = vsel %vm546, %v3451, %v3453
        %v3455 = vrot.slane %v3323, 2
        %v3456 = vrot.slane %v3324, 2
        %v3457 = vsel %vm546, %v3455, %v3456
        %v3458 = vrot.slane %v3325, 2
        %v3459 = vsel %vm546, %v3456, %v3458
        %v3460 = vrot.slane %v3326, 2
        %v3461 = vrot.slane %v3327, 2
        %v3462 = vsel %vm546, %v3460, %v3461
        %v3463 = vrot.slane %v3328, 2
        %v3464 = vsel %vm546, %v3461, %v3463
        %v3481 = vadd.f32 %v3409, %v3427
        %v3482 = vadd.f32 %v3410, %v3429
        %v3483 = vadd.f32 %v3411, %v3432
        %v3484 = vadd.f32 %v3412, %v3434
        %v3485 = vadd.f32 %v3413, %v3437
        %v3486 = vadd.f32 %v3414, %v3439
        %v3487 = vadd.f32 %v3415, %v3442
        %v3488 = vadd.f32 %v3416, %v3444
        %v3489 = vadd.f32 %v3417, %v3447
        %v3490 = vadd.f32 %v3418, %v3449
        %v3491 = vadd.f32 %v3419, %v3452
        %v3492 = vadd.f32 %v3420, %v3454
        %v3493 = vadd.f32 %v3421, %v3457
        %v3494 = vadd.f32 %v3422, %v3459
        %v3495 = vadd.f32 %v3423, %v3462
        %v3496 = vadd.f32 %v3424, %v3464
        %v3497 = vrot.slane %v3305, 3
        %v3498 = vrot.slane %v3306, 3
        %v3499 = vsel %vm619, %v3497, %v3498
        %v3500 = vrot.slane %v3307, 3
        %v3501 = vsel %vm619, %v3498, %v3500
        %v3502 = vrot.slane %v3308, 3
        %v3503 = vrot.slane %v3309, 3
        %v3504 = vsel %vm619, %v3502, %v3503
        %v3505 = vrot.slane %v3310, 3
        %v3506 = vsel %vm619, %v3503, %v3505
        %v3507 = vrot.slane %v3311, 3
        %v3508 = vrot.slane %v3312, 3
        %v3509 = vsel %vm619, %v3507, %v3508
        %v3510 = vrot.slane %v3313, 3
        %v3511 = vsel %vm619, %v3508, %v3510
        %v3512 = vrot.slane %v3314, 3
        %v3513 = vrot.slane %v3315, 3
        %v3514 = vsel %vm619, %v3512, %v3513
        %v3515 = vrot.slane %v3316, 3
        %v3516 = vsel %vm619, %v3513, %v3515
        %v3517 = vrot.slane %v3317, 3
        %v3518 = vrot.slane %v3318, 3
        %v3519 = vsel %vm619, %v3517, %v3518
        %v3520 = vrot.slane %v3319, 3
        %v3521 = vsel %vm619, %v3518, %v3520
        %v3522 = vrot.slane %v3320, 3
        %v3523 = vrot.slane %v3321, 3
        %v3524 = vsel %vm619, %v3522, %v3523
        %v3525 = vrot.slane %v3322, 3
        %v3526 = vsel %vm619, %v3523, %v3525
        %v3527 = vrot.slane %v3323, 3
        %v3528 = vrot.slane %v3324, 3
        %v3529 = vsel %vm619, %v3527, %v3528
        %v3530 = vrot.slane %v3325, 3
        %v3531 = vsel %vm619, %v3528, %v3530
        %v3532 = vrot.slane %v3326, 3
        %v3533 = vrot.slane %v3327, 3
        %v3534 = vsel %vm619, %v3532, %v3533
        %v3535 = vrot.slane %v3328, 3
        %v3536 = vsel %vm619, %v3533, %v3535
        %v3553 = vadd.f32 %v3481, %v3499
        %v3554 = vadd.f32 %v3482, %v3501
        %v3555 = vadd.f32 %v3483, %v3504
        %v3556 = vadd.f32 %v3484, %v3506
        %v3557 = vadd.f32 %v3485, %v3509
        %v3558 = vadd.f32 %v3486, %v3511
        %v3559 = vadd.f32 %v3487, %v3514
        %v3560 = vadd.f32 %v3488, %v3516
        %v3561 = vadd.f32 %v3489, %v3519
        %v3562 = vadd.f32 %v3490, %v3521
        %v3563 = vadd.f32 %v3491, %v3524
        %v3564 = vadd.f32 %v3492, %v3526
        %v3565 = vadd.f32 %v3493, %v3529
        %v3566 = vadd.f32 %v3494, %v3531
        %v3567 = vadd.f32 %v3495, %v3534
        %v3568 = vadd.f32 %v3496, %v3536
        %v3569 = vrot.slane %v3305, 4
        %v3570 = vrot.slane %v3306, 4
        %v3571 = vsel %vm692, %v3569, %v3570
        %v3572 = vrot.slane %v3307, 4
        %v3573 = vsel %vm692, %v3570, %v3572
        %v3574 = vrot.slane %v3308, 4
        %v3575 = vrot.slane %v3309, 4
        %v3576 = vsel %vm692, %v3574, %v3575
        %v3577 = vrot.slane %v3310, 4
        %v3578 = vsel %vm692, %v3575, %v3577
        %v3579 = vrot.slane %v3311, 4
        %v3580 = vrot.slane %v3312, 4
        %v3581 = vsel %vm692, %v3579, %v3580
        %v3582 = vrot.slane %v3313, 4
        %v3583 = vsel %vm692, %v3580, %v3582
        %v3584 = vrot.slane %v3314, 4
        %v3585 = vrot.slane %v3315, 4
        %v3586 = vsel %vm692, %v3584, %v3585
        %v3587 = vrot.slane %v3316, 4
        %v3588 = vsel %vm692, %v3585, %v3587
        %v3589 = vrot.slane %v3317, 4
        %v3590 = vrot.slane %v3318, 4
        %v3591 = vsel %vm692, %v3589, %v3590
        %v3592 = vrot.slane %v3319, 4
        %v3593 = vsel %vm692, %v3590, %v3592
        %v3594 = vrot.slane %v3320, 4
        %v3595 = vrot.slane %v3321, 4
        %v3596 = vsel %vm692, %v3594, %v3595
        %v3597 = vrot.slane %v3322, 4
        %v3598 = vsel %vm692, %v3595, %v3597
        %v3599 = vrot.slane %v3323, 4
        %v3600 = vrot.slane %v3324, 4
        %v3601 = vsel %vm692, %v3599, %v3600
        %v3602 = vrot.slane %v3325, 4
        %v3603 = vsel %vm692, %v3600, %v3602
        %v3604 = vrot.slane %v3326, 4
        %v3605 = vrot.slane %v3327, 4
        %v3606 = vsel %vm692, %v3604, %v3605
        %v3607 = vrot.slane %v3328, 4
        %v3608 = vsel %vm692, %v3605, %v3607
        %v3625 = vadd.f32 %v3553, %v3571
        %v3626 = vadd.f32 %v3554, %v3573
        %v3627 = vadd.f32 %v3555, %v3576
        %v3628 = vadd.f32 %v3556, %v3578
        %v3629 = vadd.f32 %v3557, %v3581
        %v3630 = vadd.f32 %v3558, %v3583
        %v3631 = vadd.f32 %v3559, %v3586
        %v3632 = vadd.f32 %v3560, %v3588
        %v3633 = vadd.f32 %v3561, %v3591
        %v3634 = vadd.f32 %v3562, %v3593
        %v3635 = vadd.f32 %v3563, %v3596
        %v3636 = vadd.f32 %v3564, %v3598
        %v3637 = vadd.f32 %v3565, %v3601
        %v3638 = vadd.f32 %v3566, %v3603
        %v3639 = vadd.f32 %v3567, %v3606
        %v3640 = vadd.f32 %v3568, %v3608
        %v3642 = vsel %vm765, %v3625, 0
        %v3645 = vsel %vm765, %v3626, 0
        %v3648 = vsel %vm765, %v3627, 0
        %v3651 = vsel %vm765, %v3628, 0
        %v3654 = vsel %vm765, %v3629, 0
        %v3657 = vsel %vm765, %v3630, 0
        %v3660 = vsel %vm765, %v3631, 0
        %v3663 = vsel %vm765, %v3632, 0
        %v3666 = vsel %vm765, %v3633, 0
        %v3669 = vsel %vm765, %v3634, 0
        %v3672 = vsel %vm765, %v3635, 0
        %v3675 = vsel %vm765, %v3636, 0
        %v3678 = vsel %vm765, %v3637, 0
        %v3681 = vsel %vm765, %v3638, 0
        %v3684 = vsel %vm765, %v3639, 0
        %v3687 = vsel %vm765, %v3640, 0
        %3689 = vmatprep.subr.mxu0 0.0
        %3690 = vmatpush1.msra.mxu0 0.0
        %3691 = vmatprep.subr.mxu0 0.0
        %3692 = vmatpush1.msra.mxu0 0.0
        %3693 = vmatprep.subr.mxu0 0.0
        %3694 = vmatpush1.msra.mxu0 0.0
        %3695 = vmatprep.subr.mxu0 0.0
        %3696 = vmatpush1.msra.mxu0 0.0
        %3697 = vmatprep.subr.mxu0 0.0
        %3698 = vmatpush1.msra.mxu0 0.0
        %3699 = vmatprep.subr.mxu0 0.0
        %3700 = vmatpush1.msra.mxu0 0.0
        %3701 = vmatprep.subr.mxu0 0.0
        %3702 = vmatpush1.msra.mxu0 0.0
        %3703 = vmatprep.subr.mxu0 0.0
        %3704 = vmatpush1.msra.mxu0 0.0
        %3705 = vmatprep.subr.mxu0 0.0
        %3706 = vmatpush1.msra.mxu0 0.0
        %3707 = vmatprep.subr.mxu0 0.0
        %3708 = vmatpush1.msra.mxu0 0.0
        %3709 = vmatprep.subr.mxu0 0.0
        %3710 = vmatpush1.msra.mxu0 0.0
        %3711 = vmatprep.subr.mxu0 0.0
        %3712 = vmatpush1.msra.mxu0 0.0
        %3713 = vmatprep.subr.mxu0 0.0
        %3714 = vmatpush1.msra.mxu0 0.0
        %3715 = vmatprep.subr.mxu0 0.0
        %3716 = vmatpush1.msra.mxu0 %v815
        %3717 = vmatprep.subr.mxu0 0.0
        %3718 = vmatpush1.msra.mxu0 %v261
        %3719 = vmatprep.subr.mxu0 0.0
        %3720 = vmatpush1.msra.mxu0 %v260
        %3721 = vmatprep.subr.mxu0 0.0
        %3722 = vmatpush2.msra.mxu0 0.0
        %3723 = vmatprep.subr.mxu0 0.0
        %3724 = vmatpush2.msra.mxu0 0.0
        %3725 = vmatprep.subr.mxu0 0.0
        %3726 = vmatpush2.msra.mxu0 0.0
        %3727 = vmatprep.subr.mxu0 0.0
        %3728 = vmatpush2.msra.mxu0 0.0
        %3729 = vmatprep.subr.mxu0 0.0
        %3730 = vmatpush2.msra.mxu0 0.0
        %3731 = vmatprep.subr.mxu0 0.0
        %3732 = vmatpush2.msra.mxu0 0.0
        %3733 = vmatprep.subr.mxu0 0.0
        %3734 = vmatpush2.msra.mxu0 0.0
        %3735 = vmatprep.subr.mxu0 0.0
        %3736 = vmatpush2.msra.mxu0 0.0
        %3737 = vmatprep.subr.mxu0 0.0
        %3738 = vmatpush2.msra.mxu0 0.0
        %3739 = vmatprep.subr.mxu0 0.0
        %3740 = vmatpush2.msra.mxu0 0.0
        %3741 = vmatprep.subr.mxu0 0.0
        %3742 = vmatpush2.msra.mxu0 0.0
        %3743 = vmatprep.subr.mxu0 0.0
        %3744 = vmatpush2.msra.mxu0 0.0
        %3745 = vmatprep.subr.mxu0 0.0
        %3746 = vmatpush2.msra.mxu0 0.0
        %3747 = vmatprep.subr.mxu0 0.0
        %3748 = vmatpush2.msra.mxu0 0.0
        %3749 = vmatprep.subr.mxu0 0.0
        %3750 = vmatpush2.msra.mxu0 0.0
        %3751 = vmatprep.subr.mxu0 0.0
        %3752 = vmatpush2.msra.mxu0 0.0
        %3753 = vmatprep.mubr.f32.mxu0 0.0
        %3754 = vmatmul.mubr.f32.gmra.mxu0 %v3642
        %v3755 = vpop.f32.mrf.mxu0
        %v3756 = vadd.f32 0.0, %v3755
        %v3757 = vpop.f32.mrf.mxu0
        %3758 = vmatprep.mubr.f32.mxu0 0.0
        %3759 = vmatmul.mubr.f32.gmra.mxu0 %v3645
        %v3760 = vpop.f32.mrf.mxu0
        %v3761 = vadd.f32 0.0, %v3760
        %v3762 = vpop.f32.mrf.mxu0
        %3763 = vmatprep.mubr.f32.mxu0 0.0
        %3764 = vmatmul.mubr.f32.gmra.mxu0 %v3648
        %v3765 = vpop.f32.mrf.mxu0
        %v3766 = vadd.f32 0.0, %v3765
        %v3767 = vpop.f32.mrf.mxu0
        %3768 = vmatprep.mubr.f32.mxu0 0.0
        %3769 = vmatmul.mubr.f32.gmra.mxu0 %v3651
        %v3770 = vpop.f32.mrf.mxu0
        %v3771 = vadd.f32 0.0, %v3770
        %v3772 = vpop.f32.mrf.mxu0
        %3773 = vmatprep.mubr.f32.mxu0 0.0
        %3774 = vmatmul.mubr.f32.gmra.mxu0 %v3654
        %v3775 = vpop.f32.mrf.mxu0
        %v3776 = vadd.f32 0.0, %v3775
        %v3777 = vpop.f32.mrf.mxu0
        %3778 = vmatprep.mubr.f32.mxu0 0.0
        %3779 = vmatmul.mubr.f32.gmra.mxu0 %v3657
        %v3780 = vpop.f32.mrf.mxu0
        %v3781 = vadd.f32 0.0, %v3780
        %v3782 = vpop.f32.mrf.mxu0
        %3783 = vmatprep.mubr.f32.mxu0 0.0
        %3784 = vmatmul.mubr.f32.gmra.mxu0 %v3660
        %v3785 = vpop.f32.mrf.mxu0
        %v3786 = vadd.f32 0.0, %v3785
        %v3787 = vpop.f32.mrf.mxu0
        %3788 = vmatprep.mubr.f32.mxu0 0.0
        %3789 = vmatmul.mubr.f32.gmra.mxu0 %v3663
        %v3790 = vpop.f32.mrf.mxu0
        %v3791 = vadd.f32 0.0, %v3790
        %v3792 = vpop.f32.mrf.mxu0
        %3793 = vmatprep.mubr.f32.mxu0 0.0
        %3794 = vmatmul.mubr.f32.gmra.mxu0 %v3666
        %v3795 = vpop.f32.mrf.mxu0
        %v3796 = vadd.f32 0.0, %v3795
        %v3797 = vpop.f32.mrf.mxu0
        %3798 = vmatprep.mubr.f32.mxu0 0.0
        %3799 = vmatmul.mubr.f32.gmra.mxu0 %v3669
        %v3800 = vpop.f32.mrf.mxu0
        %v3801 = vadd.f32 0.0, %v3800
        %v3802 = vpop.f32.mrf.mxu0
        %3803 = vmatprep.mubr.f32.mxu0 0.0
        %3804 = vmatmul.mubr.f32.gmra.mxu0 %v3672
        %v3805 = vpop.f32.mrf.mxu0
        %v3806 = vadd.f32 0.0, %v3805
        %v3807 = vpop.f32.mrf.mxu0
        %3808 = vmatprep.mubr.f32.mxu0 0.0
        %3809 = vmatmul.mubr.f32.gmra.mxu0 %v3675
        %v3810 = vpop.f32.mrf.mxu0
        %v3811 = vadd.f32 0.0, %v3810
        %v3812 = vpop.f32.mrf.mxu0
        %3813 = vmatprep.mubr.f32.mxu0 0.0
        %3814 = vmatmul.mubr.f32.gmra.mxu0 %v3678
        %v3815 = vpop.f32.mrf.mxu0
        %v3816 = vadd.f32 0.0, %v3815
        %v3817 = vpop.f32.mrf.mxu0
        %3818 = vmatprep.mubr.f32.mxu0 0.0
        %3819 = vmatmul.mubr.f32.gmra.mxu0 %v3681
        %v3820 = vpop.f32.mrf.mxu0
        %v3821 = vadd.f32 0.0, %v3820
        %v3822 = vpop.f32.mrf.mxu0
        %3823 = vmatprep.mubr.f32.mxu0 0.0
        %3824 = vmatmul.mubr.f32.gmra.mxu0 %v3684
        %v3825 = vpop.f32.mrf.mxu0
        %v3826 = vadd.f32 0.0, %v3825
        %v3827 = vpop.f32.mrf.mxu0
        %3828 = vmatprep.mubr.f32.mxu0 0.0
        %3829 = vmatmul.mubr.f32.gmra.mxu0 %v3687
        %v3830 = vpop.f32.mrf.mxu0
        %v3831 = vadd.f32 0.0, %v3830
        %v3832 = vpop.f32.mrf.mxu0
        %3833 = vdwg.mxu0
        %v3834 = vmul.f32 %v884, %v884
        %v3835 = vmul.f32 %v889, %v889
        %v3836 = vmul.f32 %v894, %v894
        %v3837 = vmul.f32 %v899, %v899
        %v3838 = vmul.f32 %v904, %v904
        %v3839 = vmul.f32 %v909, %v909
        %v3840 = vmul.f32 %v914, %v914
        %v3841 = vmul.f32 %v919, %v919
        %v3842 = vmul.f32 %v924, %v924
        %v3843 = vmul.f32 %v929, %v929
        %v3844 = vmul.f32 %v934, %v934
        %v3845 = vmul.f32 %v939, %v939
        %v3846 = vmul.f32 %v944, %v944
        %v3847 = vmul.f32 %v949, %v949
        %v3848 = vmul.f32 %v954, %v954
        %v3849 = vmul.f32 %v959, %v959
        %v3850 = vmul.f32 %v1575, %v1575
        %v3851 = vmul.f32 %v1580, %v1580
        %v3852 = vmul.f32 %v1585, %v1585
        %v3853 = vmul.f32 %v1590, %v1590
        %v3854 = vmul.f32 %v1595, %v1595
        %v3855 = vmul.f32 %v1600, %v1600
        %v3856 = vmul.f32 %v1605, %v1605
        %v3857 = vmul.f32 %v1610, %v1610
        %v3858 = vmul.f32 %v1615, %v1615
        %v3859 = vmul.f32 %v1620, %v1620
        %v3860 = vmul.f32 %v1625, %v1625
        %v3861 = vmul.f32 %v1630, %v1630
        %v3862 = vmul.f32 %v1635, %v1635
        %v3863 = vmul.f32 %v1640, %v1640
        %v3864 = vmul.f32 %v1645, %v1645
        %v3865 = vmul.f32 %v1650, %v1650
        %v3866 = vmul.f32 %v884, %v1575
        %v3867 = vmul.f32 %v889, %v1580
        %v3868 = vmul.f32 %v894, %v1585
        %v3869 = vmul.f32 %v899, %v1590
        %v3870 = vmul.f32 %v904, %v1595
        %v3871 = vmul.f32 %v909, %v1600
        %v3872 = vmul.f32 %v914, %v1605
        %v3873 = vmul.f32 %v919, %v1610
        %v3874 = vmul.f32 %v924, %v1615
        %v3875 = vmul.f32 %v929, %v1620
        %v3876 = vmul.f32 %v934, %v1625
        %v3877 = vmul.f32 %v939, %v1630
        %v3878 = vmul.f32 %v944, %v1635
        %v3879 = vmul.f32 %v949, %v1640
        %v3880 = vmul.f32 %v954, %v1645
        %v3881 = vmul.f32 %v959, %v1650
        %v3882 = vsub.f32 %v2302, %v3834
        %v3883 = vsub.f32 %v2307, %v3835
        %v3884 = vsub.f32 %v2312, %v3836
        %v3885 = vsub.f32 %v2317, %v3837
        %v3886 = vsub.f32 %v2322, %v3838
        %v3887 = vsub.f32 %v2327, %v3839
        %v3888 = vsub.f32 %v2332, %v3840
        %v3889 = vsub.f32 %v2337, %v3841
        %v3890 = vsub.f32 %v2342, %v3842
        %v3891 = vsub.f32 %v2347, %v3843
        %v3892 = vsub.f32 %v2352, %v3844
        %v3893 = vsub.f32 %v2357, %v3845
        %v3894 = vsub.f32 %v2362, %v3846
        %v3895 = vsub.f32 %v2367, %v3847
        %v3896 = vsub.f32 %v2372, %v3848
        %v3897 = vsub.f32 %v2377, %v3849
        %v3898 = vsub.f32 %v3029, %v3850
        %v3899 = vsub.f32 %v3034, %v3851
        %v3900 = vsub.f32 %v3039, %v3852
        %v3901 = vsub.f32 %v3044, %v3853
        %v3902 = vsub.f32 %v3049, %v3854
        %v3903 = vsub.f32 %v3054, %v3855
        %v3904 = vsub.f32 %v3059, %v3856
        %v3905 = vsub.f32 %v3064, %v3857
        %v3906 = vsub.f32 %v3069, %v3858
        %v3907 = vsub.f32 %v3074, %v3859
        %v3908 = vsub.f32 %v3079, %v3860
        %v3909 = vsub.f32 %v3084, %v3861
        %v3910 = vsub.f32 %v3089, %v3862
        %v3911 = vsub.f32 %v3094, %v3863
        %v3912 = vsub.f32 %v3099, %v3864
        %v3913 = vsub.f32 %v3104, %v3865
        %v3914 = vsub.f32 %v3756, %v3866
        %v3915 = vsub.f32 %v3761, %v3867
        %v3916 = vsub.f32 %v3766, %v3868
        %v3917 = vsub.f32 %v3771, %v3869
        %v3918 = vsub.f32 %v3776, %v3870
        %v3919 = vsub.f32 %v3781, %v3871
        %v3920 = vsub.f32 %v3786, %v3872
        %v3921 = vsub.f32 %v3791, %v3873
        %v3922 = vsub.f32 %v3796, %v3874
        %v3923 = vsub.f32 %v3801, %v3875
        %v3924 = vsub.f32 %v3806, %v3876
        %v3925 = vsub.f32 %v3811, %v3877
        %v3926 = vsub.f32 %v3816, %v3878
        %v3927 = vsub.f32 %v3821, %v3879
        %v3928 = vsub.f32 %v3826, %v3880
        %v3929 = vsub.f32 %v3831, %v3881
        %v3930 = vmul.f32 %v3866, 2.0
        %v3931 = vmul.f32 %v3867, 2.0
        %v3932 = vmul.f32 %v3868, 2.0
        %v3933 = vmul.f32 %v3869, 2.0
        %v3934 = vmul.f32 %v3870, 2.0
        %v3935 = vmul.f32 %v3871, 2.0
        %v3936 = vmul.f32 %v3872, 2.0
        %v3937 = vmul.f32 %v3873, 2.0
        %v3938 = vmul.f32 %v3874, 2.0
        %v3939 = vmul.f32 %v3875, 2.0
        %v3940 = vmul.f32 %v3876, 2.0
        %v3941 = vmul.f32 %v3877, 2.0
        %v3942 = vmul.f32 %v3878, 2.0
        %v3943 = vmul.f32 %v3879, 2.0
        %v3944 = vmul.f32 %v3880, 2.0
        %v3945 = vmul.f32 %v3881, 2.0
        %v3946 = vadd.f32 %v3930, 0.0001
        %v3947 = vadd.f32 %v3931, 0.0001
        %v3948 = vadd.f32 %v3932, 0.0001
        %v3949 = vadd.f32 %v3933, 0.0001
        %v3950 = vadd.f32 %v3934, 0.0001
        %v3951 = vadd.f32 %v3935, 0.0001
        %v3952 = vadd.f32 %v3936, 0.0001
        %v3953 = vadd.f32 %v3937, 0.0001
        %v3954 = vadd.f32 %v3938, 0.0001
        %v3955 = vadd.f32 %v3939, 0.0001
        %v3956 = vadd.f32 %v3940, 0.0001
        %v3957 = vadd.f32 %v3941, 0.0001
        %v3958 = vadd.f32 %v3942, 0.0001
        %v3959 = vadd.f32 %v3943, 0.0001
        %v3960 = vadd.f32 %v3944, 0.0001
        %v3961 = vadd.f32 %v3945, 0.0001
        %v3962 = vmul.f32 %v3914, 2.0
        %v3963 = vmul.f32 %v3915, 2.0
        %v3964 = vmul.f32 %v3916, 2.0
        %v3965 = vmul.f32 %v3917, 2.0
        %v3966 = vmul.f32 %v3918, 2.0
        %v3967 = vmul.f32 %v3919, 2.0
        %v3968 = vmul.f32 %v3920, 2.0
        %v3969 = vmul.f32 %v3921, 2.0
        %v3970 = vmul.f32 %v3922, 2.0
        %v3971 = vmul.f32 %v3923, 2.0
        %v3972 = vmul.f32 %v3924, 2.0
        %v3973 = vmul.f32 %v3925, 2.0
        %v3974 = vmul.f32 %v3926, 2.0
        %v3975 = vmul.f32 %v3927, 2.0
        %v3976 = vmul.f32 %v3928, 2.0
        %v3977 = vmul.f32 %v3929, 2.0
        %v3978 = vadd.f32 %v3962, 0.0009
        %v3979 = vadd.f32 %v3963, 0.0009
        %v3980 = vadd.f32 %v3964, 0.0009
        %v3981 = vadd.f32 %v3965, 0.0009
        %v3982 = vadd.f32 %v3966, 0.0009
        %v3983 = vadd.f32 %v3967, 0.0009
        %v3984 = vadd.f32 %v3968, 0.0009
        %v3985 = vadd.f32 %v3969, 0.0009
        %v3986 = vadd.f32 %v3970, 0.0009
        %v3987 = vadd.f32 %v3971, 0.0009
        %v3988 = vadd.f32 %v3972, 0.0009
        %v3989 = vadd.f32 %v3973, 0.0009
        %v3990 = vadd.f32 %v3974, 0.0009
        %v3991 = vadd.f32 %v3975, 0.0009
        %v3992 = vadd.f32 %v3976, 0.0009
        %v3993 = vadd.f32 %v3977, 0.0009
        %v3994 = vmul.f32 %v3946, %v3978
        %v3995 = vmul.f32 %v3947, %v3979
        %v3996 = vmul.f32 %v3948, %v3980
        %v3997 = vmul.f32 %v3949, %v3981
        %v3998 = vmul.f32 %v3950, %v3982
        %v3999 = vmul.f32 %v3951, %v3983
        %v4000 = vmul.f32 %v3952, %v3984
        %v4001 = vmul.f32 %v3953, %v3985
        %v4002 = vmul.f32 %v3954, %v3986
        %v4003 = vmul.f32 %v3955, %v3987
        %v4004 = vmul.f32 %v3956, %v3988
        %v4005 = vmul.f32 %v3957, %v3989
        %v4006 = vmul.f32 %v3958, %v3990
        %v4007 = vmul.f32 %v3959, %v3991
        %v4008 = vmul.f32 %v3960, %v3992
        %v4009 = vmul.f32 %v3961, %v3993
        %v4010 = vadd.f32 %v3834, %v3850
        %v4011 = vadd.f32 %v3835, %v3851
        %v4012 = vadd.f32 %v3836, %v3852
        %v4013 = vadd.f32 %v3837, %v3853
        %v4014 = vadd.f32 %v3838, %v3854
        %v4015 = vadd.f32 %v3839, %v3855
        %v4016 = vadd.f32 %v3840, %v3856
        %v4017 = vadd.f32 %v3841, %v3857
        %v4018 = vadd.f32 %v3842, %v3858
        %v4019 = vadd.f32 %v3843, %v3859
        %v4020 = vadd.f32 %v3844, %v3860
        %v4021 = vadd.f32 %v3845, %v3861
        %v4022 = vadd.f32 %v3846, %v3862
        %v4023 = vadd.f32 %v3847, %v3863
        %v4024 = vadd.f32 %v3848, %v3864
        %v4025 = vadd.f32 %v3849, %v3865
        %v4026 = vadd.f32 %v4010, 0.0001
        %v4027 = vadd.f32 %v4011, 0.0001
        %v4028 = vadd.f32 %v4012, 0.0001
        %v4029 = vadd.f32 %v4013, 0.0001
        %v4030 = vadd.f32 %v4014, 0.0001
        %v4031 = vadd.f32 %v4015, 0.0001
        %v4032 = vadd.f32 %v4016, 0.0001
        %v4033 = vadd.f32 %v4017, 0.0001
        %v4034 = vadd.f32 %v4018, 0.0001
        %v4035 = vadd.f32 %v4019, 0.0001
        %v4036 = vadd.f32 %v4020, 0.0001
        %v4037 = vadd.f32 %v4021, 0.0001
        %v4038 = vadd.f32 %v4022, 0.0001
        %v4039 = vadd.f32 %v4023, 0.0001
        %v4040 = vadd.f32 %v4024, 0.0001
        %v4041 = vadd.f32 %v4025, 0.0001
        %v4042 = vadd.f32 %v3882, %v3898
        %v4043 = vadd.f32 %v3883, %v3899
        %v4044 = vadd.f32 %v3884, %v3900
        %v4045 = vadd.f32 %v3885, %v3901
        %v4046 = vadd.f32 %v3886, %v3902
        %v4047 = vadd.f32 %v3887, %v3903
        %v4048 = vadd.f32 %v3888, %v3904
        %v4049 = vadd.f32 %v3889, %v3905
        %v4050 = vadd.f32 %v3890, %v3906
        %v4051 = vadd.f32 %v3891, %v3907
        %v4052 = vadd.f32 %v3892, %v3908
        %v4053 = vadd.f32 %v3893, %v3909
        %v4054 = vadd.f32 %v3894, %v3910
        %v4055 = vadd.f32 %v3895, %v3911
        %v4056 = vadd.f32 %v3896, %v3912
        %v4057 = vadd.f32 %v3897, %v3913
        %v4058 = vadd.f32 %v4042, 0.0009
        %v4059 = vadd.f32 %v4043, 0.0009
        %v4060 = vadd.f32 %v4044, 0.0009
        %v4061 = vadd.f32 %v4045, 0.0009
        %v4062 = vadd.f32 %v4046, 0.0009
        %v4063 = vadd.f32 %v4047, 0.0009
        %v4064 = vadd.f32 %v4048, 0.0009
        %v4065 = vadd.f32 %v4049, 0.0009
        %v4066 = vadd.f32 %v4050, 0.0009
        %v4067 = vadd.f32 %v4051, 0.0009
        %v4068 = vadd.f32 %v4052, 0.0009
        %v4069 = vadd.f32 %v4053, 0.0009
        %v4070 = vadd.f32 %v4054, 0.0009
        %v4071 = vadd.f32 %v4055, 0.0009
        %v4072 = vadd.f32 %v4056, 0.0009
        %v4073 = vadd.f32 %v4057, 0.0009
        %v4074 = vmul.f32 %v4026, %v4058
        %v4075 = vmul.f32 %v4027, %v4059
        %v4076 = vmul.f32 %v4028, %v4060
        %v4077 = vmul.f32 %v4029, %v4061
        %v4078 = vmul.f32 %v4030, %v4062
        %v4079 = vmul.f32 %v4031, %v4063
        %v4080 = vmul.f32 %v4032, %v4064
        %v4081 = vmul.f32 %v4033, %v4065
        %v4082 = vmul.f32 %v4034, %v4066
        %v4083 = vmul.f32 %v4035, %v4067
        %v4084 = vmul.f32 %v4036, %v4068
        %v4085 = vmul.f32 %v4037, %v4069
        %v4086 = vmul.f32 %v4038, %v4070
        %v4087 = vmul.f32 %v4039, %v4071
        %v4088 = vmul.f32 %v4040, %v4072
        %v4089 = vmul.f32 %v4041, %v4073
        %v4090 = vrcp.pop %v4074
        %v4091 = vrcp.pop %v4075
        %v4092 = vrcp.pop %v4076
        %v4093 = vrcp.pop %v4077
        %v4094 = vrcp.pop %v4078
        %v4095 = vrcp.pop %v4079
        %v4096 = vrcp.pop %v4080
        %v4097 = vrcp.pop %v4081
        %v4098 = vrcp.pop %v4082
        %v4099 = vrcp.pop %v4083
        %v4100 = vrcp.pop %v4084
        %v4101 = vrcp.pop %v4085
        %v4102 = vrcp.pop %v4086
        %v4103 = vrcp.pop %v4087
        %v4104 = vrcp.pop %v4088
        %v4105 = vrcp.pop %v4089
        %v4106 = vmul.f32 %v4074, %v4090
        %v4107 = vmul.f32 %v4075, %v4091
        %v4108 = vmul.f32 %v4076, %v4092
        %v4109 = vmul.f32 %v4077, %v4093
        %v4110 = vmul.f32 %v4078, %v4094
        %v4111 = vmul.f32 %v4079, %v4095
        %v4112 = vmul.f32 %v4080, %v4096
        %v4113 = vmul.f32 %v4081, %v4097
        %v4114 = vmul.f32 %v4082, %v4098
        %v4115 = vmul.f32 %v4083, %v4099
        %v4116 = vmul.f32 %v4084, %v4100
        %v4117 = vmul.f32 %v4085, %v4101
        %v4118 = vmul.f32 %v4086, %v4102
        %v4119 = vmul.f32 %v4087, %v4103
        %v4120 = vmul.f32 %v4088, %v4104
        %v4121 = vmul.f32 %v4089, %v4105
        %v4122 = vsub.f32 2.0, %v4106
        %v4123 = vsub.f32 2.0, %v4107
        %v4124 = vsub.f32 2.0, %v4108
        %v4125 = vsub.f32 2.0, %v4109
        %v4126 = vsub.f32 2.0, %v4110
        %v4127 = vsub.f32 2.0, %v4111
        %v4128 = vsub.f32 2.0, %v4112
        %v4129 = vsub.f32 2.0, %v4113
        %v4130 = vsub.f32 2.0, %v4114
        %v4131 = vsub.f32 2.0, %v4115
        %v4132 = vsub.f32 2.0, %v4116
        %v4133 = vsub.f32 2.0, %v4117
        %v4134 = vsub.f32 2.0, %v4118
        %v4135 = vsub.f32 2.0, %v4119
        %v4136 = vsub.f32 2.0, %v4120
        %v4137 = vsub.f32 2.0, %v4121
        %v4138 = vmul.f32 %v4090, %v4122
        %v4139 = vmul.f32 %v4091, %v4123
        %v4140 = vmul.f32 %v4092, %v4124
        %v4141 = vmul.f32 %v4093, %v4125
        %v4142 = vmul.f32 %v4094, %v4126
        %v4143 = vmul.f32 %v4095, %v4127
        %v4144 = vmul.f32 %v4096, %v4128
        %v4145 = vmul.f32 %v4097, %v4129
        %v4146 = vmul.f32 %v4098, %v4130
        %v4147 = vmul.f32 %v4099, %v4131
        %v4148 = vmul.f32 %v4100, %v4132
        %v4149 = vmul.f32 %v4101, %v4133
        %v4150 = vmul.f32 %v4102, %v4134
        %v4151 = vmul.f32 %v4103, %v4135
        %v4152 = vmul.f32 %v4104, %v4136
        %v4153 = vmul.f32 %v4105, %v4137
        %v4154 = vmul.f32 %v3994, %v4138
        %v4155 = vmul.f32 %v3995, %v4139
        %v4156 = vmul.f32 %v3996, %v4140
        %v4157 = vmul.f32 %v3997, %v4141
        %v4158 = vmul.f32 %v3998, %v4142
        %v4159 = vmul.f32 %v3999, %v4143
        %v4160 = vmul.f32 %v4000, %v4144
        %v4161 = vmul.f32 %v4001, %v4145
        %v4162 = vmul.f32 %v4002, %v4146
        %v4163 = vmul.f32 %v4003, %v4147
        %v4164 = vmul.f32 %v4004, %v4148
        %v4165 = vmul.f32 %v4005, %v4149
        %v4166 = vmul.f32 %v4006, %v4150
        %v4167 = vmul.f32 %v4007, %v4151
        %v4168 = vmul.f32 %v4008, %v4152
        %v4169 = vmul.f32 %v4009, %v4153
        %vm4170 = vcmask 130048
        %v4171 = vsel %vm4170, %v4154, 0.0
        %v4172 = vsel %vm4170, %v4155, 0.0
        %v4173 = vadd.f32 %v4171, %v4172
        %v4174 = vsel %vm4170, %v4156, 0.0
        %v4175 = vadd.f32 %v4173, %v4174
        %v4176 = vsel %vm4170, %v4157, 0.0
        %v4177 = vadd.f32 %v4175, %v4176
        %v4178 = vsel %vm4170, %v4158, 0.0
        %v4179 = vadd.f32 %v4177, %v4178
        %v4180 = vsel %vm4170, %v4159, 0.0
        %v4181 = vadd.f32 %v4179, %v4180
        %v4182 = vsel %vm4170, %v4160, 0.0
        %v4183 = vadd.f32 %v4181, %v4182
        %v4184 = vsel %vm4170, %v4161, 0.0
        %v4185 = vadd.f32 %v4183, %v4184
        %v4186 = vsel %vm4170, %v4162, 0.0
        %v4187 = vadd.f32 %v4185, %v4186
        %v4188 = vsel %vm4170, %v4163, 0.0
        %v4189 = vadd.f32 %v4187, %v4188
        %v4190 = vsel %vm4170, %v4164, 0.0
        %v4191 = vadd.f32 %v4189, %v4190
        %v4192 = vsel %vm4170, %v4165, 0.0
        %v4193 = vadd.f32 %v4191, %v4192
        %v4194 = vsel %vm4170, %v4166, 0.0
        %v4195 = vadd.f32 %v4193, %v4194
        %v4196 = vsel %vm4170, %v4167, 0.0
        %v4197 = vadd.f32 %v4195, %v4196
        %v4198 = vsel %vm4170, %v4168, 0.0
        %v4199 = vadd.f32 %v4197, %v4198
        %v4200 = vsel %vm4170, %v4169, 0.0
        %v4201 = vadd.f32 %v4199, %v4200
        %v4202 = vrot.slane %v4201, 4
        %v4203 = vadd.f32 %v4201, %v4202
        %v4204 = vrot.slane %v4203, 2
        %v4205 = vadd.f32 %v4203, %v4204
        %v4206 = vrot.slane %v4205, 1
        %v4207 = vadd.f32 %v4205, %v4206
        %vm4208 = vcmask 122880
        %4209 = vst.msk [vmem:[%s177] sm:$0x1] %vm4208, %v4207
        %s4210 = sand.u32 %s98, 1
        %s4211 = scalar_lea.sflag [#allocation3], %s4210
        %s4212 = sand.u32 %s98, 1
        %s4213 = scalar_lea.vmem [#allocation2], %s4212
        // Predicated region
        $region33: #{tpu_custom_call.1} parent=31 // pred_check
          %p4214 = pneg %p108
        $region34: #{tpu_custom_call.1} parent=31 // pred_check_branch
          %4216 = sbr.rel (%p4214) target = $region36
        $region35: #{tpu_custom_call.1} parent=31 // pred_region
          %s4218 = ssub.s32 16, 16
          %4219 = vsyncadd %s4211, %s4218
          %s4220 = smul.addr %s17, 16
          %s4221 = scalar_lea.hbm %s3, %s4220
          %s4223 = sshll.u32 %s4213, 4
          %s4224 = int_to_ptr.vmem [resolvable:$true] %s4223
          %4226 = dma.vmem_to_hbm [thread:$0]  %s4224, 16, %s4221, %s4211
        $region36: #{tpu_custom_call.1} parent=31 // pred_fallthru
          _
      $region32: #{tpu_custom_call.1} parent=5 // pred_fallthru
        _
      %p4227 = scmp.le.s32.totalorder 2, %s12
      // Predicated region
      $region37: #{tpu_custom_call.1} parent=5 // pred_check
        %p4228 = pneg %p4227
      $region38: #{tpu_custom_call.1} parent=5 // pred_check_branch
        %4230 = sbr.rel (%p4228) target = $region40
      $region39: #{tpu_custom_call.1} parent=5 // pred_region
        %s4231 = ssub.s32 %s12, 2
        // Predicated region
        $region41: #{tpu_custom_call.1} parent=39 // pred_check
          %p4232 = pneg %p114
        $region42: #{tpu_custom_call.1} parent=39 // pred_check_branch
          %4234 = sbr.rel (%p4232) target = $region44
        $region43: #{tpu_custom_call.1} parent=39 // pred_region
          %s4235 = sand.u32 %s99, 1
          %s4236 = scalar_lea.sflag [#allocation3], %s4235
          %s4237 = sand.u32 %s99, 1
          %s4238 = scalar_lea.vmem [#allocation2], %s4237
          %4239 = dma.done %s4236, 16
        $region44: #{tpu_custom_call.1} parent=39 // pred_fallthru
          _
      $region40: #{tpu_custom_call.1} parent=5 // pred_fallthru
        _
    $region6: #{tpu_custom_call.1} parent=1 // loop_footer
      %s16 = sadd.s32 1, %s12
    $region7: #{tpu_custom_call.1} parent=1 // loop_footer_branch
      %11 = sbr.rel target = $region3
    $region8: #{tpu_custom_call.1} parent=1 // loop_exit
      _
    %4240 = vsyncpa [#allocation3], 1
    %s4241 = scalar_lea.sflag [#allocation3], 1
    %4242 = vsyncpa %s4241, 1

</llo_original>
